<compile_context>
chip_gen: v5e
topology: v5e:2x2
jax: 0.10.0
libtpu: 0.0.40
codegen_flags: <defaults>
</compile_context>

<pallas_src>
import numpy as np
import jax
import jax.numpy as jnp
from jax.experimental import pallas as pl
from jax.experimental.pallas import tpu as pltpu

# ----------------------------- small config ---------------------------------
N = 2            # batch
C = 4            # input channels
L = 16           # sequence length
FPC = 16         # conv_filters_pc
CF = FPC * C     # conv_filters = 64
K = 2            # kernel_size
H = 32           # lstm_units
NUM_LAYERS = 2   # lstm_layers
NUM_CLASSES = 1
OUT_PAD = 128    # lane-dense padded FC output width
BN_EPS = 1e-5


# --------------------------- fused forward kernel ----------------------------
def crnn_kernel(x_ref, s1_ref, sh1_ref, w0_ref, w1_ref, s2_ref, sh2_ref,
                wih0_ref, b0_ref, whh0_ref, w1cat_ref, b1_ref,
                fcw_ref, fcb_ref, y_ref):
    # ----- standardize (eval BN1) + grouped conv (k=2, pad_right=1) ----------
    # x_ref holds the time-major flattened sequence: row r = t*N + n, cols = C.
    x = x_ref[...] * s1_ref[...] + sh1_ref[...]                  # (L*N, C)
    # x at t+1 (zero-padded after standardization, matching Conv1dPadSame)
    x_next = jnp.concatenate(
        [x[N:], jnp.zeros((N, C), x.dtype)], axis=0)             # (L*N, C)

    w0 = w0_ref[...]                                             # (C, FPC)
    w1 = w1_ref[...]                                             # (C, FPC)
    # grouped conv (groups=C, no bias) with CF on the lane axis:
    #   feat[r, c*FPC+f] = w0[c,f]*x[r,c] + w1[c,f]*x_next[r,c]
    parts = []
    for c in range(C):                                           # C=4, static
        parts.append(x[:, c:c + 1] * w0[c:c + 1, :]
                     + x_next[:, c:c + 1] * w1[c:c + 1, :])      # (L*N, FPC)
    feat = jnp.concatenate(parts, axis=-1)                       # (L*N, CF)
    feat = jnp.maximum(feat, 0.0) * s2_ref[...] + sh2_ref[...]   # ReLU + BN2

    # ----- hoisted layer-0 input projection: one (L*N,CF)@(CF,4H) matmul -----
    g0_all = (jnp.dot(feat, wih0_ref[...],
                      preferred_element_type=jnp.float32)
              + b0_ref[...])                                     # (L*N, 4H)

    whh0 = whh0_ref[...]      # (H, 4H)
    w1cat = w1cat_ref[...]    # (2H, 4H) = [W_ih_l1^T ; W_hh_l1^T]
    b1 = b1_ref[...]          # (1, 4H)

    def gates_to_hc(gates, c_prev):
        # PyTorch gate order: i, f, g, o
        i = jax.nn.sigmoid(gates[:, 0 * H:1 * H])
        f = jax.nn.sigmoid(gates[:, 1 * H:2 * H])
        g = jnp.tanh(gates[:, 2 * H:3 * H])
        o = jax.nn.sigmoid(gates[:, 3 * H:4 * H])
        c_new = f * c_prev + i * g
        h_new = o * jnp.tanh(c_new)
        return h_new, c_new

    h0 = jnp.zeros((N, H), jnp.float32)
    c0 = jnp.zeros((N, H), jnp.float32)
    h1 = jnp.zeros((N, H), jnp.float32)
    c1 = jnp.zeros((N, H), jnp.float32)

    for t in range(L):                       # static, fully unrolled recurrence
        # layer 0: input projection already done; only the recurrent dot here
        g0 = g0_all[t * N:(t + 1) * N, :] + jnp.dot(
            h0, whh0, preferred_element_type=jnp.float32)        # (N, 4H)
        h0, c0 = gates_to_hc(g0, c0)
        # layer 1: fused [x|h] @ [W_ih^T ; W_hh^T]  -> single dot per step
        g1 = jnp.dot(jnp.concatenate([h0, h1], axis=-1), w1cat,
                     preferred_element_type=jnp.float32) + b1    # (N, 4H)
        h1, c1 = gates_to_hc(g1, c1)

    # h.permute(1,0,2).view(N,-1): [layer0_hidden | layer1_hidden]
    hcat = jnp.concatenate([h0, h1], axis=-1)                    # (N, 2H)
    y_ref[...] = (jnp.dot(hcat, fcw_ref[...],
                          preferred_element_type=jnp.float32)
                  + fcb_ref[...])                                # (N, OUT_PAD)


# ----------------------------------- wrapper ---------------------------------
@jax.jit
def crnn_forward(x, p):
    # X.permute(2,0,1) flattened to (L*N, C): tiny (512 B) layout plumbing;
    # everything else stays inside the single fused kernel.
    x_seq = jnp.transpose(x, (2, 0, 1)).reshape(L * N, C)
    vmem = pl.BlockSpec(memory_space=pltpu.MemorySpace.VMEM)
    y_pad = pl.pallas_call(
        crnn_kernel,
        out_shape=jax.ShapeDtypeStruct((N, OUT_PAD), jnp.float32),
        in_specs=[vmem] * 14,
        out_specs=vmem,
    )(x_seq, p["s1"], p["sh1"], p["w0"], p["w1"], p["s2"], p["sh2"],
      p["wih0_t"], p["b0"], p["whh0_t"], p["w1cat"], p["b1"],
      p["fcw_pad"], p["fcb_pad"])
    return y_pad[:, :NUM_CLASSES]


# ------------------------ deterministic parameter init -----------------------
def make_params(key):
    ks = jax.random.split(key, 20)
    f32 = jnp.float32

    # standardize = BatchNorm1d(C), eval-mode -> fold into scale/shift
    gamma1 = 1.0 + 0.1 * jax.random.normal(ks[0], (C,), f32)
    beta1 = 0.1 * jax.random.normal(ks[1], (C,), f32)
    rmean1 = 0.1 * jax.random.normal(ks[2], (C,), f32)
    rvar1 = 1.0 + 0.1 * jax.random.uniform(ks[3], (C,), f32)
    s1 = gamma1 / jnp.sqrt(rvar1 + BN_EPS)
    sh1 = beta1 - rmean1 * s1

    # grouped conv weight, torch shape (CF, 1, K) viewed as (C, FPC, K)
    conv_w = 0.3 * jax.random.normal(ks[4], (C, FPC, K), f32)

    # BatchNorm1d(CF), eval-mode
    gamma2 = 1.0 + 0.1 * jax.random.normal(ks[5], (CF,), f32)
    beta2 = 0.1 * jax.random.normal(ks[6], (CF,), f32)
    rmean2 = 0.1 * jax.random.normal(ks[7], (CF,), f32)
    rvar2 = 1.0 + 0.1 * jax.random.uniform(ks[8], (CF,), f32)
    s2 = gamma2 / jnp.sqrt(rvar2 + BN_EPS)
    sh2 = beta2 - rmean2 * s2

    sc = 0.15
    wih0 = sc * jax.random.normal(ks[9], (4 * H, CF), f32)
    whh0 = sc * jax.random.normal(ks[10], (4 * H, H), f32)
    bih0 = sc * jax.random.normal(ks[11], (4 * H,), f32)
    bhh0 = sc * jax.random.normal(ks[12], (4 * H,), f32)
    wih1 = sc * jax.random.normal(ks[13], (4 * H, H), f32)
    whh1 = sc * jax.random.normal(ks[14], (4 * H, H), f32)
    bih1 = sc * jax.random.normal(ks[15], (4 * H,), f32)
    bhh1 = sc * jax.random.normal(ks[16], (4 * H,), f32)
    fc_w = sc * jax.random.normal(ks[17], (NUM_CLASSES, NUM_LAYERS * H), f32)
    fc_b = sc * jax.random.normal(ks[18], (NUM_CLASSES,), f32)

    # padded (lane-dense) FC weights for the kernel
    fcw_pad = jnp.zeros((NUM_LAYERS * H, OUT_PAD), f32)
    fcw_pad = fcw_pad.at[:, :NUM_CLASSES].set(fc_w.T)
    fcb_pad = jnp.zeros((1, OUT_PAD), f32)
    fcb_pad = fcb_pad.at[:, :NUM_CLASSES].set(fc_b.reshape(1, NUM_CLASSES))

    return {
        # kernel-ready forms
        "s1": s1.reshape(1, C), "sh1": sh1.reshape(1, C),
        "w0": conv_w[:, :, 0], "w1": conv_w[:, :, 1],
        "s2": s2.reshape(1, CF), "sh2": sh2.reshape(1, CF),
        "wih0_t": wih0.T, "whh0_t": whh0.T, "b0": (bih0 + bhh0).reshape(1, 4 * H),
        "wih1_t": wih1.T, "whh1_t": whh1.T, "b1": (bih1 + bhh1).reshape(1, 4 * H),
        "w1cat": jnp.concatenate([wih1.T, whh1.T], axis=0),   # (2H, 4H)
        "fcw_pad": fcw_pad, "fcb_pad": fcb_pad,
        # reference-only forms
        "conv_w": conv_w,
        "fcw_t": fc_w.T, "fcb": fc_b.reshape(1, NUM_CLASSES),
    }


# ------------------------------ pure-JAX reference ----------------------------
def reference_forward(x, p):
    s1 = p["s1"].reshape(1, C, 1)
    sh1 = p["sh1"].reshape(1, C, 1)
    xx = x * s1 + sh1
    x_next = jnp.concatenate([xx[:, :, 1:], jnp.zeros((N, C, 1), xx.dtype)], -1)
    w = p["conv_w"]
    y = (w[None, :, :, 0:1] * xx[:, :, None, :]
         + w[None, :, :, 1:2] * x_next[:, :, None, :]).reshape(N, CF, L)
    y = jnp.maximum(y, 0.0) * p["s2"].reshape(1, CF, 1) + p["sh2"].reshape(1, CF, 1)
    seq = jnp.transpose(y, (2, 0, 1))                     # (L, N, CF)

    def cell(x_t, h, c, wih_t, whh_t, b):
        g = x_t @ wih_t + h @ whh_t + b
        i = jax.nn.sigmoid(g[:, :H])
        f = jax.nn.sigmoid(g[:, H:2 * H])
        gg = jnp.tanh(g[:, 2 * H:3 * H])
        o = jax.nn.sigmoid(g[:, 3 * H:])
        c = f * c + i * gg
        h = o * jnp.tanh(c)
        return h, c

    h0 = jnp.zeros((N, H)); c0 = jnp.zeros((N, H))
    h1 = jnp.zeros((N, H)); c1 = jnp.zeros((N, H))
    for t in range(L):
        h0, c0 = cell(seq[t], h0, c0, p["wih0_t"], p["whh0_t"], p["b0"])
        h1, c1 = cell(h0, h1, c1, p["wih1_t"], p["whh1_t"], p["b1"])
    hcat = jnp.concatenate([h0, h1], axis=-1)
    return hcat @ p["fcw_t"] + p["fcb"]


if __name__ == "__main__":
    key = jax.random.PRNGKey(0)
    kx, kp = jax.random.split(key)
    x = jax.random.normal(kx, (N, C, L), dtype=jnp.float32)
    params = make_params(kp)

    y = crnn_forward(x, params)
    jax.block_until_ready(y)

    y_ref = reference_forward(x, params)
    assert y.shape == (N, NUM_CLASSES)
    np.testing.assert_allclose(np.asarray(y), np.asarray(y_ref),
                               rtol=2e-3, atol=2e-3)
    print("KERNEL_OK")
</pallas_src>

<mosaic_0001>
module attributes {stable_mosaic.version = 11 : i64} {
  func.func @crnn_kernel(%arg0: memref<32x4xf32, #tpu.memory_space<vmem>>, %arg1: memref<1x4xf32, #tpu.memory_space<vmem>>, %arg2: memref<1x4xf32, #tpu.memory_space<vmem>>, %arg3: memref<4x16xf32, #tpu.memory_space<vmem>>, %arg4: memref<4x16xf32, #tpu.memory_space<vmem>>, %arg5: memref<1x64xf32, #tpu.memory_space<vmem>>, %arg6: memref<1x64xf32, #tpu.memory_space<vmem>>, %arg7: memref<64x128xf32, #tpu.memory_space<vmem>>, %arg8: memref<1x128xf32, #tpu.memory_space<vmem>>, %arg9: memref<32x128xf32, #tpu.memory_space<vmem>>, %arg10: memref<64x128xf32, #tpu.memory_space<vmem>>, %arg11: memref<1x128xf32, #tpu.memory_space<vmem>>, %arg12: memref<64x128xf32, #tpu.memory_space<vmem>>, %arg13: memref<1x128xf32, #tpu.memory_space<vmem>>, %arg14: memref<2x128xf32, #tpu.memory_space<vmem>>) attributes {dimension_semantics = [], scalar_prefetch = 0 : i64, scratch_operands = 0 : i64, tpu.core_type = #tpu.core_type<tc>} {
    %c0 = arith.constant 0 : index
    %c0_0 = arith.constant 0 : index
    %0 = vector.load %arg0[%c0, %c0_0] : memref<32x4xf32, #tpu.memory_space<vmem>>, vector<32x4xf32>
    %c0_1 = arith.constant 0 : index
    %c0_2 = arith.constant 0 : index
    %1 = vector.load %arg1[%c0_1, %c0_2] : memref<1x4xf32, #tpu.memory_space<vmem>>, vector<1x4xf32>
    %2 = vector.broadcast %1 : vector<1x4xf32> to vector<32x4xf32>
    %3 = arith.mulf %0, %2 : vector<32x4xf32>
    %c0_3 = arith.constant 0 : index
    %c0_4 = arith.constant 0 : index
    %4 = vector.load %arg2[%c0_3, %c0_4] : memref<1x4xf32, #tpu.memory_space<vmem>>, vector<1x4xf32>
    %5 = vector.broadcast %4 : vector<1x4xf32> to vector<32x4xf32>
    %6 = arith.addf %3, %5 : vector<32x4xf32>
    %7 = vector.extract_strided_slice %6 {offsets = [2, 0], sizes = [30, 4], strides = [1, 1]} : vector<32x4xf32> to vector<30x4xf32>
    %cst = arith.constant 0.000000e+00 : f32
    %8 = vector.broadcast %cst : f32 to vector<2x4xf32>
    %9 = tpu.concatenate %7, %8 in 0 : vector<30x4xf32>, vector<2x4xf32> -> vector<32x4xf32>
    %c0_5 = arith.constant 0 : index
    %c0_6 = arith.constant 0 : index
    %10 = vector.load %arg3[%c0_5, %c0_6] : memref<4x16xf32, #tpu.memory_space<vmem>>, vector<4x16xf32>
    %c0_7 = arith.constant 0 : index
    %c0_8 = arith.constant 0 : index
    %11 = vector.load %arg4[%c0_7, %c0_8] : memref<4x16xf32, #tpu.memory_space<vmem>>, vector<4x16xf32>
    %12 = vector.extract_strided_slice %6 {offsets = [0, 0], sizes = [32, 1], strides = [1, 1]} : vector<32x4xf32> to vector<32x1xf32>
    %13 = vector.extract_strided_slice %10 {offsets = [0, 0], sizes = [1, 16], strides = [1, 1]} : vector<4x16xf32> to vector<1x16xf32>
    %14 = vector.broadcast %12 : vector<32x1xf32> to vector<32x16xf32>
    %15 = vector.broadcast %13 : vector<1x16xf32> to vector<32x16xf32>
    %16 = arith.mulf %14, %15 : vector<32x16xf32>
    %17 = vector.extract_strided_slice %9 {offsets = [0, 0], sizes = [32, 1], strides = [1, 1]} : vector<32x4xf32> to vector<32x1xf32>
    %18 = vector.extract_strided_slice %11 {offsets = [0, 0], sizes = [1, 16], strides = [1, 1]} : vector<4x16xf32> to vector<1x16xf32>
    %19 = vector.broadcast %17 : vector<32x1xf32> to vector<32x16xf32>
    %20 = vector.broadcast %18 : vector<1x16xf32> to vector<32x16xf32>
    %21 = arith.mulf %19, %20 : vector<32x16xf32>
    %22 = arith.addf %16, %21 : vector<32x16xf32>
    %23 = vector.extract_strided_slice %6 {offsets = [0, 1], sizes = [32, 1], strides = [1, 1]} : vector<32x4xf32> to vector<32x1xf32>
    %24 = vector.extract_strided_slice %10 {offsets = [1, 0], sizes = [1, 16], strides = [1, 1]} : vector<4x16xf32> to vector<1x16xf32>
    %25 = vector.broadcast %23 : vector<32x1xf32> to vector<32x16xf32>
    %26 = vector.broadcast %24 : vector<1x16xf32> to vector<32x16xf32>
    %27 = arith.mulf %25, %26 : vector<32x16xf32>
    %28 = vector.extract_strided_slice %9 {offsets = [0, 1], sizes = [32, 1], strides = [1, 1]} : vector<32x4xf32> to vector<32x1xf32>
    %29 = vector.extract_strided_slice %11 {offsets = [1, 0], sizes = [1, 16], strides = [1, 1]} : vector<4x16xf32> to vector<1x16xf32>
    %30 = vector.broadcast %28 : vector<32x1xf32> to vector<32x16xf32>
    %31 = vector.broadcast %29 : vector<1x16xf32> to vector<32x16xf32>
    %32 = arith.mulf %30, %31 : vector<32x16xf32>
    %33 = arith.addf %27, %32 : vector<32x16xf32>
    %34 = vector.extract_strided_slice %6 {offsets = [0, 2], sizes = [32, 1], strides = [1, 1]} : vector<32x4xf32> to vector<32x1xf32>
    %35 = vector.extract_strided_slice %10 {offsets = [2, 0], sizes = [1, 16], strides = [1, 1]} : vector<4x16xf32> to vector<1x16xf32>
    %36 = vector.broadcast %34 : vector<32x1xf32> to vector<32x16xf32>
    %37 = vector.broadcast %35 : vector<1x16xf32> to vector<32x16xf32>
    %38 = arith.mulf %36, %37 : vector<32x16xf32>
    %39 = vector.extract_strided_slice %9 {offsets = [0, 2], sizes = [32, 1], strides = [1, 1]} : vector<32x4xf32> to vector<32x1xf32>
    %40 = vector.extract_strided_slice %11 {offsets = [2, 0], sizes = [1, 16], strides = [1, 1]} : vector<4x16xf32> to vector<1x16xf32>
    %41 = vector.broadcast %39 : vector<32x1xf32> to vector<32x16xf32>
    %42 = vector.broadcast %40 : vector<1x16xf32> to vector<32x16xf32>
    %43 = arith.mulf %41, %42 : vector<32x16xf32>
    %44 = arith.addf %38, %43 : vector<32x16xf32>
    %45 = vector.extract_strided_slice %6 {offsets = [0, 3], sizes = [32, 1], strides = [1, 1]} : vector<32x4xf32> to vector<32x1xf32>
    %46 = vector.extract_strided_slice %10 {offsets = [3, 0], sizes = [1, 16], strides = [1, 1]} : vector<4x16xf32> to vector<1x16xf32>
    %47 = vector.broadcast %45 : vector<32x1xf32> to vector<32x16xf32>
    %48 = vector.broadcast %46 : vector<1x16xf32> to vector<32x16xf32>
    %49 = arith.mulf %47, %48 : vector<32x16xf32>
    %50 = vector.extract_strided_slice %9 {offsets = [0, 3], sizes = [32, 1], strides = [1, 1]} : vector<32x4xf32> to vector<32x1xf32>
    %51 = vector.extract_strided_slice %11 {offsets = [3, 0], sizes = [1, 16], strides = [1, 1]} : vector<4x16xf32> to vector<1x16xf32>
    %52 = vector.broadcast %50 : vector<32x1xf32> to vector<32x16xf32>
    %53 = vector.broadcast %51 : vector<1x16xf32> to vector<32x16xf32>
    %54 = arith.mulf %52, %53 : vector<32x16xf32>
    %55 = arith.addf %49, %54 : vector<32x16xf32>
    %56 = tpu.concatenate %22, %33, %44, %55 in 1 : vector<32x16xf32>, vector<32x16xf32>, vector<32x16xf32>, vector<32x16xf32> -> vector<32x64xf32>
    %cst_9 = arith.constant 0.000000e+00 : f32
    %57 = vector.broadcast %cst_9 : f32 to vector<32x64xf32>
    %58 = arith.maximumf %56, %57 : vector<32x64xf32>
    %c0_10 = arith.constant 0 : index
    %c0_11 = arith.constant 0 : index
    %59 = vector.load %arg5[%c0_10, %c0_11] : memref<1x64xf32, #tpu.memory_space<vmem>>, vector<1x64xf32>
    %60 = vector.broadcast %59 : vector<1x64xf32> to vector<32x64xf32>
    %61 = arith.mulf %58, %60 : vector<32x64xf32>
    %c0_12 = arith.constant 0 : index
    %c0_13 = arith.constant 0 : index
    %62 = vector.load %arg6[%c0_12, %c0_13] : memref<1x64xf32, #tpu.memory_space<vmem>>, vector<1x64xf32>
    %63 = vector.broadcast %62 : vector<1x64xf32> to vector<32x64xf32>
    %64 = arith.addf %61, %63 : vector<32x64xf32>
    %c0_14 = arith.constant 0 : index
    %c0_15 = arith.constant 0 : index
    %65 = vector.load %arg7[%c0_14, %c0_15] : memref<64x128xf32, #tpu.memory_space<vmem>>, vector<64x128xf32>
    %cst_16 = arith.constant dense<0.000000e+00> : vector<32x128xf32>
    %66 = tpu.matmul %64, %65, %cst_16 {dimension_numbers = #tpu.dot_dimension_numbers<[1], [0], [0], [1], [0, 0, 1, 1], [], []>} : vector<32x64xf32>, vector<64x128xf32>, vector<32x128xf32> -> vector<32x128xf32>
    %c0_17 = arith.constant 0 : index
    %c0_18 = arith.constant 0 : index
    %67 = vector.load %arg8[%c0_17, %c0_18] : memref<1x128xf32, #tpu.memory_space<vmem>>, vector<1x128xf32>
    %68 = vector.broadcast %67 : vector<1x128xf32> to vector<32x128xf32>
    %69 = arith.addf %66, %68 : vector<32x128xf32>
    %c0_19 = arith.constant 0 : index
    %c0_20 = arith.constant 0 : index
    %70 = vector.load %arg9[%c0_19, %c0_20] : memref<32x128xf32, #tpu.memory_space<vmem>>, vector<32x128xf32>
    %c0_21 = arith.constant 0 : index
    %c0_22 = arith.constant 0 : index
    %71 = vector.load %arg10[%c0_21, %c0_22] : memref<64x128xf32, #tpu.memory_space<vmem>>, vector<64x128xf32>
    %c0_23 = arith.constant 0 : index
    %c0_24 = arith.constant 0 : index
    %72 = vector.load %arg11[%c0_23, %c0_24] : memref<1x128xf32, #tpu.memory_space<vmem>>, vector<1x128xf32>
    %cst_25 = arith.constant 0.000000e+00 : f32
    %73 = vector.broadcast %cst_25 : f32 to vector<2x32xf32>
    %cst_26 = arith.constant 0.000000e+00 : f32
    %74 = vector.broadcast %cst_26 : f32 to vector<2x32xf32>
    %cst_27 = arith.constant 0.000000e+00 : f32
    %75 = vector.broadcast %cst_27 : f32 to vector<2x32xf32>
    %cst_28 = arith.constant 0.000000e+00 : f32
    %76 = vector.broadcast %cst_28 : f32 to vector<2x32xf32>
    %77 = vector.extract_strided_slice %69 {offsets = [0, 0], sizes = [2, 128], strides = [1, 1]} : vector<32x128xf32> to vector<2x128xf32>
    %cst_29 = arith.constant dense<0.000000e+00> : vector<2x128xf32>
    %78 = tpu.matmul %73, %70, %cst_29 {dimension_numbers = #tpu.dot_dimension_numbers<[1], [0], [0], [1], [0, 0, 1, 1], [], []>} : vector<2x32xf32>, vector<32x128xf32>, vector<2x128xf32> -> vector<2x128xf32>
    %79 = arith.addf %77, %78 : vector<2x128xf32>
    %80 = vector.extract_strided_slice %79 {offsets = [0, 0], sizes = [2, 32], strides = [1, 1]} : vector<2x128xf32> to vector<2x32xf32>
    %81 = arith.negf %80 : vector<2x32xf32>
    %82 = math.exp %81 : vector<2x32xf32>
    %cst_30 = arith.constant 1.000000e+00 : f32
    %83 = vector.broadcast %cst_30 : f32 to vector<2x32xf32>
    %84 = arith.addf %83, %82 : vector<2x32xf32>
    %85 = arith.divf %83, %84 : vector<2x32xf32>
    %86 = vector.extract_strided_slice %79 {offsets = [0, 32], sizes = [2, 32], strides = [1, 1]} : vector<2x128xf32> to vector<2x32xf32>
    %87 = arith.negf %86 : vector<2x32xf32>
    %88 = math.exp %87 : vector<2x32xf32>
    %cst_31 = arith.constant 1.000000e+00 : f32
    %89 = vector.broadcast %cst_31 : f32 to vector<2x32xf32>
    %90 = arith.addf %89, %88 : vector<2x32xf32>
    %91 = arith.divf %89, %90 : vector<2x32xf32>
    %92 = vector.extract_strided_slice %79 {offsets = [0, 64], sizes = [2, 32], strides = [1, 1]} : vector<2x128xf32> to vector<2x32xf32>
    %93 = math.tanh %92 : vector<2x32xf32>
    %94 = vector.extract_strided_slice %79 {offsets = [0, 96], sizes = [2, 32], strides = [1, 1]} : vector<2x128xf32> to vector<2x32xf32>
    %95 = arith.negf %94 : vector<2x32xf32>
    %96 = math.exp %95 : vector<2x32xf32>
    %cst_32 = arith.constant 1.000000e+00 : f32
    %97 = vector.broadcast %cst_32 : f32 to vector<2x32xf32>
    %98 = arith.addf %97, %96 : vector<2x32xf32>
    %99 = arith.divf %97, %98 : vector<2x32xf32>
    %100 = arith.mulf %91, %74 : vector<2x32xf32>
    %101 = arith.mulf %85, %93 : vector<2x32xf32>
    %102 = arith.addf %100, %101 : vector<2x32xf32>
    %103 = math.tanh %102 : vector<2x32xf32>
    %104 = arith.mulf %99, %103 : vector<2x32xf32>
    %105 = tpu.concatenate %104, %75 in 1 : vector<2x32xf32>, vector<2x32xf32> -> vector<2x64xf32>
    %cst_33 = arith.constant dense<0.000000e+00> : vector<2x128xf32>
    %106 = tpu.matmul %105, %71, %cst_33 {dimension_numbers = #tpu.dot_dimension_numbers<[1], [0], [0], [1], [0, 0, 1, 1], [], []>} : vector<2x64xf32>, vector<64x128xf32>, vector<2x128xf32> -> vector<2x128xf32>
    %107 = vector.broadcast %72 : vector<1x128xf32> to vector<2x128xf32>
    %108 = arith.addf %106, %107 : vector<2x128xf32>
    %109 = vector.extract_strided_slice %108 {offsets = [0, 0], sizes = [2, 32], strides = [1, 1]} : vector<2x128xf32> to vector<2x32xf32>
    %110 = arith.negf %109 : vector<2x32xf32>
    %111 = math.exp %110 : vector<2x32xf32>
    %cst_34 = arith.constant 1.000000e+00 : f32
    %112 = vector.broadcast %cst_34 : f32 to vector<2x32xf32>
    %113 = arith.addf %112, %111 : vector<2x32xf32>
    %114 = arith.divf %112, %113 : vector<2x32xf32>
    %115 = vector.extract_strided_slice %108 {offsets = [0, 32], sizes = [2, 32], strides = [1, 1]} : vector<2x128xf32> to vector<2x32xf32>
    %116 = arith.negf %115 : vector<2x32xf32>
    %117 = math.exp %116 : vector<2x32xf32>
    %cst_35 = arith.constant 1.000000e+00 : f32
    %118 = vector.broadcast %cst_35 : f32 to vector<2x32xf32>
    %119 = arith.addf %118, %117 : vector<2x32xf32>
    %120 = arith.divf %118, %119 : vector<2x32xf32>
    %121 = vector.extract_strided_slice %108 {offsets = [0, 64], sizes = [2, 32], strides = [1, 1]} : vector<2x128xf32> to vector<2x32xf32>
    %122 = math.tanh %121 : vector<2x32xf32>
    %123 = vector.extract_strided_slice %108 {offsets = [0, 96], sizes = [2, 32], strides = [1, 1]} : vector<2x128xf32> to vector<2x32xf32>
    %124 = arith.negf %123 : vector<2x32xf32>
    %125 = math.exp %124 : vector<2x32xf32>
    %cst_36 = arith.constant 1.000000e+00 : f32
    %126 = vector.broadcast %cst_36 : f32 to vector<2x32xf32>
    %127 = arith.addf %126, %125 : vector<2x32xf32>
    %128 = arith.divf %126, %127 : vector<2x32xf32>
    %129 = arith.mulf %120, %76 : vector<2x32xf32>
    %130 = arith.mulf %114, %122 : vector<2x32xf32>
    %131 = arith.addf %129, %130 : vector<2x32xf32>
    %132 = math.tanh %131 : vector<2x32xf32>
    %133 = arith.mulf %128, %132 : vector<2x32xf32>
    %134 = vector.extract_strided_slice %69 {offsets = [2, 0], sizes = [2, 128], strides = [1, 1]} : vector<32x128xf32> to vector<2x128xf32>
    %cst_37 = arith.constant dense<0.000000e+00> : vector<2x128xf32>
    %135 = tpu.matmul %104, %70, %cst_37 {dimension_numbers = #tpu.dot_dimension_numbers<[1], [0], [0], [1], [0, 0, 1, 1], [], []>} : vector<2x32xf32>, vector<32x128xf32>, vector<2x128xf32> -> vector<2x128xf32>
    %136 = arith.addf %134, %135 : vector<2x128xf32>
    %137 = vector.extract_strided_slice %136 {offsets = [0, 0], sizes = [2, 32], strides = [1, 1]} : vector<2x128xf32> to vector<2x32xf32>
    %138 = arith.negf %137 : vector<2x32xf32>
    %139 = math.exp %138 : vector<2x32xf32>
    %cst_38 = arith.constant 1.000000e+00 : f32
    %140 = vector.broadcast %cst_38 : f32 to vector<2x32xf32>
    %141 = arith.addf %140, %139 : vector<2x32xf32>
    %142 = arith.divf %140, %141 : vector<2x32xf32>
    %143 = vector.extract_strided_slice %136 {offsets = [0, 32], sizes = [2, 32], strides = [1, 1]} : vector<2x128xf32> to vector<2x32xf32>
    %144 = arith.negf %143 : vector<2x32xf32>
    %145 = math.exp %144 : vector<2x32xf32>
    %cst_39 = arith.constant 1.000000e+00 : f32
    %146 = vector.broadcast %cst_39 : f32 to vector<2x32xf32>
    %147 = arith.addf %146, %145 : vector<2x32xf32>
    %148 = arith.divf %146, %147 : vector<2x32xf32>
    %149 = vector.extract_strided_slice %136 {offsets = [0, 64], sizes = [2, 32], strides = [1, 1]} : vector<2x128xf32> to vector<2x32xf32>
    %150 = math.tanh %149 : vector<2x32xf32>
    %151 = vector.extract_strided_slice %136 {offsets = [0, 96], sizes = [2, 32], strides = [1, 1]} : vector<2x128xf32> to vector<2x32xf32>
    %152 = arith.negf %151 : vector<2x32xf32>
    %153 = math.exp %152 : vector<2x32xf32>
    %cst_40 = arith.constant 1.000000e+00 : f32
    %154 = vector.broadcast %cst_40 : f32 to vector<2x32xf32>
    %155 = arith.addf %154, %153 : vector<2x32xf32>
    %156 = arith.divf %154, %155 : vector<2x32xf32>
    %157 = arith.mulf %148, %102 : vector<2x32xf32>
    %158 = arith.mulf %142, %150 : vector<2x32xf32>
    %159 = arith.addf %157, %158 : vector<2x32xf32>
    %160 = math.tanh %159 : vector<2x32xf32>
    %161 = arith.mulf %156, %160 : vector<2x32xf32>
    %162 = tpu.concatenate %161, %133 in 1 : vector<2x32xf32>, vector<2x32xf32> -> vector<2x64xf32>
    %cst_41 = arith.constant dense<0.000000e+00> : vector<2x128xf32>
    %163 = tpu.matmul %162, %71, %cst_41 {dimension_numbers = #tpu.dot_dimension_numbers<[1], [0], [0], [1], [0, 0, 1, 1], [], []>} : vector<2x64xf32>, vector<64x128xf32>, vector<2x128xf32> -> vector<2x128xf32>
    %164 = vector.broadcast %72 : vector<1x128xf32> to vector<2x128xf32>
    %165 = arith.addf %163, %164 : vector<2x128xf32>
    %166 = vector.extract_strided_slice %165 {offsets = [0, 0], sizes = [2, 32], strides = [1, 1]} : vector<2x128xf32> to vector<2x32xf32>
    %167 = arith.negf %166 : vector<2x32xf32>
    %168 = math.exp %167 : vector<2x32xf32>
    %cst_42 = arith.constant 1.000000e+00 : f32
    %169 = vector.broadcast %cst_42 : f32 to vector<2x32xf32>
    %170 = arith.addf %169, %168 : vector<2x32xf32>
    %171 = arith.divf %169, %170 : vector<2x32xf32>
    %172 = vector.extract_strided_slice %165 {offsets = [0, 32], sizes = [2, 32], strides = [1, 1]} : vector<2x128xf32> to vector<2x32xf32>
    %173 = arith.negf %172 : vector<2x32xf32>
    %174 = math.exp %173 : vector<2x32xf32>
    %cst_43 = arith.constant 1.000000e+00 : f32
    %175 = vector.broadcast %cst_43 : f32 to vector<2x32xf32>
    %176 = arith.addf %175, %174 : vector<2x32xf32>
    %177 = arith.divf %175, %176 : vector<2x32xf32>
    %178 = vector.extract_strided_slice %165 {offsets = [0, 64], sizes = [2, 32], strides = [1, 1]} : vector<2x128xf32> to vector<2x32xf32>
    %179 = math.tanh %178 : vector<2x32xf32>
    %180 = vector.extract_strided_slice %165 {offsets = [0, 96], sizes = [2, 32], strides = [1, 1]} : vector<2x128xf32> to vector<2x32xf32>
    %181 = arith.negf %180 : vector<2x32xf32>
    %182 = math.exp %181 : vector<2x32xf32>
    %cst_44 = arith.constant 1.000000e+00 : f32
    %183 = vector.broadcast %cst_44 : f32 to vector<2x32xf32>
    %184 = arith.addf %183, %182 : vector<2x32xf32>
    %185 = arith.divf %183, %184 : vector<2x32xf32>
    %186 = arith.mulf %177, %131 : vector<2x32xf32>
    %187 = arith.mulf %171, %179 : vector<2x32xf32>
    %188 = arith.addf %186, %187 : vector<2x32xf32>
    %189 = math.tanh %188 : vector<2x32xf32>
    %190 = arith.mulf %185, %189 : vector<2x32xf32>
    %191 = vector.extract_strided_slice %69 {offsets = [4, 0], sizes = [2, 128], strides = [1, 1]} : vector<32x128xf32> to vector<2x128xf32>
    %cst_45 = arith.constant dense<0.000000e+00> : vector<2x128xf32>
    %192 = tpu.matmul %161, %70, %cst_45 {dimension_numbers = #tpu.dot_dimension_numbers<[1], [0], [0], [1], [0, 0, 1, 1], [], []>} : vector<2x32xf32>, vector<32x128xf32>, vector<2x128xf32> -> vector<2x128xf32>
    %193 = arith.addf %191, %192 : vector<2x128xf32>
    %194 = vector.extract_strided_slice %193 {offsets = [0, 0], sizes = [2, 32], strides = [1, 1]} : vector<2x128xf32> to vector<2x32xf32>
    %195 = arith.negf %194 : vector<2x32xf32>
    %196 = math.exp %195 : vector<2x32xf32>
    %cst_46 = arith.constant 1.000000e+00 : f32
    %197 = vector.broadcast %cst_46 : f32 to vector<2x32xf32>
    %198 = arith.addf %197, %196 : vector<2x32xf32>
    %199 = arith.divf %197, %198 : vector<2x32xf32>
    %200 = vector.extract_strided_slice %193 {offsets = [0, 32], sizes = [2, 32], strides = [1, 1]} : vector<2x128xf32> to vector<2x32xf32>
    %201 = arith.negf %200 : vector<2x32xf32>
    %202 = math.exp %201 : vector<2x32xf32>
    %cst_47 = arith.constant 1.000000e+00 : f32
    %203 = vector.broadcast %cst_47 : f32 to vector<2x32xf32>
    %204 = arith.addf %203, %202 : vector<2x32xf32>
    %205 = arith.divf %203, %204 : vector<2x32xf32>
    %206 = vector.extract_strided_slice %193 {offsets = [0, 64], sizes = [2, 32], strides = [1, 1]} : vector<2x128xf32> to vector<2x32xf32>
    %207 = math.tanh %206 : vector<2x32xf32>
    %208 = vector.extract_strided_slice %193 {offsets = [0, 96], sizes = [2, 32], strides = [1, 1]} : vector<2x128xf32> to vector<2x32xf32>
    %209 = arith.negf %208 : vector<2x32xf32>
    %210 = math.exp %209 : vector<2x32xf32>
    %cst_48 = arith.constant 1.000000e+00 : f32
    %211 = vector.broadcast %cst_48 : f32 to vector<2x32xf32>
    %212 = arith.addf %211, %210 : vector<2x32xf32>
    %213 = arith.divf %211, %212 : vector<2x32xf32>
    %214 = arith.mulf %205, %159 : vector<2x32xf32>
    %215 = arith.mulf %199, %207 : vector<2x32xf32>
    %216 = arith.addf %214, %215 : vector<2x32xf32>
    %217 = math.tanh %216 : vector<2x32xf32>
    %218 = arith.mulf %213, %217 : vector<2x32xf32>
    %219 = tpu.concatenate %218, %190 in 1 : vector<2x32xf32>, vector<2x32xf32> -> vector<2x64xf32>
    %cst_49 = arith.constant dense<0.000000e+00> : vector<2x128xf32>
    %220 = tpu.matmul %219, %71, %cst_49 {dimension_numbers = #tpu.dot_dimension_numbers<[1], [0], [0], [1], [0, 0, 1, 1], [], []>} : vector<2x64xf32>, vector<64x128xf32>, vector<2x128xf32> -> vector<2x128xf32>
    %221 = vector.broadcast %72 : vector<1x128xf32> to vector<2x128xf32>
    %222 = arith.addf %220, %221 : vector<2x128xf32>
    %223 = vector.extract_strided_slice %222 {offsets = [0, 0], sizes = [2, 32], strides = [1, 1]} : vector<2x128xf32> to vector<2x32xf32>
    %224 = arith.negf %223 : vector<2x32xf32>
    %225 = math.exp %224 : vector<2x32xf32>
    %cst_50 = arith.constant 1.000000e+00 : f32
    %226 = vector.broadcast %cst_50 : f32 to vector<2x32xf32>
    %227 = arith.addf %226, %225 : vector<2x32xf32>
    %228 = arith.divf %226, %227 : vector<2x32xf32>
    %229 = vector.extract_strided_slice %222 {offsets = [0, 32], sizes = [2, 32], strides = [1, 1]} : vector<2x128xf32> to vector<2x32xf32>
    %230 = arith.negf %229 : vector<2x32xf32>
    %231 = math.exp %230 : vector<2x32xf32>
    %cst_51 = arith.constant 1.000000e+00 : f32
    %232 = vector.broadcast %cst_51 : f32 to vector<2x32xf32>
    %233 = arith.addf %232, %231 : vector<2x32xf32>
    %234 = arith.divf %232, %233 : vector<2x32xf32>
    %235 = vector.extract_strided_slice %222 {offsets = [0, 64], sizes = [2, 32], strides = [1, 1]} : vector<2x128xf32> to vector<2x32xf32>
    %236 = math.tanh %235 : vector<2x32xf32>
    %237 = vector.extract_strided_slice %222 {offsets = [0, 96], sizes = [2, 32], strides = [1, 1]} : vector<2x128xf32> to vector<2x32xf32>
    %238 = arith.negf %237 : vector<2x32xf32>
    %239 = math.exp %238 : vector<2x32xf32>
    %cst_52 = arith.constant 1.000000e+00 : f32
    %240 = vector.broadcast %cst_52 : f32 to vector<2x32xf32>
    %241 = arith.addf %240, %239 : vector<2x32xf32>
    %242 = arith.divf %240, %241 : vector<2x32xf32>
    %243 = arith.mulf %234, %188 : vector<2x32xf32>
    %244 = arith.mulf %228, %236 : vector<2x32xf32>
    %245 = arith.addf %243, %244 : vector<2x32xf32>
    %246 = math.tanh %245 : vector<2x32xf32>
    %247 = arith.mulf %242, %246 : vector<2x32xf32>
    %248 = vector.extract_strided_slice %69 {offsets = [6, 0], sizes = [2, 128], strides = [1, 1]} : vector<32x128xf32> to vector<2x128xf32>
    %cst_53 = arith.constant dense<0.000000e+00> : vector<2x128xf32>
    %249 = tpu.matmul %218, %70, %cst_53 {dimension_numbers = #tpu.dot_dimension_numbers<[1], [0], [0], [1], [0, 0, 1, 1], [], []>} : vector<2x32xf32>, vector<32x128xf32>, vector<2x128xf32> -> vector<2x128xf32>
    %250 = arith.addf %248, %249 : vector<2x128xf32>
    %251 = vector.extract_strided_slice %250 {offsets = [0, 0], sizes = [2, 32], strides = [1, 1]} : vector<2x128xf32> to vector<2x32xf32>
    %252 = arith.negf %251 : vector<2x32xf32>
    %253 = math.exp %252 : vector<2x32xf32>
    %cst_54 = arith.constant 1.000000e+00 : f32
    %254 = vector.broadcast %cst_54 : f32 to vector<2x32xf32>
    %255 = arith.addf %254, %253 : vector<2x32xf32>
    %256 = arith.divf %254, %255 : vector<2x32xf32>
    %257 = vector.extract_strided_slice %250 {offsets = [0, 32], sizes = [2, 32], strides = [1, 1]} : vector<2x128xf32> to vector<2x32xf32>
    %258 = arith.negf %257 : vector<2x32xf32>
    %259 = math.exp %258 : vector<2x32xf32>
    %cst_55 = arith.constant 1.000000e+00 : f32
    %260 = vector.broadcast %cst_55 : f32 to vector<2x32xf32>
    %261 = arith.addf %260, %259 : vector<2x32xf32>
    %262 = arith.divf %260, %261 : vector<2x32xf32>
    %263 = vector.extract_strided_slice %250 {offsets = [0, 64], sizes = [2, 32], strides = [1, 1]} : vector<2x128xf32> to vector<2x32xf32>
    %264 = math.tanh %263 : vector<2x32xf32>
    %265 = vector.extract_strided_slice %250 {offsets = [0, 96], sizes = [2, 32], strides = [1, 1]} : vector<2x128xf32> to vector<2x32xf32>
    %266 = arith.negf %265 : vector<2x32xf32>
    %267 = math.exp %266 : vector<2x32xf32>
    %cst_56 = arith.constant 1.000000e+00 : f32
    %268 = vector.broadcast %cst_56 : f32 to vector<2x32xf32>
    %269 = arith.addf %268, %267 : vector<2x32xf32>
    %270 = arith.divf %268, %269 : vector<2x32xf32>
    %271 = arith.mulf %262, %216 : vector<2x32xf32>
    %272 = arith.mulf %256, %264 : vector<2x32xf32>
    %273 = arith.addf %271, %272 : vector<2x32xf32>
    %274 = math.tanh %273 : vector<2x32xf32>
    %275 = arith.mulf %270, %274 : vector<2x32xf32>
    %276 = tpu.concatenate %275, %247 in 1 : vector<2x32xf32>, vector<2x32xf32> -> vector<2x64xf32>
    %cst_57 = arith.constant dense<0.000000e+00> : vector<2x128xf32>
    %277 = tpu.matmul %276, %71, %cst_57 {dimension_numbers = #tpu.dot_dimension_numbers<[1], [0], [0], [1], [0, 0, 1, 1], [], []>} : vector<2x64xf32>, vector<64x128xf32>, vector<2x128xf32> -> vector<2x128xf32>
    %278 = vector.broadcast %72 : vector<1x128xf32> to vector<2x128xf32>
    %279 = arith.addf %277, %278 : vector<2x128xf32>
    %280 = vector.extract_strided_slice %279 {offsets = [0, 0], sizes = [2, 32], strides = [1, 1]} : vector<2x128xf32> to vector<2x32xf32>
    %281 = arith.negf %280 : vector<2x32xf32>
    %282 = math.exp %281 : vector<2x32xf32>
    %cst_58 = arith.constant 1.000000e+00 : f32
    %283 = vector.broadcast %cst_58 : f32 to vector<2x32xf32>
    %284 = arith.addf %283, %282 : vector<2x32xf32>
    %285 = arith.divf %283, %284 : vector<2x32xf32>
    %286 = vector.extract_strided_slice %279 {offsets = [0, 32], sizes = [2, 32], strides = [1, 1]} : vector<2x128xf32> to vector<2x32xf32>
    %287 = arith.negf %286 : vector<2x32xf32>
    %288 = math.exp %287 : vector<2x32xf32>
    %cst_59 = arith.constant 1.000000e+00 : f32
    %289 = vector.broadcast %cst_59 : f32 to vector<2x32xf32>
    %290 = arith.addf %289, %288 : vector<2x32xf32>
    %291 = arith.divf %289, %290 : vector<2x32xf32>
    %292 = vector.extract_strided_slice %279 {offsets = [0, 64], sizes = [2, 32], strides = [1, 1]} : vector<2x128xf32> to vector<2x32xf32>
    %293 = math.tanh %292 : vector<2x32xf32>
    %294 = vector.extract_strided_slice %279 {offsets = [0, 96], sizes = [2, 32], strides = [1, 1]} : vector<2x128xf32> to vector<2x32xf32>
    %295 = arith.negf %294 : vector<2x32xf32>
    %296 = math.exp %295 : vector<2x32xf32>
    %cst_60 = arith.constant 1.000000e+00 : f32
    %297 = vector.broadcast %cst_60 : f32 to vector<2x32xf32>
    %298 = arith.addf %297, %296 : vector<2x32xf32>
    %299 = arith.divf %297, %298 : vector<2x32xf32>
    %300 = arith.mulf %291, %245 : vector<2x32xf32>
    %301 = arith.mulf %285, %293 : vector<2x32xf32>
    %302 = arith.addf %300, %301 : vector<2x32xf32>
    %303 = math.tanh %302 : vector<2x32xf32>
    %304 = arith.mulf %299, %303 : vector<2x32xf32>
    %305 = vector.extract_strided_slice %69 {offsets = [8, 0], sizes = [2, 128], strides = [1, 1]} : vector<32x128xf32> to vector<2x128xf32>
    %cst_61 = arith.constant dense<0.000000e+00> : vector<2x128xf32>
    %306 = tpu.matmul %275, %70, %cst_61 {dimension_numbers = #tpu.dot_dimension_numbers<[1], [0], [0], [1], [0, 0, 1, 1], [], []>} : vector<2x32xf32>, vector<32x128xf32>, vector<2x128xf32> -> vector<2x128xf32>
    %307 = arith.addf %305, %306 : vector<2x128xf32>
    %308 = vector.extract_strided_slice %307 {offsets = [0, 0], sizes = [2, 32], strides = [1, 1]} : vector<2x128xf32> to vector<2x32xf32>
    %309 = arith.negf %308 : vector<2x32xf32>
    %310 = math.exp %309 : vector<2x32xf32>
    %cst_62 = arith.constant 1.000000e+00 : f32
    %311 = vector.broadcast %cst_62 : f32 to vector<2x32xf32>
    %312 = arith.addf %311, %310 : vector<2x32xf32>
    %313 = arith.divf %311, %312 : vector<2x32xf32>
    %314 = vector.extract_strided_slice %307 {offsets = [0, 32], sizes = [2, 32], strides = [1, 1]} : vector<2x128xf32> to vector<2x32xf32>
    %315 = arith.negf %314 : vector<2x32xf32>
    %316 = math.exp %315 : vector<2x32xf32>
    %cst_63 = arith.constant 1.000000e+00 : f32
    %317 = vector.broadcast %cst_63 : f32 to vector<2x32xf32>
    %318 = arith.addf %317, %316 : vector<2x32xf32>
    %319 = arith.divf %317, %318 : vector<2x32xf32>
    %320 = vector.extract_strided_slice %307 {offsets = [0, 64], sizes = [2, 32], strides = [1, 1]} : vector<2x128xf32> to vector<2x32xf32>
    %321 = math.tanh %320 : vector<2x32xf32>
    %322 = vector.extract_strided_slice %307 {offsets = [0, 96], sizes = [2, 32], strides = [1, 1]} : vector<2x128xf32> to vector<2x32xf32>
    %323 = arith.negf %322 : vector<2x32xf32>
    %324 = math.exp %323 : vector<2x32xf32>
    %cst_64 = arith.constant 1.000000e+00 : f32
    %325 = vector.broadcast %cst_64 : f32 to vector<2x32xf32>
    %326 = arith.addf %325, %324 : vector<2x32xf32>
    %327 = arith.divf %325, %326 : vector<2x32xf32>
    %328 = arith.mulf %319, %273 : vector<2x32xf32>
    %329 = arith.mulf %313, %321 : vector<2x32xf32>
    %330 = arith.addf %328, %329 : vector<2x32xf32>
    %331 = math.tanh %330 : vector<2x32xf32>
    %332 = arith.mulf %327, %331 : vector<2x32xf32>
    %333 = tpu.concatenate %332, %304 in 1 : vector<2x32xf32>, vector<2x32xf32> -> vector<2x64xf32>
    %cst_65 = arith.constant dense<0.000000e+00> : vector<2x128xf32>
    %334 = tpu.matmul %333, %71, %cst_65 {dimension_numbers = #tpu.dot_dimension_numbers<[1], [0], [0], [1], [0, 0, 1, 1], [], []>} : vector<2x64xf32>, vector<64x128xf32>, vector<2x128xf32> -> vector<2x128xf32>
    %335 = vector.broadcast %72 : vector<1x128xf32> to vector<2x128xf32>
    %336 = arith.addf %334, %335 : vector<2x128xf32>
    %337 = vector.extract_strided_slice %336 {offsets = [0, 0], sizes = [2, 32], strides = [1, 1]} : vector<2x128xf32> to vector<2x32xf32>
    %338 = arith.negf %337 : vector<2x32xf32>
    %339 = math.exp %338 : vector<2x32xf32>
    %cst_66 = arith.constant 1.000000e+00 : f32
    %340 = vector.broadcast %cst_66 : f32 to vector<2x32xf32>
    %341 = arith.addf %340, %339 : vector<2x32xf32>
    %342 = arith.divf %340, %341 : vector<2x32xf32>
    %343 = vector.extract_strided_slice %336 {offsets = [0, 32], sizes = [2, 32], strides = [1, 1]} : vector<2x128xf32> to vector<2x32xf32>
    %344 = arith.negf %343 : vector<2x32xf32>
    %345 = math.exp %344 : vector<2x32xf32>
    %cst_67 = arith.constant 1.000000e+00 : f32
    %346 = vector.broadcast %cst_67 : f32 to vector<2x32xf32>
    %347 = arith.addf %346, %345 : vector<2x32xf32>
    %348 = arith.divf %346, %347 : vector<2x32xf32>
    %349 = vector.extract_strided_slice %336 {offsets = [0, 64], sizes = [2, 32], strides = [1, 1]} : vector<2x128xf32> to vector<2x32xf32>
    %350 = math.tanh %349 : vector<2x32xf32>
    %351 = vector.extract_strided_slice %336 {offsets = [0, 96], sizes = [2, 32], strides = [1, 1]} : vector<2x128xf32> to vector<2x32xf32>
    %352 = arith.negf %351 : vector<2x32xf32>
    %353 = math.exp %352 : vector<2x32xf32>
    %cst_68 = arith.constant 1.000000e+00 : f32
    %354 = vector.broadcast %cst_68 : f32 to vector<2x32xf32>
    %355 = arith.addf %354, %353 : vector<2x32xf32>
    %356 = arith.divf %354, %355 : vector<2x32xf32>
    %357 = arith.mulf %348, %302 : vector<2x32xf32>
    %358 = arith.mulf %342, %350 : vector<2x32xf32>
    %359 = arith.addf %357, %358 : vector<2x32xf32>
    %360 = math.tanh %359 : vector<2x32xf32>
    %361 = arith.mulf %356, %360 : vector<2x32xf32>
    %362 = vector.extract_strided_slice %69 {offsets = [10, 0], sizes = [2, 128], strides = [1, 1]} : vector<32x128xf32> to vector<2x128xf32>
    %cst_69 = arith.constant dense<0.000000e+00> : vector<2x128xf32>
    %363 = tpu.matmul %332, %70, %cst_69 {dimension_numbers = #tpu.dot_dimension_numbers<[1], [0], [0], [1], [0, 0, 1, 1], [], []>} : vector<2x32xf32>, vector<32x128xf32>, vector<2x128xf32> -> vector<2x128xf32>
    %364 = arith.addf %362, %363 : vector<2x128xf32>
    %365 = vector.extract_strided_slice %364 {offsets = [0, 0], sizes = [2, 32], strides = [1, 1]} : vector<2x128xf32> to vector<2x32xf32>
    %366 = arith.negf %365 : vector<2x32xf32>
    %367 = math.exp %366 : vector<2x32xf32>
    %cst_70 = arith.constant 1.000000e+00 : f32
    %368 = vector.broadcast %cst_70 : f32 to vector<2x32xf32>
    %369 = arith.addf %368, %367 : vector<2x32xf32>
    %370 = arith.divf %368, %369 : vector<2x32xf32>
    %371 = vector.extract_strided_slice %364 {offsets = [0, 32], sizes = [2, 32], strides = [1, 1]} : vector<2x128xf32> to vector<2x32xf32>
    %372 = arith.negf %371 : vector<2x32xf32>
    %373 = math.exp %372 : vector<2x32xf32>
    %cst_71 = arith.constant 1.000000e+00 : f32
    %374 = vector.broadcast %cst_71 : f32 to vector<2x32xf32>
    %375 = arith.addf %374, %373 : vector<2x32xf32>
    %376 = arith.divf %374, %375 : vector<2x32xf32>
    %377 = vector.extract_strided_slice %364 {offsets = [0, 64], sizes = [2, 32], strides = [1, 1]} : vector<2x128xf32> to vector<2x32xf32>
    %378 = math.tanh %377 : vector<2x32xf32>
    %379 = vector.extract_strided_slice %364 {offsets = [0, 96], sizes = [2, 32], strides = [1, 1]} : vector<2x128xf32> to vector<2x32xf32>
    %380 = arith.negf %379 : vector<2x32xf32>
    %381 = math.exp %380 : vector<2x32xf32>
    %cst_72 = arith.constant 1.000000e+00 : f32
    %382 = vector.broadcast %cst_72 : f32 to vector<2x32xf32>
    %383 = arith.addf %382, %381 : vector<2x32xf32>
    %384 = arith.divf %382, %383 : vector<2x32xf32>
    %385 = arith.mulf %376, %330 : vector<2x32xf32>
    %386 = arith.mulf %370, %378 : vector<2x32xf32>
    %387 = arith.addf %385, %386 : vector<2x32xf32>
    %388 = math.tanh %387 : vector<2x32xf32>
    %389 = arith.mulf %384, %388 : vector<2x32xf32>
    %390 = tpu.concatenate %389, %361 in 1 : vector<2x32xf32>, vector<2x32xf32> -> vector<2x64xf32>
    %cst_73 = arith.constant dense<0.000000e+00> : vector<2x128xf32>
    %391 = tpu.matmul %390, %71, %cst_73 {dimension_numbers = #tpu.dot_dimension_numbers<[1], [0], [0], [1], [0, 0, 1, 1], [], []>} : vector<2x64xf32>, vector<64x128xf32>, vector<2x128xf32> -> vector<2x128xf32>
    %392 = vector.broadcast %72 : vector<1x128xf32> to vector<2x128xf32>
    %393 = arith.addf %391, %392 : vector<2x128xf32>
    %394 = vector.extract_strided_slice %393 {offsets = [0, 0], sizes = [2, 32], strides = [1, 1]} : vector<2x128xf32> to vector<2x32xf32>
    %395 = arith.negf %394 : vector<2x32xf32>
    %396 = math.exp %395 : vector<2x32xf32>
    %cst_74 = arith.constant 1.000000e+00 : f32
    %397 = vector.broadcast %cst_74 : f32 to vector<2x32xf32>
    %398 = arith.addf %397, %396 : vector<2x32xf32>
    %399 = arith.divf %397, %398 : vector<2x32xf32>
    %400 = vector.extract_strided_slice %393 {offsets = [0, 32], sizes = [2, 32], strides = [1, 1]} : vector<2x128xf32> to vector<2x32xf32>
    %401 = arith.negf %400 : vector<2x32xf32>
    %402 = math.exp %401 : vector<2x32xf32>
    %cst_75 = arith.constant 1.000000e+00 : f32
    %403 = vector.broadcast %cst_75 : f32 to vector<2x32xf32>
    %404 = arith.addf %403, %402 : vector<2x32xf32>
    %405 = arith.divf %403, %404 : vector<2x32xf32>
    %406 = vector.extract_strided_slice %393 {offsets = [0, 64], sizes = [2, 32], strides = [1, 1]} : vector<2x128xf32> to vector<2x32xf32>
    %407 = math.tanh %406 : vector<2x32xf32>
    %408 = vector.extract_strided_slice %393 {offsets = [0, 96], sizes = [2, 32], strides = [1, 1]} : vector<2x128xf32> to vector<2x32xf32>
    %409 = arith.negf %408 : vector<2x32xf32>
    %410 = math.exp %409 : vector<2x32xf32>
    %cst_76 = arith.constant 1.000000e+00 : f32
    %411 = vector.broadcast %cst_76 : f32 to vector<2x32xf32>
    %412 = arith.addf %411, %410 : vector<2x32xf32>
    %413 = arith.divf %411, %412 : vector<2x32xf32>
    %414 = arith.mulf %405, %359 : vector<2x32xf32>
    %415 = arith.mulf %399, %407 : vector<2x32xf32>
    %416 = arith.addf %414, %415 : vector<2x32xf32>
    %417 = math.tanh %416 : vector<2x32xf32>
    %418 = arith.mulf %413, %417 : vector<2x32xf32>
    %419 = vector.extract_strided_slice %69 {offsets = [12, 0], sizes = [2, 128], strides = [1, 1]} : vector<32x128xf32> to vector<2x128xf32>
    %cst_77 = arith.constant dense<0.000000e+00> : vector<2x128xf32>
    %420 = tpu.matmul %389, %70, %cst_77 {dimension_numbers = #tpu.dot_dimension_numbers<[1], [0], [0], [1], [0, 0, 1, 1], [], []>} : vector<2x32xf32>, vector<32x128xf32>, vector<2x128xf32> -> vector<2x128xf32>
    %421 = arith.addf %419, %420 : vector<2x128xf32>
    %422 = vector.extract_strided_slice %421 {offsets = [0, 0], sizes = [2, 32], strides = [1, 1]} : vector<2x128xf32> to vector<2x32xf32>
    %423 = arith.negf %422 : vector<2x32xf32>
    %424 = math.exp %423 : vector<2x32xf32>
    %cst_78 = arith.constant 1.000000e+00 : f32
    %425 = vector.broadcast %cst_78 : f32 to vector<2x32xf32>
    %426 = arith.addf %425, %424 : vector<2x32xf32>
    %427 = arith.divf %425, %426 : vector<2x32xf32>
    %428 = vector.extract_strided_slice %421 {offsets = [0, 32], sizes = [2, 32], strides = [1, 1]} : vector<2x128xf32> to vector<2x32xf32>
    %429 = arith.negf %428 : vector<2x32xf32>
    %430 = math.exp %429 : vector<2x32xf32>
    %cst_79 = arith.constant 1.000000e+00 : f32
    %431 = vector.broadcast %cst_79 : f32 to vector<2x32xf32>
    %432 = arith.addf %431, %430 : vector<2x32xf32>
    %433 = arith.divf %431, %432 : vector<2x32xf32>
    %434 = vector.extract_strided_slice %421 {offsets = [0, 64], sizes = [2, 32], strides = [1, 1]} : vector<2x128xf32> to vector<2x32xf32>
    %435 = math.tanh %434 : vector<2x32xf32>
    %436 = vector.extract_strided_slice %421 {offsets = [0, 96], sizes = [2, 32], strides = [1, 1]} : vector<2x128xf32> to vector<2x32xf32>
    %437 = arith.negf %436 : vector<2x32xf32>
    %438 = math.exp %437 : vector<2x32xf32>
    %cst_80 = arith.constant 1.000000e+00 : f32
    %439 = vector.broadcast %cst_80 : f32 to vector<2x32xf32>
    %440 = arith.addf %439, %438 : vector<2x32xf32>
    %441 = arith.divf %439, %440 : vector<2x32xf32>
    %442 = arith.mulf %433, %387 : vector<2x32xf32>
    %443 = arith.mulf %427, %435 : vector<2x32xf32>
    %444 = arith.addf %442, %443 : vector<2x32xf32>
    %445 = math.tanh %444 : vector<2x32xf32>
    %446 = arith.mulf %441, %445 : vector<2x32xf32>
    %447 = tpu.concatenate %446, %418 in 1 : vector<2x32xf32>, vector<2x32xf32> -> vector<2x64xf32>
    %cst_81 = arith.constant dense<0.000000e+00> : vector<2x128xf32>
    %448 = tpu.matmul %447, %71, %cst_81 {dimension_numbers = #tpu.dot_dimension_numbers<[1], [0], [0], [1], [0, 0, 1, 1], [], []>} : vector<2x64xf32>, vector<64x128xf32>, vector<2x128xf32> -> vector<2x128xf32>
    %449 = vector.broadcast %72 : vector<1x128xf32> to vector<2x128xf32>
    %450 = arith.addf %448, %449 : vector<2x128xf32>
    %451 = vector.extract_strided_slice %450 {offsets = [0, 0], sizes = [2, 32], strides = [1, 1]} : vector<2x128xf32> to vector<2x32xf32>
    %452 = arith.negf %451 : vector<2x32xf32>
    %453 = math.exp %452 : vector<2x32xf32>
    %cst_82 = arith.constant 1.000000e+00 : f32
    %454 = vector.broadcast %cst_82 : f32 to vector<2x32xf32>
    %455 = arith.addf %454, %453 : vector<2x32xf32>
    %456 = arith.divf %454, %455 : vector<2x32xf32>
    %457 = vector.extract_strided_slice %450 {offsets = [0, 32], sizes = [2, 32], strides = [1, 1]} : vector<2x128xf32> to vector<2x32xf32>
    %458 = arith.negf %457 : vector<2x32xf32>
    %459 = math.exp %458 : vector<2x32xf32>
    %cst_83 = arith.constant 1.000000e+00 : f32
    %460 = vector.broadcast %cst_83 : f32 to vector<2x32xf32>
    %461 = arith.addf %460, %459 : vector<2x32xf32>
    %462 = arith.divf %460, %461 : vector<2x32xf32>
    %463 = vector.extract_strided_slice %450 {offsets = [0, 64], sizes = [2, 32], strides = [1, 1]} : vector<2x128xf32> to vector<2x32xf32>
    %464 = math.tanh %463 : vector<2x32xf32>
    %465 = vector.extract_strided_slice %450 {offsets = [0, 96], sizes = [2, 32], strides = [1, 1]} : vector<2x128xf32> to vector<2x32xf32>
    %466 = arith.negf %465 : vector<2x32xf32>
    %467 = math.exp %466 : vector<2x32xf32>
    %cst_84 = arith.constant 1.000000e+00 : f32
    %468 = vector.broadcast %cst_84 : f32 to vector<2x32xf32>
    %469 = arith.addf %468, %467 : vector<2x32xf32>
    %470 = arith.divf %468, %469 : vector<2x32xf32>
    %471 = arith.mulf %462, %416 : vector<2x32xf32>
    %472 = arith.mulf %456, %464 : vector<2x32xf32>
    %473 = arith.addf %471, %472 : vector<2x32xf32>
    %474 = math.tanh %473 : vector<2x32xf32>
    %475 = arith.mulf %470, %474 : vector<2x32xf32>
    %476 = vector.extract_strided_slice %69 {offsets = [14, 0], sizes = [2, 128], strides = [1, 1]} : vector<32x128xf32> to vector<2x128xf32>
    %cst_85 = arith.constant dense<0.000000e+00> : vector<2x128xf32>
    %477 = tpu.matmul %446, %70, %cst_85 {dimension_numbers = #tpu.dot_dimension_numbers<[1], [0], [0], [1], [0, 0, 1, 1], [], []>} : vector<2x32xf32>, vector<32x128xf32>, vector<2x128xf32> -> vector<2x128xf32>
    %478 = arith.addf %476, %477 : vector<2x128xf32>
    %479 = vector.extract_strided_slice %478 {offsets = [0, 0], sizes = [2, 32], strides = [1, 1]} : vector<2x128xf32> to vector<2x32xf32>
    %480 = arith.negf %479 : vector<2x32xf32>
    %481 = math.exp %480 : vector<2x32xf32>
    %cst_86 = arith.constant 1.000000e+00 : f32
    %482 = vector.broadcast %cst_86 : f32 to vector<2x32xf32>
    %483 = arith.addf %482, %481 : vector<2x32xf32>
    %484 = arith.divf %482, %483 : vector<2x32xf32>
    %485 = vector.extract_strided_slice %478 {offsets = [0, 32], sizes = [2, 32], strides = [1, 1]} : vector<2x128xf32> to vector<2x32xf32>
    %486 = arith.negf %485 : vector<2x32xf32>
    %487 = math.exp %486 : vector<2x32xf32>
    %cst_87 = arith.constant 1.000000e+00 : f32
    %488 = vector.broadcast %cst_87 : f32 to vector<2x32xf32>
    %489 = arith.addf %488, %487 : vector<2x32xf32>
    %490 = arith.divf %488, %489 : vector<2x32xf32>
    %491 = vector.extract_strided_slice %478 {offsets = [0, 64], sizes = [2, 32], strides = [1, 1]} : vector<2x128xf32> to vector<2x32xf32>
    %492 = math.tanh %491 : vector<2x32xf32>
    %493 = vector.extract_strided_slice %478 {offsets = [0, 96], sizes = [2, 32], strides = [1, 1]} : vector<2x128xf32> to vector<2x32xf32>
    %494 = arith.negf %493 : vector<2x32xf32>
    %495 = math.exp %494 : vector<2x32xf32>
    %cst_88 = arith.constant 1.000000e+00 : f32
    %496 = vector.broadcast %cst_88 : f32 to vector<2x32xf32>
    %497 = arith.addf %496, %495 : vector<2x32xf32>
    %498 = arith.divf %496, %497 : vector<2x32xf32>
    %499 = arith.mulf %490, %444 : vector<2x32xf32>
    %500 = arith.mulf %484, %492 : vector<2x32xf32>
    %501 = arith.addf %499, %500 : vector<2x32xf32>
    %502 = math.tanh %501 : vector<2x32xf32>
    %503 = arith.mulf %498, %502 : vector<2x32xf32>
    %504 = tpu.concatenate %503, %475 in 1 : vector<2x32xf32>, vector<2x32xf32> -> vector<2x64xf32>
    %cst_89 = arith.constant dense<0.000000e+00> : vector<2x128xf32>
    %505 = tpu.matmul %504, %71, %cst_89 {dimension_numbers = #tpu.dot_dimension_numbers<[1], [0], [0], [1], [0, 0, 1, 1], [], []>} : vector<2x64xf32>, vector<64x128xf32>, vector<2x128xf32> -> vector<2x128xf32>
    %506 = vector.broadcast %72 : vector<1x128xf32> to vector<2x128xf32>
    %507 = arith.addf %505, %506 : vector<2x128xf32>
    %508 = vector.extract_strided_slice %507 {offsets = [0, 0], sizes = [2, 32], strides = [1, 1]} : vector<2x128xf32> to vector<2x32xf32>
    %509 = arith.negf %508 : vector<2x32xf32>
    %510 = math.exp %509 : vector<2x32xf32>
    %cst_90 = arith.constant 1.000000e+00 : f32
    %511 = vector.broadcast %cst_90 : f32 to vector<2x32xf32>
    %512 = arith.addf %511, %510 : vector<2x32xf32>
    %513 = arith.divf %511, %512 : vector<2x32xf32>
    %514 = vector.extract_strided_slice %507 {offsets = [0, 32], sizes = [2, 32], strides = [1, 1]} : vector<2x128xf32> to vector<2x32xf32>
    %515 = arith.negf %514 : vector<2x32xf32>
    %516 = math.exp %515 : vector<2x32xf32>
    %cst_91 = arith.constant 1.000000e+00 : f32
    %517 = vector.broadcast %cst_91 : f32 to vector<2x32xf32>
    %518 = arith.addf %517, %516 : vector<2x32xf32>
    %519 = arith.divf %517, %518 : vector<2x32xf32>
    %520 = vector.extract_strided_slice %507 {offsets = [0, 64], sizes = [2, 32], strides = [1, 1]} : vector<2x128xf32> to vector<2x32xf32>
    %521 = math.tanh %520 : vector<2x32xf32>
    %522 = vector.extract_strided_slice %507 {offsets = [0, 96], sizes = [2, 32], strides = [1, 1]} : vector<2x128xf32> to vector<2x32xf32>
    %523 = arith.negf %522 : vector<2x32xf32>
    %524 = math.exp %523 : vector<2x32xf32>
    %cst_92 = arith.constant 1.000000e+00 : f32
    %525 = vector.broadcast %cst_92 : f32 to vector<2x32xf32>
    %526 = arith.addf %525, %524 : vector<2x32xf32>
    %527 = arith.divf %525, %526 : vector<2x32xf32>
    %528 = arith.mulf %519, %473 : vector<2x32xf32>
    %529 = arith.mulf %513, %521 : vector<2x32xf32>
    %530 = arith.addf %528, %529 : vector<2x32xf32>
    %531 = math.tanh %530 : vector<2x32xf32>
    %532 = arith.mulf %527, %531 : vector<2x32xf32>
    %533 = vector.extract_strided_slice %69 {offsets = [16, 0], sizes = [2, 128], strides = [1, 1]} : vector<32x128xf32> to vector<2x128xf32>
    %cst_93 = arith.constant dense<0.000000e+00> : vector<2x128xf32>
    %534 = tpu.matmul %503, %70, %cst_93 {dimension_numbers = #tpu.dot_dimension_numbers<[1], [0], [0], [1], [0, 0, 1, 1], [], []>} : vector<2x32xf32>, vector<32x128xf32>, vector<2x128xf32> -> vector<2x128xf32>
    %535 = arith.addf %533, %534 : vector<2x128xf32>
    %536 = vector.extract_strided_slice %535 {offsets = [0, 0], sizes = [2, 32], strides = [1, 1]} : vector<2x128xf32> to vector<2x32xf32>
    %537 = arith.negf %536 : vector<2x32xf32>
    %538 = math.exp %537 : vector<2x32xf32>
    %cst_94 = arith.constant 1.000000e+00 : f32
    %539 = vector.broadcast %cst_94 : f32 to vector<2x32xf32>
    %540 = arith.addf %539, %538 : vector<2x32xf32>
    %541 = arith.divf %539, %540 : vector<2x32xf32>
    %542 = vector.extract_strided_slice %535 {offsets = [0, 32], sizes = [2, 32], strides = [1, 1]} : vector<2x128xf32> to vector<2x32xf32>
    %543 = arith.negf %542 : vector<2x32xf32>
    %544 = math.exp %543 : vector<2x32xf32>
    %cst_95 = arith.constant 1.000000e+00 : f32
    %545 = vector.broadcast %cst_95 : f32 to vector<2x32xf32>
    %546 = arith.addf %545, %544 : vector<2x32xf32>
    %547 = arith.divf %545, %546 : vector<2x32xf32>
    %548 = vector.extract_strided_slice %535 {offsets = [0, 64], sizes = [2, 32], strides = [1, 1]} : vector<2x128xf32> to vector<2x32xf32>
    %549 = math.tanh %548 : vector<2x32xf32>
    %550 = vector.extract_strided_slice %535 {offsets = [0, 96], sizes = [2, 32], strides = [1, 1]} : vector<2x128xf32> to vector<2x32xf32>
    %551 = arith.negf %550 : vector<2x32xf32>
    %552 = math.exp %551 : vector<2x32xf32>
    %cst_96 = arith.constant 1.000000e+00 : f32
    %553 = vector.broadcast %cst_96 : f32 to vector<2x32xf32>
    %554 = arith.addf %553, %552 : vector<2x32xf32>
    %555 = arith.divf %553, %554 : vector<2x32xf32>
    %556 = arith.mulf %547, %501 : vector<2x32xf32>
    %557 = arith.mulf %541, %549 : vector<2x32xf32>
    %558 = arith.addf %556, %557 : vector<2x32xf32>
    %559 = math.tanh %558 : vector<2x32xf32>
    %560 = arith.mulf %555, %559 : vector<2x32xf32>
    %561 = tpu.concatenate %560, %532 in 1 : vector<2x32xf32>, vector<2x32xf32> -> vector<2x64xf32>
    %cst_97 = arith.constant dense<0.000000e+00> : vector<2x128xf32>
    %562 = tpu.matmul %561, %71, %cst_97 {dimension_numbers = #tpu.dot_dimension_numbers<[1], [0], [0], [1], [0, 0, 1, 1], [], []>} : vector<2x64xf32>, vector<64x128xf32>, vector<2x128xf32> -> vector<2x128xf32>
    %563 = vector.broadcast %72 : vector<1x128xf32> to vector<2x128xf32>
    %564 = arith.addf %562, %563 : vector<2x128xf32>
    %565 = vector.extract_strided_slice %564 {offsets = [0, 0], sizes = [2, 32], strides = [1, 1]} : vector<2x128xf32> to vector<2x32xf32>
    %566 = arith.negf %565 : vector<2x32xf32>
    %567 = math.exp %566 : vector<2x32xf32>
    %cst_98 = arith.constant 1.000000e+00 : f32
    %568 = vector.broadcast %cst_98 : f32 to vector<2x32xf32>
    %569 = arith.addf %568, %567 : vector<2x32xf32>
    %570 = arith.divf %568, %569 : vector<2x32xf32>
    %571 = vector.extract_strided_slice %564 {offsets = [0, 32], sizes = [2, 32], strides = [1, 1]} : vector<2x128xf32> to vector<2x32xf32>
    %572 = arith.negf %571 : vector<2x32xf32>
    %573 = math.exp %572 : vector<2x32xf32>
    %cst_99 = arith.constant 1.000000e+00 : f32
    %574 = vector.broadcast %cst_99 : f32 to vector<2x32xf32>
    %575 = arith.addf %574, %573 : vector<2x32xf32>
    %576 = arith.divf %574, %575 : vector<2x32xf32>
    %577 = vector.extract_strided_slice %564 {offsets = [0, 64], sizes = [2, 32], strides = [1, 1]} : vector<2x128xf32> to vector<2x32xf32>
    %578 = math.tanh %577 : vector<2x32xf32>
    %579 = vector.extract_strided_slice %564 {offsets = [0, 96], sizes = [2, 32], strides = [1, 1]} : vector<2x128xf32> to vector<2x32xf32>
    %580 = arith.negf %579 : vector<2x32xf32>
    %581 = math.exp %580 : vector<2x32xf32>
    %cst_100 = arith.constant 1.000000e+00 : f32
    %582 = vector.broadcast %cst_100 : f32 to vector<2x32xf32>
    %583 = arith.addf %582, %581 : vector<2x32xf32>
    %584 = arith.divf %582, %583 : vector<2x32xf32>
    %585 = arith.mulf %576, %530 : vector<2x32xf32>
    %586 = arith.mulf %570, %578 : vector<2x32xf32>
    %587 = arith.addf %585, %586 : vector<2x32xf32>
    %588 = math.tanh %587 : vector<2x32xf32>
    %589 = arith.mulf %584, %588 : vector<2x32xf32>
    %590 = vector.extract_strided_slice %69 {offsets = [18, 0], sizes = [2, 128], strides = [1, 1]} : vector<32x128xf32> to vector<2x128xf32>
    %cst_101 = arith.constant dense<0.000000e+00> : vector<2x128xf32>
    %591 = tpu.matmul %560, %70, %cst_101 {dimension_numbers = #tpu.dot_dimension_numbers<[1], [0], [0], [1], [0, 0, 1, 1], [], []>} : vector<2x32xf32>, vector<32x128xf32>, vector<2x128xf32> -> vector<2x128xf32>
    %592 = arith.addf %590, %591 : vector<2x128xf32>
    %593 = vector.extract_strided_slice %592 {offsets = [0, 0], sizes = [2, 32], strides = [1, 1]} : vector<2x128xf32> to vector<2x32xf32>
    %594 = arith.negf %593 : vector<2x32xf32>
    %595 = math.exp %594 : vector<2x32xf32>
    %cst_102 = arith.constant 1.000000e+00 : f32
    %596 = vector.broadcast %cst_102 : f32 to vector<2x32xf32>
    %597 = arith.addf %596, %595 : vector<2x32xf32>
    %598 = arith.divf %596, %597 : vector<2x32xf32>
    %599 = vector.extract_strided_slice %592 {offsets = [0, 32], sizes = [2, 32], strides = [1, 1]} : vector<2x128xf32> to vector<2x32xf32>
    %600 = arith.negf %599 : vector<2x32xf32>
    %601 = math.exp %600 : vector<2x32xf32>
    %cst_103 = arith.constant 1.000000e+00 : f32
    %602 = vector.broadcast %cst_103 : f32 to vector<2x32xf32>
    %603 = arith.addf %602, %601 : vector<2x32xf32>
    %604 = arith.divf %602, %603 : vector<2x32xf32>
    %605 = vector.extract_strided_slice %592 {offsets = [0, 64], sizes = [2, 32], strides = [1, 1]} : vector<2x128xf32> to vector<2x32xf32>
    %606 = math.tanh %605 : vector<2x32xf32>
    %607 = vector.extract_strided_slice %592 {offsets = [0, 96], sizes = [2, 32], strides = [1, 1]} : vector<2x128xf32> to vector<2x32xf32>
    %608 = arith.negf %607 : vector<2x32xf32>
    %609 = math.exp %608 : vector<2x32xf32>
    %cst_104 = arith.constant 1.000000e+00 : f32
    %610 = vector.broadcast %cst_104 : f32 to vector<2x32xf32>
    %611 = arith.addf %610, %609 : vector<2x32xf32>
    %612 = arith.divf %610, %611 : vector<2x32xf32>
    %613 = arith.mulf %604, %558 : vector<2x32xf32>
    %614 = arith.mulf %598, %606 : vector<2x32xf32>
    %615 = arith.addf %613, %614 : vector<2x32xf32>
    %616 = math.tanh %615 : vector<2x32xf32>
    %617 = arith.mulf %612, %616 : vector<2x32xf32>
    %618 = tpu.concatenate %617, %589 in 1 : vector<2x32xf32>, vector<2x32xf32> -> vector<2x64xf32>
    %cst_105 = arith.constant dense<0.000000e+00> : vector<2x128xf32>
    %619 = tpu.matmul %618, %71, %cst_105 {dimension_numbers = #tpu.dot_dimension_numbers<[1], [0], [0], [1], [0, 0, 1, 1], [], []>} : vector<2x64xf32>, vector<64x128xf32>, vector<2x128xf32> -> vector<2x128xf32>
    %620 = vector.broadcast %72 : vector<1x128xf32> to vector<2x128xf32>
    %621 = arith.addf %619, %620 : vector<2x128xf32>
    %622 = vector.extract_strided_slice %621 {offsets = [0, 0], sizes = [2, 32], strides = [1, 1]} : vector<2x128xf32> to vector<2x32xf32>
    %623 = arith.negf %622 : vector<2x32xf32>
    %624 = math.exp %623 : vector<2x32xf32>
    %cst_106 = arith.constant 1.000000e+00 : f32
    %625 = vector.broadcast %cst_106 : f32 to vector<2x32xf32>
    %626 = arith.addf %625, %624 : vector<2x32xf32>
    %627 = arith.divf %625, %626 : vector<2x32xf32>
    %628 = vector.extract_strided_slice %621 {offsets = [0, 32], sizes = [2, 32], strides = [1, 1]} : vector<2x128xf32> to vector<2x32xf32>
    %629 = arith.negf %628 : vector<2x32xf32>
    %630 = math.exp %629 : vector<2x32xf32>
    %cst_107 = arith.constant 1.000000e+00 : f32
    %631 = vector.broadcast %cst_107 : f32 to vector<2x32xf32>
    %632 = arith.addf %631, %630 : vector<2x32xf32>
    %633 = arith.divf %631, %632 : vector<2x32xf32>
    %634 = vector.extract_strided_slice %621 {offsets = [0, 64], sizes = [2, 32], strides = [1, 1]} : vector<2x128xf32> to vector<2x32xf32>
    %635 = math.tanh %634 : vector<2x32xf32>
    %636 = vector.extract_strided_slice %621 {offsets = [0, 96], sizes = [2, 32], strides = [1, 1]} : vector<2x128xf32> to vector<2x32xf32>
    %637 = arith.negf %636 : vector<2x32xf32>
    %638 = math.exp %637 : vector<2x32xf32>
    %cst_108 = arith.constant 1.000000e+00 : f32
    %639 = vector.broadcast %cst_108 : f32 to vector<2x32xf32>
    %640 = arith.addf %639, %638 : vector<2x32xf32>
    %641 = arith.divf %639, %640 : vector<2x32xf32>
    %642 = arith.mulf %633, %587 : vector<2x32xf32>
    %643 = arith.mulf %627, %635 : vector<2x32xf32>
    %644 = arith.addf %642, %643 : vector<2x32xf32>
    %645 = math.tanh %644 : vector<2x32xf32>
    %646 = arith.mulf %641, %645 : vector<2x32xf32>
    %647 = vector.extract_strided_slice %69 {offsets = [20, 0], sizes = [2, 128], strides = [1, 1]} : vector<32x128xf32> to vector<2x128xf32>
    %cst_109 = arith.constant dense<0.000000e+00> : vector<2x128xf32>
    %648 = tpu.matmul %617, %70, %cst_109 {dimension_numbers = #tpu.dot_dimension_numbers<[1], [0], [0], [1], [0, 0, 1, 1], [], []>} : vector<2x32xf32>, vector<32x128xf32>, vector<2x128xf32> -> vector<2x128xf32>
    %649 = arith.addf %647, %648 : vector<2x128xf32>
    %650 = vector.extract_strided_slice %649 {offsets = [0, 0], sizes = [2, 32], strides = [1, 1]} : vector<2x128xf32> to vector<2x32xf32>
    %651 = arith.negf %650 : vector<2x32xf32>
    %652 = math.exp %651 : vector<2x32xf32>
    %cst_110 = arith.constant 1.000000e+00 : f32
    %653 = vector.broadcast %cst_110 : f32 to vector<2x32xf32>
    %654 = arith.addf %653, %652 : vector<2x32xf32>
    %655 = arith.divf %653, %654 : vector<2x32xf32>
    %656 = vector.extract_strided_slice %649 {offsets = [0, 32], sizes = [2, 32], strides = [1, 1]} : vector<2x128xf32> to vector<2x32xf32>
    %657 = arith.negf %656 : vector<2x32xf32>
    %658 = math.exp %657 : vector<2x32xf32>
    %cst_111 = arith.constant 1.000000e+00 : f32
    %659 = vector.broadcast %cst_111 : f32 to vector<2x32xf32>
    %660 = arith.addf %659, %658 : vector<2x32xf32>
    %661 = arith.divf %659, %660 : vector<2x32xf32>
    %662 = vector.extract_strided_slice %649 {offsets = [0, 64], sizes = [2, 32], strides = [1, 1]} : vector<2x128xf32> to vector<2x32xf32>
    %663 = math.tanh %662 : vector<2x32xf32>
    %664 = vector.extract_strided_slice %649 {offsets = [0, 96], sizes = [2, 32], strides = [1, 1]} : vector<2x128xf32> to vector<2x32xf32>
    %665 = arith.negf %664 : vector<2x32xf32>
    %666 = math.exp %665 : vector<2x32xf32>
    %cst_112 = arith.constant 1.000000e+00 : f32
    %667 = vector.broadcast %cst_112 : f32 to vector<2x32xf32>
    %668 = arith.addf %667, %666 : vector<2x32xf32>
    %669 = arith.divf %667, %668 : vector<2x32xf32>
    %670 = arith.mulf %661, %615 : vector<2x32xf32>
    %671 = arith.mulf %655, %663 : vector<2x32xf32>
    %672 = arith.addf %670, %671 : vector<2x32xf32>
    %673 = math.tanh %672 : vector<2x32xf32>
    %674 = arith.mulf %669, %673 : vector<2x32xf32>
    %675 = tpu.concatenate %674, %646 in 1 : vector<2x32xf32>, vector<2x32xf32> -> vector<2x64xf32>
    %cst_113 = arith.constant dense<0.000000e+00> : vector<2x128xf32>
    %676 = tpu.matmul %675, %71, %cst_113 {dimension_numbers = #tpu.dot_dimension_numbers<[1], [0], [0], [1], [0, 0, 1, 1], [], []>} : vector<2x64xf32>, vector<64x128xf32>, vector<2x128xf32> -> vector<2x128xf32>
    %677 = vector.broadcast %72 : vector<1x128xf32> to vector<2x128xf32>
    %678 = arith.addf %676, %677 : vector<2x128xf32>
    %679 = vector.extract_strided_slice %678 {offsets = [0, 0], sizes = [2, 32], strides = [1, 1]} : vector<2x128xf32> to vector<2x32xf32>
    %680 = arith.negf %679 : vector<2x32xf32>
    %681 = math.exp %680 : vector<2x32xf32>
    %cst_114 = arith.constant 1.000000e+00 : f32
    %682 = vector.broadcast %cst_114 : f32 to vector<2x32xf32>
    %683 = arith.addf %682, %681 : vector<2x32xf32>
    %684 = arith.divf %682, %683 : vector<2x32xf32>
    %685 = vector.extract_strided_slice %678 {offsets = [0, 32], sizes = [2, 32], strides = [1, 1]} : vector<2x128xf32> to vector<2x32xf32>
    %686 = arith.negf %685 : vector<2x32xf32>
    %687 = math.exp %686 : vector<2x32xf32>
    %cst_115 = arith.constant 1.000000e+00 : f32
    %688 = vector.broadcast %cst_115 : f32 to vector<2x32xf32>
    %689 = arith.addf %688, %687 : vector<2x32xf32>
    %690 = arith.divf %688, %689 : vector<2x32xf32>
    %691 = vector.extract_strided_slice %678 {offsets = [0, 64], sizes = [2, 32], strides = [1, 1]} : vector<2x128xf32> to vector<2x32xf32>
    %692 = math.tanh %691 : vector<2x32xf32>
    %693 = vector.extract_strided_slice %678 {offsets = [0, 96], sizes = [2, 32], strides = [1, 1]} : vector<2x128xf32> to vector<2x32xf32>
    %694 = arith.negf %693 : vector<2x32xf32>
    %695 = math.exp %694 : vector<2x32xf32>
    %cst_116 = arith.constant 1.000000e+00 : f32
    %696 = vector.broadcast %cst_116 : f32 to vector<2x32xf32>
    %697 = arith.addf %696, %695 : vector<2x32xf32>
    %698 = arith.divf %696, %697 : vector<2x32xf32>
    %699 = arith.mulf %690, %644 : vector<2x32xf32>
    %700 = arith.mulf %684, %692 : vector<2x32xf32>
    %701 = arith.addf %699, %700 : vector<2x32xf32>
    %702 = math.tanh %701 : vector<2x32xf32>
    %703 = arith.mulf %698, %702 : vector<2x32xf32>
    %704 = vector.extract_strided_slice %69 {offsets = [22, 0], sizes = [2, 128], strides = [1, 1]} : vector<32x128xf32> to vector<2x128xf32>
    %cst_117 = arith.constant dense<0.000000e+00> : vector<2x128xf32>
    %705 = tpu.matmul %674, %70, %cst_117 {dimension_numbers = #tpu.dot_dimension_numbers<[1], [0], [0], [1], [0, 0, 1, 1], [], []>} : vector<2x32xf32>, vector<32x128xf32>, vector<2x128xf32> -> vector<2x128xf32>
    %706 = arith.addf %704, %705 : vector<2x128xf32>
    %707 = vector.extract_strided_slice %706 {offsets = [0, 0], sizes = [2, 32], strides = [1, 1]} : vector<2x128xf32> to vector<2x32xf32>
    %708 = arith.negf %707 : vector<2x32xf32>
    %709 = math.exp %708 : vector<2x32xf32>
    %cst_118 = arith.constant 1.000000e+00 : f32
    %710 = vector.broadcast %cst_118 : f32 to vector<2x32xf32>
    %711 = arith.addf %710, %709 : vector<2x32xf32>
    %712 = arith.divf %710, %711 : vector<2x32xf32>
    %713 = vector.extract_strided_slice %706 {offsets = [0, 32], sizes = [2, 32], strides = [1, 1]} : vector<2x128xf32> to vector<2x32xf32>
    %714 = arith.negf %713 : vector<2x32xf32>
    %715 = math.exp %714 : vector<2x32xf32>
    %cst_119 = arith.constant 1.000000e+00 : f32
    %716 = vector.broadcast %cst_119 : f32 to vector<2x32xf32>
    %717 = arith.addf %716, %715 : vector<2x32xf32>
    %718 = arith.divf %716, %717 : vector<2x32xf32>
    %719 = vector.extract_strided_slice %706 {offsets = [0, 64], sizes = [2, 32], strides = [1, 1]} : vector<2x128xf32> to vector<2x32xf32>
    %720 = math.tanh %719 : vector<2x32xf32>
    %721 = vector.extract_strided_slice %706 {offsets = [0, 96], sizes = [2, 32], strides = [1, 1]} : vector<2x128xf32> to vector<2x32xf32>
    %722 = arith.negf %721 : vector<2x32xf32>
    %723 = math.exp %722 : vector<2x32xf32>
    %cst_120 = arith.constant 1.000000e+00 : f32
    %724 = vector.broadcast %cst_120 : f32 to vector<2x32xf32>
    %725 = arith.addf %724, %723 : vector<2x32xf32>
    %726 = arith.divf %724, %725 : vector<2x32xf32>
    %727 = arith.mulf %718, %672 : vector<2x32xf32>
    %728 = arith.mulf %712, %720 : vector<2x32xf32>
    %729 = arith.addf %727, %728 : vector<2x32xf32>
    %730 = math.tanh %729 : vector<2x32xf32>
    %731 = arith.mulf %726, %730 : vector<2x32xf32>
    %732 = tpu.concatenate %731, %703 in 1 : vector<2x32xf32>, vector<2x32xf32> -> vector<2x64xf32>
    %cst_121 = arith.constant dense<0.000000e+00> : vector<2x128xf32>
    %733 = tpu.matmul %732, %71, %cst_121 {dimension_numbers = #tpu.dot_dimension_numbers<[1], [0], [0], [1], [0, 0, 1, 1], [], []>} : vector<2x64xf32>, vector<64x128xf32>, vector<2x128xf32> -> vector<2x128xf32>
    %734 = vector.broadcast %72 : vector<1x128xf32> to vector<2x128xf32>
    %735 = arith.addf %733, %734 : vector<2x128xf32>
    %736 = vector.extract_strided_slice %735 {offsets = [0, 0], sizes = [2, 32], strides = [1, 1]} : vector<2x128xf32> to vector<2x32xf32>
    %737 = arith.negf %736 : vector<2x32xf32>
    %738 = math.exp %737 : vector<2x32xf32>
    %cst_122 = arith.constant 1.000000e+00 : f32
    %739 = vector.broadcast %cst_122 : f32 to vector<2x32xf32>
    %740 = arith.addf %739, %738 : vector<2x32xf32>
    %741 = arith.divf %739, %740 : vector<2x32xf32>
    %742 = vector.extract_strided_slice %735 {offsets = [0, 32], sizes = [2, 32], strides = [1, 1]} : vector<2x128xf32> to vector<2x32xf32>
    %743 = arith.negf %742 : vector<2x32xf32>
    %744 = math.exp %743 : vector<2x32xf32>
    %cst_123 = arith.constant 1.000000e+00 : f32
    %745 = vector.broadcast %cst_123 : f32 to vector<2x32xf32>
    %746 = arith.addf %745, %744 : vector<2x32xf32>
    %747 = arith.divf %745, %746 : vector<2x32xf32>
    %748 = vector.extract_strided_slice %735 {offsets = [0, 64], sizes = [2, 32], strides = [1, 1]} : vector<2x128xf32> to vector<2x32xf32>
    %749 = math.tanh %748 : vector<2x32xf32>
    %750 = vector.extract_strided_slice %735 {offsets = [0, 96], sizes = [2, 32], strides = [1, 1]} : vector<2x128xf32> to vector<2x32xf32>
    %751 = arith.negf %750 : vector<2x32xf32>
    %752 = math.exp %751 : vector<2x32xf32>
    %cst_124 = arith.constant 1.000000e+00 : f32
    %753 = vector.broadcast %cst_124 : f32 to vector<2x32xf32>
    %754 = arith.addf %753, %752 : vector<2x32xf32>
    %755 = arith.divf %753, %754 : vector<2x32xf32>
    %756 = arith.mulf %747, %701 : vector<2x32xf32>
    %757 = arith.mulf %741, %749 : vector<2x32xf32>
    %758 = arith.addf %756, %757 : vector<2x32xf32>
    %759 = math.tanh %758 : vector<2x32xf32>
    %760 = arith.mulf %755, %759 : vector<2x32xf32>
    %761 = vector.extract_strided_slice %69 {offsets = [24, 0], sizes = [2, 128], strides = [1, 1]} : vector<32x128xf32> to vector<2x128xf32>
    %cst_125 = arith.constant dense<0.000000e+00> : vector<2x128xf32>
    %762 = tpu.matmul %731, %70, %cst_125 {dimension_numbers = #tpu.dot_dimension_numbers<[1], [0], [0], [1], [0, 0, 1, 1], [], []>} : vector<2x32xf32>, vector<32x128xf32>, vector<2x128xf32> -> vector<2x128xf32>
    %763 = arith.addf %761, %762 : vector<2x128xf32>
    %764 = vector.extract_strided_slice %763 {offsets = [0, 0], sizes = [2, 32], strides = [1, 1]} : vector<2x128xf32> to vector<2x32xf32>
    %765 = arith.negf %764 : vector<2x32xf32>
    %766 = math.exp %765 : vector<2x32xf32>
    %cst_126 = arith.constant 1.000000e+00 : f32
    %767 = vector.broadcast %cst_126 : f32 to vector<2x32xf32>
    %768 = arith.addf %767, %766 : vector<2x32xf32>
    %769 = arith.divf %767, %768 : vector<2x32xf32>
    %770 = vector.extract_strided_slice %763 {offsets = [0, 32], sizes = [2, 32], strides = [1, 1]} : vector<2x128xf32> to vector<2x32xf32>
    %771 = arith.negf %770 : vector<2x32xf32>
    %772 = math.exp %771 : vector<2x32xf32>
    %cst_127 = arith.constant 1.000000e+00 : f32
    %773 = vector.broadcast %cst_127 : f32 to vector<2x32xf32>
    %774 = arith.addf %773, %772 : vector<2x32xf32>
    %775 = arith.divf %773, %774 : vector<2x32xf32>
    %776 = vector.extract_strided_slice %763 {offsets = [0, 64], sizes = [2, 32], strides = [1, 1]} : vector<2x128xf32> to vector<2x32xf32>
    %777 = math.tanh %776 : vector<2x32xf32>
    %778 = vector.extract_strided_slice %763 {offsets = [0, 96], sizes = [2, 32], strides = [1, 1]} : vector<2x128xf32> to vector<2x32xf32>
    %779 = arith.negf %778 : vector<2x32xf32>
    %780 = math.exp %779 : vector<2x32xf32>
    %cst_128 = arith.constant 1.000000e+00 : f32
    %781 = vector.broadcast %cst_128 : f32 to vector<2x32xf32>
    %782 = arith.addf %781, %780 : vector<2x32xf32>
    %783 = arith.divf %781, %782 : vector<2x32xf32>
    %784 = arith.mulf %775, %729 : vector<2x32xf32>
    %785 = arith.mulf %769, %777 : vector<2x32xf32>
    %786 = arith.addf %784, %785 : vector<2x32xf32>
    %787 = math.tanh %786 : vector<2x32xf32>
    %788 = arith.mulf %783, %787 : vector<2x32xf32>
    %789 = tpu.concatenate %788, %760 in 1 : vector<2x32xf32>, vector<2x32xf32> -> vector<2x64xf32>
    %cst_129 = arith.constant dense<0.000000e+00> : vector<2x128xf32>
    %790 = tpu.matmul %789, %71, %cst_129 {dimension_numbers = #tpu.dot_dimension_numbers<[1], [0], [0], [1], [0, 0, 1, 1], [], []>} : vector<2x64xf32>, vector<64x128xf32>, vector<2x128xf32> -> vector<2x128xf32>
    %791 = vector.broadcast %72 : vector<1x128xf32> to vector<2x128xf32>
    %792 = arith.addf %790, %791 : vector<2x128xf32>
    %793 = vector.extract_strided_slice %792 {offsets = [0, 0], sizes = [2, 32], strides = [1, 1]} : vector<2x128xf32> to vector<2x32xf32>
    %794 = arith.negf %793 : vector<2x32xf32>
    %795 = math.exp %794 : vector<2x32xf32>
    %cst_130 = arith.constant 1.000000e+00 : f32
    %796 = vector.broadcast %cst_130 : f32 to vector<2x32xf32>
    %797 = arith.addf %796, %795 : vector<2x32xf32>
    %798 = arith.divf %796, %797 : vector<2x32xf32>
    %799 = vector.extract_strided_slice %792 {offsets = [0, 32], sizes = [2, 32], strides = [1, 1]} : vector<2x128xf32> to vector<2x32xf32>
    %800 = arith.negf %799 : vector<2x32xf32>
    %801 = math.exp %800 : vector<2x32xf32>
    %cst_131 = arith.constant 1.000000e+00 : f32
    %802 = vector.broadcast %cst_131 : f32 to vector<2x32xf32>
    %803 = arith.addf %802, %801 : vector<2x32xf32>
    %804 = arith.divf %802, %803 : vector<2x32xf32>
    %805 = vector.extract_strided_slice %792 {offsets = [0, 64], sizes = [2, 32], strides = [1, 1]} : vector<2x128xf32> to vector<2x32xf32>
    %806 = math.tanh %805 : vector<2x32xf32>
    %807 = vector.extract_strided_slice %792 {offsets = [0, 96], sizes = [2, 32], strides = [1, 1]} : vector<2x128xf32> to vector<2x32xf32>
    %808 = arith.negf %807 : vector<2x32xf32>
    %809 = math.exp %808 : vector<2x32xf32>
    %cst_132 = arith.constant 1.000000e+00 : f32
    %810 = vector.broadcast %cst_132 : f32 to vector<2x32xf32>
    %811 = arith.addf %810, %809 : vector<2x32xf32>
    %812 = arith.divf %810, %811 : vector<2x32xf32>
    %813 = arith.mulf %804, %758 : vector<2x32xf32>
    %814 = arith.mulf %798, %806 : vector<2x32xf32>
    %815 = arith.addf %813, %814 : vector<2x32xf32>
    %816 = math.tanh %815 : vector<2x32xf32>
    %817 = arith.mulf %812, %816 : vector<2x32xf32>
    %818 = vector.extract_strided_slice %69 {offsets = [26, 0], sizes = [2, 128], strides = [1, 1]} : vector<32x128xf32> to vector<2x128xf32>
    %cst_133 = arith.constant dense<0.000000e+00> : vector<2x128xf32>
    %819 = tpu.matmul %788, %70, %cst_133 {dimension_numbers = #tpu.dot_dimension_numbers<[1], [0], [0], [1], [0, 0, 1, 1], [], []>} : vector<2x32xf32>, vector<32x128xf32>, vector<2x128xf32> -> vector<2x128xf32>
    %820 = arith.addf %818, %819 : vector<2x128xf32>
    %821 = vector.extract_strided_slice %820 {offsets = [0, 0], sizes = [2, 32], strides = [1, 1]} : vector<2x128xf32> to vector<2x32xf32>
    %822 = arith.negf %821 : vector<2x32xf32>
    %823 = math.exp %822 : vector<2x32xf32>
    %cst_134 = arith.constant 1.000000e+00 : f32
    %824 = vector.broadcast %cst_134 : f32 to vector<2x32xf32>
    %825 = arith.addf %824, %823 : vector<2x32xf32>
    %826 = arith.divf %824, %825 : vector<2x32xf32>
    %827 = vector.extract_strided_slice %820 {offsets = [0, 32], sizes = [2, 32], strides = [1, 1]} : vector<2x128xf32> to vector<2x32xf32>
    %828 = arith.negf %827 : vector<2x32xf32>
    %829 = math.exp %828 : vector<2x32xf32>
    %cst_135 = arith.constant 1.000000e+00 : f32
    %830 = vector.broadcast %cst_135 : f32 to vector<2x32xf32>
    %831 = arith.addf %830, %829 : vector<2x32xf32>
    %832 = arith.divf %830, %831 : vector<2x32xf32>
    %833 = vector.extract_strided_slice %820 {offsets = [0, 64], sizes = [2, 32], strides = [1, 1]} : vector<2x128xf32> to vector<2x32xf32>
    %834 = math.tanh %833 : vector<2x32xf32>
    %835 = vector.extract_strided_slice %820 {offsets = [0, 96], sizes = [2, 32], strides = [1, 1]} : vector<2x128xf32> to vector<2x32xf32>
    %836 = arith.negf %835 : vector<2x32xf32>
    %837 = math.exp %836 : vector<2x32xf32>
    %cst_136 = arith.constant 1.000000e+00 : f32
    %838 = vector.broadcast %cst_136 : f32 to vector<2x32xf32>
    %839 = arith.addf %838, %837 : vector<2x32xf32>
    %840 = arith.divf %838, %839 : vector<2x32xf32>
    %841 = arith.mulf %832, %786 : vector<2x32xf32>
    %842 = arith.mulf %826, %834 : vector<2x32xf32>
    %843 = arith.addf %841, %842 : vector<2x32xf32>
    %844 = math.tanh %843 : vector<2x32xf32>
    %845 = arith.mulf %840, %844 : vector<2x32xf32>
    %846 = tpu.concatenate %845, %817 in 1 : vector<2x32xf32>, vector<2x32xf32> -> vector<2x64xf32>
    %cst_137 = arith.constant dense<0.000000e+00> : vector<2x128xf32>
    %847 = tpu.matmul %846, %71, %cst_137 {dimension_numbers = #tpu.dot_dimension_numbers<[1], [0], [0], [1], [0, 0, 1, 1], [], []>} : vector<2x64xf32>, vector<64x128xf32>, vector<2x128xf32> -> vector<2x128xf32>
    %848 = vector.broadcast %72 : vector<1x128xf32> to vector<2x128xf32>
    %849 = arith.addf %847, %848 : vector<2x128xf32>
    %850 = vector.extract_strided_slice %849 {offsets = [0, 0], sizes = [2, 32], strides = [1, 1]} : vector<2x128xf32> to vector<2x32xf32>
    %851 = arith.negf %850 : vector<2x32xf32>
    %852 = math.exp %851 : vector<2x32xf32>
    %cst_138 = arith.constant 1.000000e+00 : f32
    %853 = vector.broadcast %cst_138 : f32 to vector<2x32xf32>
    %854 = arith.addf %853, %852 : vector<2x32xf32>
    %855 = arith.divf %853, %854 : vector<2x32xf32>
    %856 = vector.extract_strided_slice %849 {offsets = [0, 32], sizes = [2, 32], strides = [1, 1]} : vector<2x128xf32> to vector<2x32xf32>
    %857 = arith.negf %856 : vector<2x32xf32>
    %858 = math.exp %857 : vector<2x32xf32>
    %cst_139 = arith.constant 1.000000e+00 : f32
    %859 = vector.broadcast %cst_139 : f32 to vector<2x32xf32>
    %860 = arith.addf %859, %858 : vector<2x32xf32>
    %861 = arith.divf %859, %860 : vector<2x32xf32>
    %862 = vector.extract_strided_slice %849 {offsets = [0, 64], sizes = [2, 32], strides = [1, 1]} : vector<2x128xf32> to vector<2x32xf32>
    %863 = math.tanh %862 : vector<2x32xf32>
    %864 = vector.extract_strided_slice %849 {offsets = [0, 96], sizes = [2, 32], strides = [1, 1]} : vector<2x128xf32> to vector<2x32xf32>
    %865 = arith.negf %864 : vector<2x32xf32>
    %866 = math.exp %865 : vector<2x32xf32>
    %cst_140 = arith.constant 1.000000e+00 : f32
    %867 = vector.broadcast %cst_140 : f32 to vector<2x32xf32>
    %868 = arith.addf %867, %866 : vector<2x32xf32>
    %869 = arith.divf %867, %868 : vector<2x32xf32>
    %870 = arith.mulf %861, %815 : vector<2x32xf32>
    %871 = arith.mulf %855, %863 : vector<2x32xf32>
    %872 = arith.addf %870, %871 : vector<2x32xf32>
    %873 = math.tanh %872 : vector<2x32xf32>
    %874 = arith.mulf %869, %873 : vector<2x32xf32>
    %875 = vector.extract_strided_slice %69 {offsets = [28, 0], sizes = [2, 128], strides = [1, 1]} : vector<32x128xf32> to vector<2x128xf32>
    %cst_141 = arith.constant dense<0.000000e+00> : vector<2x128xf32>
    %876 = tpu.matmul %845, %70, %cst_141 {dimension_numbers = #tpu.dot_dimension_numbers<[1], [0], [0], [1], [0, 0, 1, 1], [], []>} : vector<2x32xf32>, vector<32x128xf32>, vector<2x128xf32> -> vector<2x128xf32>
    %877 = arith.addf %875, %876 : vector<2x128xf32>
    %878 = vector.extract_strided_slice %877 {offsets = [0, 0], sizes = [2, 32], strides = [1, 1]} : vector<2x128xf32> to vector<2x32xf32>
    %879 = arith.negf %878 : vector<2x32xf32>
    %880 = math.exp %879 : vector<2x32xf32>
    %cst_142 = arith.constant 1.000000e+00 : f32
    %881 = vector.broadcast %cst_142 : f32 to vector<2x32xf32>
    %882 = arith.addf %881, %880 : vector<2x32xf32>
    %883 = arith.divf %881, %882 : vector<2x32xf32>
    %884 = vector.extract_strided_slice %877 {offsets = [0, 32], sizes = [2, 32], strides = [1, 1]} : vector<2x128xf32> to vector<2x32xf32>
    %885 = arith.negf %884 : vector<2x32xf32>
    %886 = math.exp %885 : vector<2x32xf32>
    %cst_143 = arith.constant 1.000000e+00 : f32
    %887 = vector.broadcast %cst_143 : f32 to vector<2x32xf32>
    %888 = arith.addf %887, %886 : vector<2x32xf32>
    %889 = arith.divf %887, %888 : vector<2x32xf32>
    %890 = vector.extract_strided_slice %877 {offsets = [0, 64], sizes = [2, 32], strides = [1, 1]} : vector<2x128xf32> to vector<2x32xf32>
    %891 = math.tanh %890 : vector<2x32xf32>
    %892 = vector.extract_strided_slice %877 {offsets = [0, 96], sizes = [2, 32], strides = [1, 1]} : vector<2x128xf32> to vector<2x32xf32>
    %893 = arith.negf %892 : vector<2x32xf32>
    %894 = math.exp %893 : vector<2x32xf32>
    %cst_144 = arith.constant 1.000000e+00 : f32
    %895 = vector.broadcast %cst_144 : f32 to vector<2x32xf32>
    %896 = arith.addf %895, %894 : vector<2x32xf32>
    %897 = arith.divf %895, %896 : vector<2x32xf32>
    %898 = arith.mulf %889, %843 : vector<2x32xf32>
    %899 = arith.mulf %883, %891 : vector<2x32xf32>
    %900 = arith.addf %898, %899 : vector<2x32xf32>
    %901 = math.tanh %900 : vector<2x32xf32>
    %902 = arith.mulf %897, %901 : vector<2x32xf32>
    %903 = tpu.concatenate %902, %874 in 1 : vector<2x32xf32>, vector<2x32xf32> -> vector<2x64xf32>
    %cst_145 = arith.constant dense<0.000000e+00> : vector<2x128xf32>
    %904 = tpu.matmul %903, %71, %cst_145 {dimension_numbers = #tpu.dot_dimension_numbers<[1], [0], [0], [1], [0, 0, 1, 1], [], []>} : vector<2x64xf32>, vector<64x128xf32>, vector<2x128xf32> -> vector<2x128xf32>
    %905 = vector.broadcast %72 : vector<1x128xf32> to vector<2x128xf32>
    %906 = arith.addf %904, %905 : vector<2x128xf32>
    %907 = vector.extract_strided_slice %906 {offsets = [0, 0], sizes = [2, 32], strides = [1, 1]} : vector<2x128xf32> to vector<2x32xf32>
    %908 = arith.negf %907 : vector<2x32xf32>
    %909 = math.exp %908 : vector<2x32xf32>
    %cst_146 = arith.constant 1.000000e+00 : f32
    %910 = vector.broadcast %cst_146 : f32 to vector<2x32xf32>
    %911 = arith.addf %910, %909 : vector<2x32xf32>
    %912 = arith.divf %910, %911 : vector<2x32xf32>
    %913 = vector.extract_strided_slice %906 {offsets = [0, 32], sizes = [2, 32], strides = [1, 1]} : vector<2x128xf32> to vector<2x32xf32>
    %914 = arith.negf %913 : vector<2x32xf32>
    %915 = math.exp %914 : vector<2x32xf32>
    %cst_147 = arith.constant 1.000000e+00 : f32
    %916 = vector.broadcast %cst_147 : f32 to vector<2x32xf32>
    %917 = arith.addf %916, %915 : vector<2x32xf32>
    %918 = arith.divf %916, %917 : vector<2x32xf32>
    %919 = vector.extract_strided_slice %906 {offsets = [0, 64], sizes = [2, 32], strides = [1, 1]} : vector<2x128xf32> to vector<2x32xf32>
    %920 = math.tanh %919 : vector<2x32xf32>
    %921 = vector.extract_strided_slice %906 {offsets = [0, 96], sizes = [2, 32], strides = [1, 1]} : vector<2x128xf32> to vector<2x32xf32>
    %922 = arith.negf %921 : vector<2x32xf32>
    %923 = math.exp %922 : vector<2x32xf32>
    %cst_148 = arith.constant 1.000000e+00 : f32
    %924 = vector.broadcast %cst_148 : f32 to vector<2x32xf32>
    %925 = arith.addf %924, %923 : vector<2x32xf32>
    %926 = arith.divf %924, %925 : vector<2x32xf32>
    %927 = arith.mulf %918, %872 : vector<2x32xf32>
    %928 = arith.mulf %912, %920 : vector<2x32xf32>
    %929 = arith.addf %927, %928 : vector<2x32xf32>
    %930 = math.tanh %929 : vector<2x32xf32>
    %931 = arith.mulf %926, %930 : vector<2x32xf32>
    %932 = vector.extract_strided_slice %69 {offsets = [30, 0], sizes = [2, 128], strides = [1, 1]} : vector<32x128xf32> to vector<2x128xf32>
    %cst_149 = arith.constant dense<0.000000e+00> : vector<2x128xf32>
    %933 = tpu.matmul %902, %70, %cst_149 {dimension_numbers = #tpu.dot_dimension_numbers<[1], [0], [0], [1], [0, 0, 1, 1], [], []>} : vector<2x32xf32>, vector<32x128xf32>, vector<2x128xf32> -> vector<2x128xf32>
    %934 = arith.addf %932, %933 : vector<2x128xf32>
    %935 = vector.extract_strided_slice %934 {offsets = [0, 0], sizes = [2, 32], strides = [1, 1]} : vector<2x128xf32> to vector<2x32xf32>
    %936 = arith.negf %935 : vector<2x32xf32>
    %937 = math.exp %936 : vector<2x32xf32>
    %cst_150 = arith.constant 1.000000e+00 : f32
    %938 = vector.broadcast %cst_150 : f32 to vector<2x32xf32>
    %939 = arith.addf %938, %937 : vector<2x32xf32>
    %940 = arith.divf %938, %939 : vector<2x32xf32>
    %941 = vector.extract_strided_slice %934 {offsets = [0, 32], sizes = [2, 32], strides = [1, 1]} : vector<2x128xf32> to vector<2x32xf32>
    %942 = arith.negf %941 : vector<2x32xf32>
    %943 = math.exp %942 : vector<2x32xf32>
    %cst_151 = arith.constant 1.000000e+00 : f32
    %944 = vector.broadcast %cst_151 : f32 to vector<2x32xf32>
    %945 = arith.addf %944, %943 : vector<2x32xf32>
    %946 = arith.divf %944, %945 : vector<2x32xf32>
    %947 = vector.extract_strided_slice %934 {offsets = [0, 64], sizes = [2, 32], strides = [1, 1]} : vector<2x128xf32> to vector<2x32xf32>
    %948 = math.tanh %947 : vector<2x32xf32>
    %949 = vector.extract_strided_slice %934 {offsets = [0, 96], sizes = [2, 32], strides = [1, 1]} : vector<2x128xf32> to vector<2x32xf32>
    %950 = arith.negf %949 : vector<2x32xf32>
    %951 = math.exp %950 : vector<2x32xf32>
    %cst_152 = arith.constant 1.000000e+00 : f32
    %952 = vector.broadcast %cst_152 : f32 to vector<2x32xf32>
    %953 = arith.addf %952, %951 : vector<2x32xf32>
    %954 = arith.divf %952, %953 : vector<2x32xf32>
    %955 = arith.mulf %946, %900 : vector<2x32xf32>
    %956 = arith.mulf %940, %948 : vector<2x32xf32>
    %957 = arith.addf %955, %956 : vector<2x32xf32>
    %958 = math.tanh %957 : vector<2x32xf32>
    %959 = arith.mulf %954, %958 : vector<2x32xf32>
    %960 = tpu.concatenate %959, %931 in 1 : vector<2x32xf32>, vector<2x32xf32> -> vector<2x64xf32>
    %cst_153 = arith.constant dense<0.000000e+00> : vector<2x128xf32>
    %961 = tpu.matmul %960, %71, %cst_153 {dimension_numbers = #tpu.dot_dimension_numbers<[1], [0], [0], [1], [0, 0, 1, 1], [], []>} : vector<2x64xf32>, vector<64x128xf32>, vector<2x128xf32> -> vector<2x128xf32>
    %962 = vector.broadcast %72 : vector<1x128xf32> to vector<2x128xf32>
    %963 = arith.addf %961, %962 : vector<2x128xf32>
    %964 = vector.extract_strided_slice %963 {offsets = [0, 0], sizes = [2, 32], strides = [1, 1]} : vector<2x128xf32> to vector<2x32xf32>
    %965 = arith.negf %964 : vector<2x32xf32>
    %966 = math.exp %965 : vector<2x32xf32>
    %cst_154 = arith.constant 1.000000e+00 : f32
    %967 = vector.broadcast %cst_154 : f32 to vector<2x32xf32>
    %968 = arith.addf %967, %966 : vector<2x32xf32>
    %969 = arith.divf %967, %968 : vector<2x32xf32>
    %970 = vector.extract_strided_slice %963 {offsets = [0, 32], sizes = [2, 32], strides = [1, 1]} : vector<2x128xf32> to vector<2x32xf32>
    %971 = arith.negf %970 : vector<2x32xf32>
    %972 = math.exp %971 : vector<2x32xf32>
    %cst_155 = arith.constant 1.000000e+00 : f32
    %973 = vector.broadcast %cst_155 : f32 to vector<2x32xf32>
    %974 = arith.addf %973, %972 : vector<2x32xf32>
    %975 = arith.divf %973, %974 : vector<2x32xf32>
    %976 = vector.extract_strided_slice %963 {offsets = [0, 64], sizes = [2, 32], strides = [1, 1]} : vector<2x128xf32> to vector<2x32xf32>
    %977 = math.tanh %976 : vector<2x32xf32>
    %978 = vector.extract_strided_slice %963 {offsets = [0, 96], sizes = [2, 32], strides = [1, 1]} : vector<2x128xf32> to vector<2x32xf32>
    %979 = arith.negf %978 : vector<2x32xf32>
    %980 = math.exp %979 : vector<2x32xf32>
    %cst_156 = arith.constant 1.000000e+00 : f32
    %981 = vector.broadcast %cst_156 : f32 to vector<2x32xf32>
    %982 = arith.addf %981, %980 : vector<2x32xf32>
    %983 = arith.divf %981, %982 : vector<2x32xf32>
    %984 = arith.mulf %975, %929 : vector<2x32xf32>
    %985 = arith.mulf %969, %977 : vector<2x32xf32>
    %986 = arith.addf %984, %985 : vector<2x32xf32>
    %987 = math.tanh %986 : vector<2x32xf32>
    %988 = arith.mulf %983, %987 : vector<2x32xf32>
    %989 = tpu.concatenate %959, %988 in 1 : vector<2x32xf32>, vector<2x32xf32> -> vector<2x64xf32>
    %c0_157 = arith.constant 0 : index
    %c0_158 = arith.constant 0 : index
    %990 = vector.load %arg12[%c0_157, %c0_158] : memref<64x128xf32, #tpu.memory_space<vmem>>, vector<64x128xf32>
    %cst_159 = arith.constant dense<0.000000e+00> : vector<2x128xf32>
    %991 = tpu.matmul %989, %990, %cst_159 {dimension_numbers = #tpu.dot_dimension_numbers<[1], [0], [0], [1], [0, 0, 1, 1], [], []>} : vector<2x64xf32>, vector<64x128xf32>, vector<2x128xf32> -> vector<2x128xf32>
    %c0_160 = arith.constant 0 : index
    %c0_161 = arith.constant 0 : index
    %992 = vector.load %arg13[%c0_160, %c0_161] : memref<1x128xf32, #tpu.memory_space<vmem>>, vector<1x128xf32>
    %993 = vector.broadcast %992 : vector<1x128xf32> to vector<2x128xf32>
    %994 = arith.addf %991, %993 : vector<2x128xf32>
    %c0_162 = arith.constant 0 : index
    %c0_163 = arith.constant 0 : index
    %995 = vector.load %arg14[%c0_162, %c0_163] : memref<2x128xf32, #tpu.memory_space<vmem>>, vector<2x128xf32>
    tpu.vector_store %arg14[%c0_162, %c0_163], %994 {strides = array<i32>} : memref<2x128xf32, #tpu.memory_space<vmem>>, vector<2x128xf32>,
    return
  }
}

</mosaic_0001>

<llo_original>
// kernel: crnn_forward.1
$region0: #{crnn_forward.1}
  #allocation0 [shape = 'u32[]', space=smem, size = 0x4, offset = 0x4, fixed_abs, tag = 'smem constant byte address 0x4 - core index']
  #allocation1 [shape = 'u32[72,128]{1,0:T(1,128)}', space=vmem, size = 0x9000, scoped, tag = 'internal scratch']
  %s0 = inlined_call_operand.vmem [shape: f32[32,4], index: 0, kind: input, shape index: {}]
  %s1 = inlined_call_operand.vmem [shape: f32[1,4], index: 1, kind: input, shape index: {}]
  %s2 = inlined_call_operand.vmem [shape: f32[1,4], index: 2, kind: input, shape index: {}]
  %s3 = inlined_call_operand.vmem [shape: f32[4,16], index: 3, kind: input, shape index: {}]
  %s4 = inlined_call_operand.vmem [shape: f32[4,16], index: 4, kind: input, shape index: {}]
  %s5 = inlined_call_operand.vmem [shape: f32[1,64], index: 5, kind: input, shape index: {}]
  %s6 = inlined_call_operand.vmem [shape: f32[1,64], index: 6, kind: input, shape index: {}]
  %s7 = inlined_call_operand.hbm [shape: f32[64,128], index: 7, kind: input, shape index: {}]
  %s8 = inlined_call_operand.vmem [shape: f32[1,128], index: 8, kind: input, shape index: {}]
  %s9 = inlined_call_operand.vmem [shape: f32[32,128], index: 9, kind: input, shape index: {}]
  %s10 = inlined_call_operand.hbm [shape: f32[64,128], index: 10, kind: input, shape index: {}]
  %s11 = inlined_call_operand.vmem [shape: f32[1,128], index: 11, kind: input, shape index: {}]
  %s12 = inlined_call_operand.hbm [shape: f32[64,128], index: 12, kind: input, shape index: {}]
  %s13 = inlined_call_operand.vmem [shape: f32[1,128], index: 13, kind: input, shape index: {}]
  %s14 = inlined_call_operand.vmem [shape: f32[2,128], index: 14, kind: output, shape index: {}]
  %s15 = sld [smem:[#allocation0]]
  $region78: #{crnn_forward.1} parent=0
    _
  %s17 = ssub.s32 1, %s15
  %s18 = scalar_select 0, %s17, %s15
  $region1: #{crnn_forward.1} parent=0
    #allocation2 [shape = 'u8[32768]{0}', space=vmem, size = 0x8000, scoped, tag = 'input window, operand 7, single buffered']
    #allocation3 [shape = 's32[1]{0}', space=sflag, size = 0x4, scoped, tag = 'scoped memory for crnn_forward.1']
    #allocation4 [shape = 'u8[32768]{0}', space=vmem, size = 0x8000, scoped, tag = 'input window, operand 10, single buffered']
    #allocation5 [shape = 's32[1]{0}', space=sflag, size = 0x4, scoped, tag = 'scoped memory for crnn_forward.1']
    #allocation6 [shape = 'u8[32768]{0}', space=vmem, size = 0x8000, scoped, tag = 'input window, operand 12, single buffered']
    %19 = vsyncpa [#allocation3], 0
    %20 = vsyncpa [#allocation5], 0
    // Predicated region
    $region2: #{crnn_forward.1} parent=1 // pred_check
      _
    $region3: #{crnn_forward.1} parent=1 // pred_check_branch
      %22 = sbr.rel (0) target = $region5
    $region4: #{crnn_forward.1} parent=1 // pred_region
      _
    $region5: #{crnn_forward.1} parent=1 // pred_fallthru
      _
    // Predicated region
    $region6: #{crnn_forward.1} parent=1 // pred_check
      _
    $region7: #{crnn_forward.1} parent=1 // pred_check_branch
      %24 = sbr.rel (0) target = $region9
    $region8: #{crnn_forward.1} parent=1 // pred_region
      _
    $region9: #{crnn_forward.1} parent=1 // pred_fallthru
      _
    // Predicated region
    $region10: #{crnn_forward.1} parent=1 // pred_check
      _
    $region11: #{crnn_forward.1} parent=1 // pred_check_branch
      %26 = sbr.rel (0) target = $region13
    $region12: #{crnn_forward.1} parent=1 // pred_region
      _
    $region13: #{crnn_forward.1} parent=1 // pred_fallthru
      _
    // Predicated region
    $region14: #{crnn_forward.1} parent=1 // pred_check
      _
    $region15: #{crnn_forward.1} parent=1 // pred_check_branch
      %28 = sbr.rel (0) target = $region17
    $region16: #{crnn_forward.1} parent=1 // pred_region
      _
    $region17: #{crnn_forward.1} parent=1 // pred_fallthru
      _
    // Predicated region
    $region18: #{crnn_forward.1} parent=1 // pred_check
      _
    $region19: #{crnn_forward.1} parent=1 // pred_check_branch
      %30 = sbr.rel (0) target = $region21
    $region20: #{crnn_forward.1} parent=1 // pred_region
      _
    $region21: #{crnn_forward.1} parent=1 // pred_fallthru
      _
    // Predicated region
    $region22: #{crnn_forward.1} parent=1 // pred_check
      _
    $region23: #{crnn_forward.1} parent=1 // pred_check_branch
      %32 = sbr.rel (0) target = $region25
    $region24: #{crnn_forward.1} parent=1 // pred_region
      _
    $region25: #{crnn_forward.1} parent=1 // pred_fallthru
      _
    // Predicated region
    $region26: #{crnn_forward.1} parent=1 // pred_check
      _
    $region27: #{crnn_forward.1} parent=1 // pred_check_branch
      %34 = sbr.rel (0) target = $region29
    $region28: #{crnn_forward.1} parent=1 // pred_region
      _
    $region29: #{crnn_forward.1} parent=1 // pred_fallthru
      _
    // Predicated region
    $region30: #{crnn_forward.1} parent=1 // pred_check
      _
    $region31: #{crnn_forward.1} parent=1 // pred_check_branch
      %36 = sbr.rel (0) target = $region33
    $region32: #{crnn_forward.1} parent=1 // pred_region
      %38 = vsyncadd [#allocation3], 0
      %s39 = sshll.u32 %s7, 4
      %s40 = int_to_ptr.hbm [resolvable:$true] %s39
      %s41 = sshll.u32 [#allocation2], 4
      %s42 = int_to_ptr.vmem [resolvable:$true] %s41
      %47 = dma.hbm_to_vmem [thread:$0]  %s40, 1024, %s42, [#allocation3], 128, 128, 8
    $region33: #{crnn_forward.1} parent=1 // pred_fallthru
      _
    // Predicated region
    $region34: #{crnn_forward.1} parent=1 // pred_check
      _
    $region35: #{crnn_forward.1} parent=1 // pred_check_branch
      %49 = sbr.rel (0) target = $region37
    $region36: #{crnn_forward.1} parent=1 // pred_region
      _
    $region37: #{crnn_forward.1} parent=1 // pred_fallthru
      _
    // Predicated region
    $region38: #{crnn_forward.1} parent=1 // pred_check
      _
    $region39: #{crnn_forward.1} parent=1 // pred_check_branch
      %51 = sbr.rel (0) target = $region41
    $region40: #{crnn_forward.1} parent=1 // pred_region
      _
    $region41: #{crnn_forward.1} parent=1 // pred_fallthru
      _
    // Predicated region
    $region42: #{crnn_forward.1} parent=1 // pred_check
      _
    $region43: #{crnn_forward.1} parent=1 // pred_check_branch
      %53 = sbr.rel (0) target = $region45
    $region44: #{crnn_forward.1} parent=1 // pred_region
      %55 = vsyncadd [#allocation5], 0
      %s56 = sshll.u32 %s10, 4
      %s57 = int_to_ptr.hbm [resolvable:$true] %s56
      %s58 = sshll.u32 [#allocation4], 4
      %s59 = int_to_ptr.vmem [resolvable:$true] %s58
      %64 = dma.hbm_to_vmem [thread:$0]  %s57, 1024, %s59, [#allocation5], 128, 128, 8
    $region45: #{crnn_forward.1} parent=1 // pred_fallthru
      _
    // Predicated region
    $region46: #{crnn_forward.1} parent=1 // pred_check
      _
    $region47: #{crnn_forward.1} parent=1 // pred_check_branch
      %66 = sbr.rel (0) target = $region49
    $region48: #{crnn_forward.1} parent=1 // pred_region
      _
    $region49: #{crnn_forward.1} parent=1 // pred_fallthru
      _
    // Predicated region
    $region50: #{crnn_forward.1} parent=1 // pred_check
      _
    $region51: #{crnn_forward.1} parent=1 // pred_check_branch
      %68 = sbr.rel (0) target = $region53
    $region52: #{crnn_forward.1} parent=1 // pred_region
      %70 = vsyncadd [#allocation5], 0
      %s71 = sshll.u32 %s12, 4
      %s72 = int_to_ptr.hbm [resolvable:$true] %s71
      %s73 = sshll.u32 [#allocation6], 4
      %s74 = int_to_ptr.vmem [resolvable:$true] %s73
      %79 = dma.hbm_to_vmem [thread:$0]  %s72, 1024, %s74, [#allocation5], 128, 128, 8
    $region53: #{crnn_forward.1} parent=1 // pred_fallthru
      _
    // Predicated region
    $region54: #{crnn_forward.1} parent=1 // pred_check
      _
    $region55: #{crnn_forward.1} parent=1 // pred_check_branch
      %81 = sbr.rel (0) target = $region57
    $region56: #{crnn_forward.1} parent=1 // pred_region
      _
    $region57: #{crnn_forward.1} parent=1 // pred_fallthru
      _
    // Predicated region
    $region58: #{crnn_forward.1} parent=1 // pred_check
      _
    $region59: #{crnn_forward.1} parent=1 // pred_check_branch
      %83 = sbr.rel (0) target = $region61
    $region60: #{crnn_forward.1} parent=1 // pred_region
      %85 = dma.done [#allocation3], 1024
    $region61: #{crnn_forward.1} parent=1 // pred_fallthru
      _
    // Predicated region
    $region62: #{crnn_forward.1} parent=1 // pred_check
      _
    $region63: #{crnn_forward.1} parent=1 // pred_check_branch
      %87 = sbr.rel (0) target = $region65
    $region64: #{crnn_forward.1} parent=1 // pred_region
      %89 = dma.done [#allocation5], 1024
    $region65: #{crnn_forward.1} parent=1 // pred_fallthru
      _
    // Predicated region
    $region66: #{crnn_forward.1} parent=1 // pred_check
      _
    $region67: #{crnn_forward.1} parent=1 // pred_check_branch
      %91 = sbr.rel (0) target = $region69
    $region68: #{crnn_forward.1} parent=1 // pred_region
      %93 = dma.done [#allocation5], 1024
    $region69: #{crnn_forward.1} parent=1 // pred_fallthru
      _
    %v94 = vld [vmem:[%s0] sm:$0xff]
    %v95 = vld [vmem:[%s0 + $0x8] sm:$0xff]
    %v96 = vld [vmem:[%s0 + $0x10] sm:$0xff]
    %v97 = vld [vmem:[%s0 + $0x18] sm:$0xff]
    %v98 = vld [vmem:[%s1] sm:$0x1]
    %v100 = vperm.slane %v98, 0
    %v102 = vmul.f32 %v94, %v100
    %v103 = vmul.f32 %v95, %v100
    %v104 = vmul.f32 %v96, %v100
    %v105 = vmul.f32 %v97, %v100
    %v106 = vld [vmem:[%s2] sm:$0x1]
    %v108 = vperm.slane %v106, 0
    %v110 = vadd.f32 %v102, %v108
    %v111 = vadd.f32 %v103, %v108
    %v112 = vadd.f32 %v104, %v108
    %v113 = vadd.f32 %v105, %v108
    %vm118 = vcmask 1045504
    %v119 = vrot.slane %v110, 2
    %v120 = vrot.slane %v111, 2
    %v121 = vsel %vm118, %v119, %v120
    %v122 = vrot.slane %v112, 2
    %v123 = vsel %vm118, %v120, %v122
    %v124 = vrot.slane %v113, 2
    %v125 = vsel %vm118, %v122, %v124
    %v127 = vsel %vm118, %v124, 0.0
    %v128 = vld [vmem:[%s3] sm:$0xf]
    %v129 = vld [vmem:[%s4] sm:$0xf]
    %130 = vset.pattern.permute.xlu0 0
    %131 = vperm.xlu0 %130, %v110
    %v132 = vpop.permute.xlu0 %131
    %134 = vset.pattern.permute.xlu0 0
    %135 = vperm.xlu0 %134, %v111
    %v136 = vpop.permute.xlu0 %135
    %138 = vset.pattern.permute.xlu0 0
    %139 = vperm.xlu0 %138, %v112
    %v140 = vpop.permute.xlu0 %139
    %142 = vset.pattern.permute.xlu0 0
    %143 = vperm.xlu0 %142, %v113
    %v144 = vpop.permute.xlu0 %143
    %v146 = vperm.slane %v128, 0
    %v147 = vmul.f32 %v132, %v146
    %v148 = vmul.f32 %v136, %v146
    %v149 = vmul.f32 %v140, %v146
    %v150 = vmul.f32 %v144, %v146
    %151 = vset.pattern.permute.xlu0 0
    %152 = vperm.xlu0 %151, %v121
    %v153 = vpop.permute.xlu0 %152
    %155 = vset.pattern.permute.xlu0 0
    %156 = vperm.xlu0 %155, %v123
    %v157 = vpop.permute.xlu0 %156
    %159 = vset.pattern.permute.xlu0 0
    %160 = vperm.xlu0 %159, %v125
    %v161 = vpop.permute.xlu0 %160
    %164 = vset.pattern.permute.xlu0 0
    %165 = vperm.xlu0 %164, %v127
    %v166 = vpop.permute.xlu0 %165
    %v168 = vperm.slane %v129, 0
    %v169 = vmul.f32 %v153, %v168
    %v170 = vmul.f32 %v157, %v168
    %v171 = vmul.f32 %v161, %v168
    %v172 = vmul.f32 %v166, %v168
    %v173 = vadd.f32 %v147, %v169
    %v174 = vadd.f32 %v148, %v170
    %v175 = vadd.f32 %v149, %v171
    %v176 = vadd.f32 %v150, %v172
    %177 = vset.pattern.permute.xlu0 1
    %178 = vperm.xlu0 %177, %v110
    %v179 = vpop.permute.xlu0 %178
    %181 = vset.pattern.permute.xlu0 1
    %182 = vperm.xlu0 %181, %v111
    %v183 = vpop.permute.xlu0 %182
    %185 = vset.pattern.permute.xlu0 1
    %186 = vperm.xlu0 %185, %v112
    %v187 = vpop.permute.xlu0 %186
    %189 = vset.pattern.permute.xlu0 1
    %190 = vperm.xlu0 %189, %v113
    %v191 = vpop.permute.xlu0 %190
    %v193 = vperm.slane %v128, 1
    %v194 = vmul.f32 %v179, %v193
    %v195 = vmul.f32 %v183, %v193
    %v196 = vmul.f32 %v187, %v193
    %v197 = vmul.f32 %v191, %v193
    %198 = vset.pattern.permute.xlu0 1
    %199 = vperm.xlu0 %198, %v121
    %v200 = vpop.permute.xlu0 %199
    %202 = vset.pattern.permute.xlu0 1
    %203 = vperm.xlu0 %202, %v123
    %v204 = vpop.permute.xlu0 %203
    %206 = vset.pattern.permute.xlu0 1
    %207 = vperm.xlu0 %206, %v125
    %v208 = vpop.permute.xlu0 %207
    %210 = vset.pattern.permute.xlu0 1
    %211 = vperm.xlu0 %210, %v127
    %v212 = vpop.permute.xlu0 %211
    %v214 = vperm.slane %v129, 1
    %v215 = vmul.f32 %v200, %v214
    %v216 = vmul.f32 %v204, %v214
    %v217 = vmul.f32 %v208, %v214
    %v218 = vmul.f32 %v212, %v214
    %v219 = vadd.f32 %v194, %v215
    %v220 = vadd.f32 %v195, %v216
    %v221 = vadd.f32 %v196, %v217
    %v222 = vadd.f32 %v197, %v218
    %223 = vset.pattern.permute.xlu0 2
    %224 = vperm.xlu0 %223, %v110
    %v225 = vpop.permute.xlu0 %224
    %227 = vset.pattern.permute.xlu0 2
    %228 = vperm.xlu0 %227, %v111
    %v229 = vpop.permute.xlu0 %228
    %231 = vset.pattern.permute.xlu0 2
    %232 = vperm.xlu0 %231, %v112
    %v233 = vpop.permute.xlu0 %232
    %235 = vset.pattern.permute.xlu0 2
    %236 = vperm.xlu0 %235, %v113
    %v237 = vpop.permute.xlu0 %236
    %v239 = vperm.slane %v128, 2
    %v240 = vmul.f32 %v225, %v239
    %v241 = vmul.f32 %v229, %v239
    %v242 = vmul.f32 %v233, %v239
    %v243 = vmul.f32 %v237, %v239
    %244 = vset.pattern.permute.xlu0 2
    %245 = vperm.xlu0 %244, %v121
    %v246 = vpop.permute.xlu0 %245
    %248 = vset.pattern.permute.xlu0 2
    %249 = vperm.xlu0 %248, %v123
    %v250 = vpop.permute.xlu0 %249
    %252 = vset.pattern.permute.xlu0 2
    %253 = vperm.xlu0 %252, %v125
    %v254 = vpop.permute.xlu0 %253
    %256 = vset.pattern.permute.xlu0 2
    %257 = vperm.xlu0 %256, %v127
    %v258 = vpop.permute.xlu0 %257
    %v260 = vperm.slane %v129, 2
    %v261 = vmul.f32 %v246, %v260
    %v262 = vmul.f32 %v250, %v260
    %v263 = vmul.f32 %v254, %v260
    %v264 = vmul.f32 %v258, %v260
    %v265 = vadd.f32 %v240, %v261
    %v266 = vadd.f32 %v241, %v262
    %v267 = vadd.f32 %v242, %v263
    %v268 = vadd.f32 %v243, %v264
    %269 = vset.pattern.permute.xlu0 3
    %270 = vperm.xlu0 %269, %v110
    %v271 = vpop.permute.xlu0 %270
    %273 = vset.pattern.permute.xlu0 3
    %274 = vperm.xlu0 %273, %v111
    %v275 = vpop.permute.xlu0 %274
    %277 = vset.pattern.permute.xlu0 3
    %278 = vperm.xlu0 %277, %v112
    %v279 = vpop.permute.xlu0 %278
    %281 = vset.pattern.permute.xlu0 3
    %282 = vperm.xlu0 %281, %v113
    %v283 = vpop.permute.xlu0 %282
    %v285 = vperm.slane %v128, 3
    %v286 = vmul.f32 %v271, %v285
    %v287 = vmul.f32 %v275, %v285
    %v288 = vmul.f32 %v279, %v285
    %v289 = vmul.f32 %v283, %v285
    %290 = vset.pattern.permute.xlu0 3
    %291 = vperm.xlu0 %290, %v121
    %v292 = vpop.permute.xlu0 %291
    %294 = vset.pattern.permute.xlu0 3
    %295 = vperm.xlu0 %294, %v123
    %v296 = vpop.permute.xlu0 %295
    %298 = vset.pattern.permute.xlu0 3
    %299 = vperm.xlu0 %298, %v125
    %v300 = vpop.permute.xlu0 %299
    %302 = vset.pattern.permute.xlu0 3
    %303 = vperm.xlu0 %302, %v127
    %v304 = vpop.permute.xlu0 %303
    %v306 = vperm.slane %v129, 3
    %v307 = vmul.f32 %v292, %v306
    %v308 = vmul.f32 %v296, %v306
    %v309 = vmul.f32 %v300, %v306
    %v310 = vmul.f32 %v304, %v306
    %v311 = vadd.f32 %v286, %v307
    %v312 = vadd.f32 %v287, %v308
    %v313 = vadd.f32 %v288, %v309
    %v314 = vadd.f32 %v289, %v310
    %319 = vrot.lane.b32.xlu0 %v219, 16
    %v320 = vpop.permute.xlu0 %319
    %321 = vrot.lane.b32.xlu0 %v220, 16
    %v322 = vpop.permute.xlu0 %321
    %323 = vrot.lane.b32.xlu0 %v221, 16
    %v324 = vpop.permute.xlu0 %323
    %325 = vrot.lane.b32.xlu0 %v222, 16
    %v326 = vpop.permute.xlu0 %325
    %335 = vrot.lane.b32.xlu0 %v265, 32
    %v336 = vpop.permute.xlu0 %335
    %337 = vrot.lane.b32.xlu0 %v266, 32
    %v338 = vpop.permute.xlu0 %337
    %339 = vrot.lane.b32.xlu0 %v267, 32
    %v340 = vpop.permute.xlu0 %339
    %341 = vrot.lane.b32.xlu0 %v268, 32
    %v342 = vpop.permute.xlu0 %341
    %351 = vrot.lane.b32.xlu0 %v311, 48
    %v352 = vpop.permute.xlu0 %351
    %353 = vrot.lane.b32.xlu0 %v312, 48
    %v354 = vpop.permute.xlu0 %353
    %355 = vrot.lane.b32.xlu0 %v313, 48
    %v356 = vpop.permute.xlu0 %355
    %357 = vrot.lane.b32.xlu0 %v314, 48
    %v358 = vpop.permute.xlu0 %357
    %vm363 = vcmask 130048
    %v364 = vsel %vm363, %v173, %v320
    %v365 = vsel %vm363, %v174, %v322
    %v366 = vsel %vm363, %v175, %v324
    %v367 = vsel %vm363, %v176, %v326
    %vm368 = vcmask 261120
    %v369 = vsel %vm368, %v364, %v336
    %v370 = vsel %vm368, %v365, %v338
    %v371 = vsel %vm368, %v366, %v340
    %v372 = vsel %vm368, %v367, %v342
    %vm373 = vcmask 392192
    %v374 = vsel %vm373, %v369, %v352
    %v375 = vsel %vm373, %v370, %v354
    %v376 = vsel %vm373, %v371, %v356
    %v377 = vsel %vm373, %v372, %v358
    %v378 = vmax.f32 %v374, 0.0
    %v379 = vmax.f32 %v375, 0.0
    %v380 = vmax.f32 %v376, 0.0
    %v381 = vmax.f32 %v377, 0.0
    %v382 = vld [vmem:[%s5] sm:$0x1]
    %v384 = vperm.slane %v382, 0
    %v386 = vmul.f32 %v378, %v384
    %v387 = vmul.f32 %v379, %v384
    %v388 = vmul.f32 %v380, %v384
    %v389 = vmul.f32 %v381, %v384
    %v390 = vld [vmem:[%s6] sm:$0x1]
    %v392 = vperm.slane %v390, 0
    %v394 = vadd.f32 %v386, %v392
    %v395 = vadd.f32 %v387, %v392
    %v396 = vadd.f32 %v388, %v392
    %v397 = vadd.f32 %v389, %v392
    %v398 = vld [vmem:[#allocation2] sm:$0xff]
    %v399 = vld [vmem:[#allocation2 + $0x8] sm:$0xff]
    %v400 = vld [vmem:[#allocation2 + $0x10] sm:$0xff]
    %v401 = vld [vmem:[#allocation2 + $0x18] sm:$0xff]
    %v402 = vld [vmem:[#allocation2 + $0x20] sm:$0xff]
    %v403 = vld [vmem:[#allocation2 + $0x28] sm:$0xff]
    %v404 = vld [vmem:[#allocation2 + $0x30] sm:$0xff]
    %v405 = vld [vmem:[#allocation2 + $0x38] sm:$0xff]
    %v406 = vld [vmem:[%s8] sm:$0x1]
    %v408 = vperm.slane %v406, 0
    %vm410 = vcmask 523264
    %v412 = vsel %vm410, %v394, 0
    %v415 = vsel %vm410, %v395, 0
    %v418 = vsel %vm410, %v396, 0
    %v421 = vsel %vm410, %v397, 0
    %423 = vmatpush.msra.mxu0 0.0
    %424 = vmatpush.msra.mxu0 0.0
    %425 = vmatpush.msra.mxu0 0.0
    %426 = vmatpush.msra.mxu0 0.0
    %427 = vmatpush.msra.mxu0 0.0
    %428 = vmatpush.msra.mxu0 0.0
    %429 = vmatpush.msra.mxu0 0.0
    %430 = vmatpush.msra.mxu0 0.0
    %431 = vmatpush.msra.mxu0 %v405
    %432 = vmatpush.msra.mxu0 %v404
    %433 = vmatpush.msra.mxu0 %v403
    %434 = vmatpush.msra.mxu0 %v402
    %435 = vmatpush.msra.mxu0 %v401
    %436 = vmatpush.msra.mxu0 %v400
    %437 = vmatpush.msra.mxu0 %v399
    %438 = vmatpush.msra.mxu0 %v398
    %439 = vmatmul.f32.gmra.mxu0 %v412
    %v440 = vpop.f32.mrf.mxu0
    %v441 = vadd.f32 %v408, %v440
    %442 = vmatmul.f32.gmra.mxu0 %v415
    %v443 = vpop.f32.mrf.mxu0
    %v444 = vadd.f32 %v408, %v443
    %445 = vmatmul.f32.gmra.mxu0 %v418
    %v446 = vpop.f32.mrf.mxu0
    %v447 = vadd.f32 %v408, %v446
    %448 = vmatmul.f32.gmra.mxu0 %v421
    %v449 = vpop.f32.mrf.mxu0
    %v450 = vadd.f32 %v408, %v449
    %451 = vdwg.mxu0
    %v452 = vld [vmem:[%s9] sm:$0xff]
    %v453 = vld [vmem:[%s9 + $0x8] sm:$0xff]
    %v454 = vld [vmem:[%s9 + $0x10] sm:$0xff]
    %v455 = vld [vmem:[%s9 + $0x18] sm:$0xff]
    %v456 = vld [vmem:[#allocation4] sm:$0xff]
    %v457 = vld [vmem:[#allocation4 + $0x8] sm:$0xff]
    %v458 = vld [vmem:[#allocation4 + $0x10] sm:$0xff]
    %v459 = vld [vmem:[#allocation4 + $0x18] sm:$0xff]
    %v460 = vld [vmem:[#allocation4 + $0x20] sm:$0xff]
    %v461 = vld [vmem:[#allocation4 + $0x28] sm:$0xff]
    %v462 = vld [vmem:[#allocation4 + $0x30] sm:$0xff]
    %v463 = vld [vmem:[#allocation4 + $0x38] sm:$0xff]
    %v464 = vld [vmem:[%s11] sm:$0x1]
    %v466 = vsel %vm368, 0.0, 0
    %468 = vmatpush.msra.mxu0 0.0
    %469 = vmatpush.msra.mxu0 0.0
    %470 = vmatpush.msra.mxu0 0.0
    %471 = vmatpush.msra.mxu0 0.0
    %472 = vmatpush.msra.mxu0 0.0
    %473 = vmatpush.msra.mxu0 0.0
    %474 = vmatpush.msra.mxu0 0.0
    %475 = vmatpush.msra.mxu0 0.0
    %476 = vmatpush.msra.mxu0 0.0
    %477 = vmatpush.msra.mxu0 0.0
    %478 = vmatpush.msra.mxu0 0.0
    %479 = vmatpush.msra.mxu0 0.0
    %480 = vmatpush.msra.mxu0 %v455
    %481 = vmatpush.msra.mxu0 %v454
    %482 = vmatpush.msra.mxu0 %v453
    %483 = vmatpush.msra.mxu0 %v452
    %484 = vmatmul.f32.gmra.mxu0 %v466
    %v485 = vpop.f32.mrf.mxu0
    %v486 = vadd.f32 0.0, %v485
    %487 = vdwg.mxu0
    %v488 = vadd.f32 %v441, %v486
    %v489 = vxor.u32 %v488, 2147483648
    %v490 = vmul.f32 %v489, 1.442695
    %v491 = vpow.pop %v490
    %v492 = vadd.f32 %v491, 1.0
    %v493 = vrcp.pop %v492
    %v494 = vmul.f32 %v492, %v493
    %v495 = vsub.f32 1.0, %v494
    %v496 = vmul.f32 %v493, %v495
    %v497 = vadd.f32 %v493, %v496
    %vm498 = vweird.f32 %v492
    %vm499 = vweird.f32 %v493
    %vm500 = vmor %vm498, %vm499
    %v501 = vsel %vm500, %v493, %v497
    %v502 = vand.u32 2147483647, %v492
    %vm503 = vcmp.eq.f32.partialorder %v502, 8.507059e+37
    %v504 = vand.u32 %v492, 2147483648
    %v505 = vor.u32 1.1754944e-38, %v504
    %v506 = vsel %vm503, %v505, %v501
    %v507 = vmul.f32 1.0, %v506
    %v508 = vtanh.pop %v488
    %v509 = vmul.f32 %v507, 0.0
    %511 = vrot.lane.b32.xlu0 %v508, 64
    %v512 = vpop.permute.xlu0 %511
    %v514 = vmul.f32 %v507, %v512
    %516 = vrot.lane.b32.xlu0 %v514, 32
    %v517 = vpop.permute.xlu0 %516
    %v519 = vadd.f32 %v509, %v517
    %v520 = vtanh.pop %v519
    %522 = vrot.lane.b32.xlu0 %v520, 64
    %v523 = vpop.permute.xlu0 %522
    %v525 = vmul.f32 %v507, %v523
    %527 = vrot.lane.b32.xlu0 %v525, 32
    %v528 = vpop.permute.xlu0 %527
    %v530 = vsel %vm368, %v528, 0.0
    %v532 = vperm.slane %v464, 0
    %v535 = vsel %vm410, %v530, 0
    %537 = vmatpush.msra.mxu0 0.0
    %538 = vmatpush.msra.mxu0 0.0
    %539 = vmatpush.msra.mxu0 0.0
    %540 = vmatpush.msra.mxu0 0.0
    %541 = vmatpush.msra.mxu0 0.0
    %542 = vmatpush.msra.mxu0 0.0
    %543 = vmatpush.msra.mxu0 0.0
    %544 = vmatpush.msra.mxu0 0.0
    %545 = vmatpush.msra.mxu0 %v463
    %546 = vmatpush.msra.mxu0 %v462
    %547 = vmatpush.msra.mxu0 %v461
    %548 = vmatpush.msra.mxu0 %v460
    %549 = vmatpush.msra.mxu0 %v459
    %550 = vmatpush.msra.mxu0 %v458
    %551 = vmatpush.msra.mxu0 %v457
    %552 = vmatpush.msra.mxu0 %v456
    %553 = vmatmul.f32.gmra.mxu0 %v535
    %v554 = vpop.f32.mrf.mxu0
    %v555 = vadd.f32 %v532, %v554
    %556 = vdwg.mxu0
    %v557 = vxor.u32 %v555, 2147483648
    %v558 = vmul.f32 %v557, 1.442695
    %v559 = vpow.pop %v558
    %v560 = vadd.f32 %v559, 1.0
    %v561 = vrcp.pop %v560
    %v562 = vmul.f32 %v560, %v561
    %v563 = vsub.f32 1.0, %v562
    %v564 = vmul.f32 %v561, %v563
    %v565 = vadd.f32 %v561, %v564
    %vm566 = vweird.f32 %v560
    %vm567 = vweird.f32 %v561
    %vm568 = vmor %vm566, %vm567
    %v569 = vsel %vm568, %v561, %v565
    %v570 = vand.u32 2147483647, %v560
    %vm571 = vcmp.eq.f32.partialorder %v570, 8.507059e+37
    %v572 = vand.u32 %v560, 2147483648
    %v573 = vor.u32 1.1754944e-38, %v572
    %v574 = vsel %vm571, %v573, %v569
    %v575 = vmul.f32 1.0, %v574
    %v576 = vtanh.pop %v555
    %v577 = vmul.f32 %v575, 0.0
    %579 = vrot.lane.b32.xlu0 %v576, 64
    %v580 = vpop.permute.xlu0 %579
    %v582 = vmul.f32 %v575, %v580
    %584 = vrot.lane.b32.xlu0 %v582, 32
    %v585 = vpop.permute.xlu0 %584
    %v587 = vadd.f32 %v577, %v585
    %v588 = vtanh.pop %v587
    %590 = vrot.lane.b32.xlu0 %v588, 64
    %v591 = vpop.permute.xlu0 %590
    %v593 = vmul.f32 %v575, %v591
    %v594 = vsel %vm368, %v528, 0
    %596 = vmatpush.msra.mxu0 0.0
    %597 = vmatpush.msra.mxu0 0.0
    %598 = vmatpush.msra.mxu0 0.0
    %599 = vmatpush.msra.mxu0 0.0
    %600 = vmatpush.msra.mxu0 0.0
    %601 = vmatpush.msra.mxu0 0.0
    %602 = vmatpush.msra.mxu0 0.0
    %603 = vmatpush.msra.mxu0 0.0
    %604 = vmatpush.msra.mxu0 0.0
    %605 = vmatpush.msra.mxu0 0.0
    %606 = vmatpush.msra.mxu0 0.0
    %607 = vmatpush.msra.mxu0 0.0
    %608 = vmatpush.msra.mxu0 %v455
    %609 = vmatpush.msra.mxu0 %v454
    %610 = vmatpush.msra.mxu0 %v453
    %611 = vmatpush.msra.mxu0 %v452
    %612 = vmatmul.f32.gmra.mxu0 %v594
    %v613 = vpop.f32.mrf.mxu0
    %v614 = vadd.f32 0.0, %v613
    %615 = vdwg.mxu0
    %v617 = vrot.slane %v614, 6
    %v619 = vadd.f32 %v441, %v617
    %v620 = vxor.u32 %v619, 2147483648
    %v621 = vmul.f32 %v620, 1.442695
    %v622 = vpow.pop %v621
    %v623 = vadd.f32 %v622, 1.0
    %v624 = vrcp.pop %v623
    %v625 = vmul.f32 %v623, %v624
    %v626 = vsub.f32 1.0, %v625
    %v627 = vmul.f32 %v624, %v626
    %v628 = vadd.f32 %v624, %v627
    %vm629 = vweird.f32 %v623
    %vm630 = vweird.f32 %v624
    %vm631 = vmor %vm629, %vm630
    %v632 = vsel %vm631, %v624, %v628
    %v633 = vand.u32 2147483647, %v623
    %vm634 = vcmp.eq.f32.partialorder %v633, 8.507059e+37
    %v635 = vand.u32 %v623, 2147483648
    %v636 = vor.u32 1.1754944e-38, %v635
    %v637 = vsel %vm634, %v636, %v632
    %v638 = vmul.f32 1.0, %v637
    %v639 = vtanh.pop %v619
    %v641 = vrot.slane %v519, 6
    %v643 = vmul.f32 %v638, %v641
    %645 = vrot.lane.b32.xlu0 %v639, 64
    %v646 = vpop.permute.xlu0 %645
    %v648 = vmul.f32 %v638, %v646
    %650 = vrot.lane.b32.xlu0 %v648, 32
    %v651 = vpop.permute.xlu0 %650
    %v653 = vadd.f32 %v643, %v651
    %v654 = vtanh.pop %v653
    %656 = vrot.lane.b32.xlu0 %v654, 64
    %v657 = vpop.permute.xlu0 %656
    %v659 = vmul.f32 %v638, %v657
    %661 = vrot.lane.b32.xlu0 %v659, 32
    %v662 = vpop.permute.xlu0 %661
    %v665 = vrot.slane %v593, 6
    %666 = vrot.lane.b32.xlu0 %v665, 64
    %v667 = vpop.permute.xlu0 %666
    %v669 = vsel %vm368, %v662, %v667
    %v671 = vrot.slane %v669, 2
    %v672 = vsel %vm410, %v671, 0
    %674 = vmatpush.msra.mxu0 0.0
    %675 = vmatpush.msra.mxu0 0.0
    %676 = vmatpush.msra.mxu0 0.0
    %677 = vmatpush.msra.mxu0 0.0
    %678 = vmatpush.msra.mxu0 0.0
    %679 = vmatpush.msra.mxu0 0.0
    %680 = vmatpush.msra.mxu0 0.0
    %681 = vmatpush.msra.mxu0 0.0
    %682 = vmatpush.msra.mxu0 %v463
    %683 = vmatpush.msra.mxu0 %v462
    %684 = vmatpush.msra.mxu0 %v461
    %685 = vmatpush.msra.mxu0 %v460
    %686 = vmatpush.msra.mxu0 %v459
    %687 = vmatpush.msra.mxu0 %v458
    %688 = vmatpush.msra.mxu0 %v457
    %689 = vmatpush.msra.mxu0 %v456
    %690 = vmatmul.f32.gmra.mxu0 %v672
    %v691 = vpop.f32.mrf.mxu0
    %v692 = vadd.f32 %v532, %v691
    %693 = vdwg.mxu0
    %v694 = vxor.u32 %v692, 2147483648
    %v695 = vmul.f32 %v694, 1.442695
    %v696 = vpow.pop %v695
    %v697 = vadd.f32 %v696, 1.0
    %v698 = vrcp.pop %v697
    %v699 = vmul.f32 %v697, %v698
    %v700 = vsub.f32 1.0, %v699
    %v701 = vmul.f32 %v698, %v700
    %v702 = vadd.f32 %v698, %v701
    %vm703 = vweird.f32 %v697
    %vm704 = vweird.f32 %v698
    %vm705 = vmor %vm703, %vm704
    %v706 = vsel %vm705, %v698, %v702
    %v707 = vand.u32 2147483647, %v697
    %vm708 = vcmp.eq.f32.partialorder %v707, 8.507059e+37
    %v709 = vand.u32 %v697, 2147483648
    %v710 = vor.u32 1.1754944e-38, %v709
    %v711 = vsel %vm708, %v710, %v706
    %v712 = vmul.f32 1.0, %v711
    %v713 = vtanh.pop %v692
    %v714 = vmul.f32 %v712, %v587
    %716 = vrot.lane.b32.xlu0 %v713, 64
    %v717 = vpop.permute.xlu0 %716
    %v719 = vmul.f32 %v712, %v717
    %721 = vrot.lane.b32.xlu0 %v719, 32
    %v722 = vpop.permute.xlu0 %721
    %v724 = vadd.f32 %v714, %v722
    %v725 = vtanh.pop %v724
    %727 = vrot.lane.b32.xlu0 %v725, 64
    %v728 = vpop.permute.xlu0 %727
    %v730 = vmul.f32 %v712, %v728
    %v731 = vrot.slane %v659, 2
    %732 = vrot.lane.b32.xlu0 %v731, 32
    %v733 = vpop.permute.xlu0 %732
    %v734 = vsel %vm368, %v733, 0
    %736 = vmatpush.msra.mxu0 0.0
    %737 = vmatpush.msra.mxu0 0.0
    %738 = vmatpush.msra.mxu0 0.0
    %739 = vmatpush.msra.mxu0 0.0
    %740 = vmatpush.msra.mxu0 0.0
    %741 = vmatpush.msra.mxu0 0.0
    %742 = vmatpush.msra.mxu0 0.0
    %743 = vmatpush.msra.mxu0 0.0
    %744 = vmatpush.msra.mxu0 0.0
    %745 = vmatpush.msra.mxu0 0.0
    %746 = vmatpush.msra.mxu0 0.0
    %747 = vmatpush.msra.mxu0 0.0
    %748 = vmatpush.msra.mxu0 %v455
    %749 = vmatpush.msra.mxu0 %v454
    %750 = vmatpush.msra.mxu0 %v453
    %751 = vmatpush.msra.mxu0 %v452
    %752 = vmatmul.f32.gmra.mxu0 %v734
    %v753 = vpop.f32.mrf.mxu0
    %v754 = vadd.f32 0.0, %v753
    %755 = vdwg.mxu0
    %v757 = vrot.slane %v754, 4
    %v759 = vadd.f32 %v441, %v757
    %v760 = vxor.u32 %v759, 2147483648
    %v761 = vmul.f32 %v760, 1.442695
    %v762 = vpow.pop %v761
    %v763 = vadd.f32 %v762, 1.0
    %v764 = vrcp.pop %v763
    %v765 = vmul.f32 %v763, %v764
    %v766 = vsub.f32 1.0, %v765
    %v767 = vmul.f32 %v764, %v766
    %v768 = vadd.f32 %v764, %v767
    %vm769 = vweird.f32 %v763
    %vm770 = vweird.f32 %v764
    %vm771 = vmor %vm769, %vm770
    %v772 = vsel %vm771, %v764, %v768
    %v773 = vand.u32 2147483647, %v763
    %vm774 = vcmp.eq.f32.partialorder %v773, 8.507059e+37
    %v775 = vand.u32 %v763, 2147483648
    %v776 = vor.u32 1.1754944e-38, %v775
    %v777 = vsel %vm774, %v776, %v772
    %v778 = vmul.f32 1.0, %v777
    %v779 = vtanh.pop %v759
    %v781 = vrot.slane %v653, 6
    %v783 = vmul.f32 %v778, %v781
    %785 = vrot.lane.b32.xlu0 %v779, 64
    %v786 = vpop.permute.xlu0 %785
    %v788 = vmul.f32 %v778, %v786
    %790 = vrot.lane.b32.xlu0 %v788, 32
    %v791 = vpop.permute.xlu0 %790
    %v793 = vadd.f32 %v783, %v791
    %v794 = vtanh.pop %v793
    %796 = vrot.lane.b32.xlu0 %v794, 64
    %v797 = vpop.permute.xlu0 %796
    %v799 = vmul.f32 %v778, %v797
    %801 = vrot.lane.b32.xlu0 %v799, 32
    %v802 = vpop.permute.xlu0 %801
    %v805 = vrot.slane %v730, 4
    %806 = vrot.lane.b32.xlu0 %v805, 64
    %v807 = vpop.permute.xlu0 %806
    %v809 = vsel %vm368, %v802, %v807
    %v811 = vrot.slane %v809, 4
    %v812 = vsel %vm410, %v811, 0
    %814 = vmatpush.msra.mxu0 0.0
    %815 = vmatpush.msra.mxu0 0.0
    %816 = vmatpush.msra.mxu0 0.0
    %817 = vmatpush.msra.mxu0 0.0
    %818 = vmatpush.msra.mxu0 0.0
    %819 = vmatpush.msra.mxu0 0.0
    %820 = vmatpush.msra.mxu0 0.0
    %821 = vmatpush.msra.mxu0 0.0
    %822 = vmatpush.msra.mxu0 %v463
    %823 = vmatpush.msra.mxu0 %v462
    %824 = vmatpush.msra.mxu0 %v461
    %825 = vmatpush.msra.mxu0 %v460
    %826 = vmatpush.msra.mxu0 %v459
    %827 = vmatpush.msra.mxu0 %v458
    %828 = vmatpush.msra.mxu0 %v457
    %829 = vmatpush.msra.mxu0 %v456
    %830 = vmatmul.f32.gmra.mxu0 %v812
    %v831 = vpop.f32.mrf.mxu0
    %v832 = vadd.f32 %v532, %v831
    %833 = vdwg.mxu0
    %v834 = vxor.u32 %v832, 2147483648
    %v835 = vmul.f32 %v834, 1.442695
    %v836 = vpow.pop %v835
    %v837 = vadd.f32 %v836, 1.0
    %v838 = vrcp.pop %v837
    %v839 = vmul.f32 %v837, %v838
    %v840 = vsub.f32 1.0, %v839
    %v841 = vmul.f32 %v838, %v840
    %v842 = vadd.f32 %v838, %v841
    %vm843 = vweird.f32 %v837
    %vm844 = vweird.f32 %v838
    %vm845 = vmor %vm843, %vm844
    %v846 = vsel %vm845, %v838, %v842
    %v847 = vand.u32 2147483647, %v837
    %vm848 = vcmp.eq.f32.partialorder %v847, 8.507059e+37
    %v849 = vand.u32 %v837, 2147483648
    %v850 = vor.u32 1.1754944e-38, %v849
    %v851 = vsel %vm848, %v850, %v846
    %v852 = vmul.f32 1.0, %v851
    %v853 = vtanh.pop %v832
    %v854 = vmul.f32 %v852, %v724
    %856 = vrot.lane.b32.xlu0 %v853, 64
    %v857 = vpop.permute.xlu0 %856
    %v859 = vmul.f32 %v852, %v857
    %861 = vrot.lane.b32.xlu0 %v859, 32
    %v862 = vpop.permute.xlu0 %861
    %v864 = vadd.f32 %v854, %v862
    %v865 = vtanh.pop %v864
    %867 = vrot.lane.b32.xlu0 %v865, 64
    %v868 = vpop.permute.xlu0 %867
    %v870 = vmul.f32 %v852, %v868
    %v871 = vrot.slane %v799, 4
    %872 = vrot.lane.b32.xlu0 %v871, 32
    %v873 = vpop.permute.xlu0 %872
    %v874 = vsel %vm368, %v873, 0
    %876 = vmatpush.msra.mxu0 0.0
    %877 = vmatpush.msra.mxu0 0.0
    %878 = vmatpush.msra.mxu0 0.0
    %879 = vmatpush.msra.mxu0 0.0
    %880 = vmatpush.msra.mxu0 0.0
    %881 = vmatpush.msra.mxu0 0.0
    %882 = vmatpush.msra.mxu0 0.0
    %883 = vmatpush.msra.mxu0 0.0
    %884 = vmatpush.msra.mxu0 0.0
    %885 = vmatpush.msra.mxu0 0.0
    %886 = vmatpush.msra.mxu0 0.0
    %887 = vmatpush.msra.mxu0 0.0
    %888 = vmatpush.msra.mxu0 %v455
    %889 = vmatpush.msra.mxu0 %v454
    %890 = vmatpush.msra.mxu0 %v453
    %891 = vmatpush.msra.mxu0 %v452
    %892 = vmatmul.f32.gmra.mxu0 %v874
    %v893 = vpop.f32.mrf.mxu0
    %v894 = vadd.f32 0.0, %v893
    %895 = vdwg.mxu0
    %v897 = vrot.slane %v894, 2
    %v899 = vadd.f32 %v441, %v897
    %v900 = vxor.u32 %v899, 2147483648
    %v901 = vmul.f32 %v900, 1.442695
    %v902 = vpow.pop %v901
    %v903 = vadd.f32 %v902, 1.0
    %v904 = vrcp.pop %v903
    %v905 = vmul.f32 %v903, %v904
    %v906 = vsub.f32 1.0, %v905
    %v907 = vmul.f32 %v904, %v906
    %v908 = vadd.f32 %v904, %v907
    %vm909 = vweird.f32 %v903
    %vm910 = vweird.f32 %v904
    %vm911 = vmor %vm909, %vm910
    %v912 = vsel %vm911, %v904, %v908
    %v913 = vand.u32 2147483647, %v903
    %vm914 = vcmp.eq.f32.partialorder %v913, 8.507059e+37
    %v915 = vand.u32 %v903, 2147483648
    %v916 = vor.u32 1.1754944e-38, %v915
    %v917 = vsel %vm914, %v916, %v912
    %v918 = vmul.f32 1.0, %v917
    %v919 = vtanh.pop %v899
    %v921 = vrot.slane %v793, 6
    %v923 = vmul.f32 %v918, %v921
    %925 = vrot.lane.b32.xlu0 %v919, 64
    %v926 = vpop.permute.xlu0 %925
    %v928 = vmul.f32 %v918, %v926
    %930 = vrot.lane.b32.xlu0 %v928, 32
    %v931 = vpop.permute.xlu0 %930
    %v933 = vadd.f32 %v923, %v931
    %v934 = vtanh.pop %v933
    %936 = vrot.lane.b32.xlu0 %v934, 64
    %v937 = vpop.permute.xlu0 %936
    %v939 = vmul.f32 %v918, %v937
    %941 = vrot.lane.b32.xlu0 %v939, 32
    %v942 = vpop.permute.xlu0 %941
    %v945 = vrot.slane %v870, 2
    %946 = vrot.lane.b32.xlu0 %v945, 64
    %v947 = vpop.permute.xlu0 %946
    %v949 = vsel %vm368, %v942, %v947
    %v951 = vrot.slane %v949, 6
    %v952 = vsel %vm410, %v951, 0
    %954 = vmatpush.msra.mxu0 0.0
    %955 = vmatpush.msra.mxu0 0.0
    %956 = vmatpush.msra.mxu0 0.0
    %957 = vmatpush.msra.mxu0 0.0
    %958 = vmatpush.msra.mxu0 0.0
    %959 = vmatpush.msra.mxu0 0.0
    %960 = vmatpush.msra.mxu0 0.0
    %961 = vmatpush.msra.mxu0 0.0
    %962 = vmatpush.msra.mxu0 %v463
    %963 = vmatpush.msra.mxu0 %v462
    %964 = vmatpush.msra.mxu0 %v461
    %965 = vmatpush.msra.mxu0 %v460
    %966 = vmatpush.msra.mxu0 %v459
    %967 = vmatpush.msra.mxu0 %v458
    %968 = vmatpush.msra.mxu0 %v457
    %969 = vmatpush.msra.mxu0 %v456
    %970 = vmatmul.f32.gmra.mxu0 %v952
    %v971 = vpop.f32.mrf.mxu0
    %v972 = vadd.f32 %v532, %v971
    %973 = vdwg.mxu0
    %v974 = vxor.u32 %v972, 2147483648
    %v975 = vmul.f32 %v974, 1.442695
    %v976 = vpow.pop %v975
    %v977 = vadd.f32 %v976, 1.0
    %v978 = vrcp.pop %v977
    %v979 = vmul.f32 %v977, %v978
    %v980 = vsub.f32 1.0, %v979
    %v981 = vmul.f32 %v978, %v980
    %v982 = vadd.f32 %v978, %v981
    %vm983 = vweird.f32 %v977
    %vm984 = vweird.f32 %v978
    %vm985 = vmor %vm983, %vm984
    %v986 = vsel %vm985, %v978, %v982
    %v987 = vand.u32 2147483647, %v977
    %vm988 = vcmp.eq.f32.partialorder %v987, 8.507059e+37
    %v989 = vand.u32 %v977, 2147483648
    %v990 = vor.u32 1.1754944e-38, %v989
    %v991 = vsel %vm988, %v990, %v986
    %v992 = vmul.f32 1.0, %v991
    %v993 = vtanh.pop %v972
    %v994 = vmul.f32 %v992, %v864
    %996 = vrot.lane.b32.xlu0 %v993, 64
    %v997 = vpop.permute.xlu0 %996
    %v999 = vmul.f32 %v992, %v997
    %1001 = vrot.lane.b32.xlu0 %v999, 32
    %v1002 = vpop.permute.xlu0 %1001
    %v1004 = vadd.f32 %v994, %v1002
    %v1005 = vtanh.pop %v1004
    %1007 = vrot.lane.b32.xlu0 %v1005, 64
    %v1008 = vpop.permute.xlu0 %1007
    %v1010 = vmul.f32 %v992, %v1008
    %v1011 = vrot.slane %v939, 6
    %1012 = vrot.lane.b32.xlu0 %v1011, 32
    %v1013 = vpop.permute.xlu0 %1012
    %v1014 = vsel %vm368, %v1013, 0
    %1016 = vmatpush.msra.mxu0 0.0
    %1017 = vmatpush.msra.mxu0 0.0
    %1018 = vmatpush.msra.mxu0 0.0
    %1019 = vmatpush.msra.mxu0 0.0
    %1020 = vmatpush.msra.mxu0 0.0
    %1021 = vmatpush.msra.mxu0 0.0
    %1022 = vmatpush.msra.mxu0 0.0
    %1023 = vmatpush.msra.mxu0 0.0
    %1024 = vmatpush.msra.mxu0 0.0
    %1025 = vmatpush.msra.mxu0 0.0
    %1026 = vmatpush.msra.mxu0 0.0
    %1027 = vmatpush.msra.mxu0 0.0
    %1028 = vmatpush.msra.mxu0 %v455
    %1029 = vmatpush.msra.mxu0 %v454
    %1030 = vmatpush.msra.mxu0 %v453
    %1031 = vmatpush.msra.mxu0 %v452
    %1032 = vmatmul.f32.gmra.mxu0 %v1014
    %v1033 = vpop.f32.mrf.mxu0
    %v1034 = vadd.f32 0.0, %v1033
    %1035 = vdwg.mxu0
    %v1036 = vadd.f32 %v444, %v1034
    %v1037 = vxor.u32 %v1036, 2147483648
    %v1038 = vmul.f32 %v1037, 1.442695
    %v1039 = vpow.pop %v1038
    %v1040 = vadd.f32 %v1039, 1.0
    %v1041 = vrcp.pop %v1040
    %v1042 = vmul.f32 %v1040, %v1041
    %v1043 = vsub.f32 1.0, %v1042
    %v1044 = vmul.f32 %v1041, %v1043
    %v1045 = vadd.f32 %v1041, %v1044
    %vm1046 = vweird.f32 %v1040
    %vm1047 = vweird.f32 %v1041
    %vm1048 = vmor %vm1046, %vm1047
    %v1049 = vsel %vm1048, %v1041, %v1045
    %v1050 = vand.u32 2147483647, %v1040
    %vm1051 = vcmp.eq.f32.partialorder %v1050, 8.507059e+37
    %v1052 = vand.u32 %v1040, 2147483648
    %v1053 = vor.u32 1.1754944e-38, %v1052
    %v1054 = vsel %vm1051, %v1053, %v1049
    %v1055 = vmul.f32 1.0, %v1054
    %v1056 = vtanh.pop %v1036
    %v1058 = vrot.slane %v933, 6
    %v1060 = vmul.f32 %v1055, %v1058
    %1062 = vrot.lane.b32.xlu0 %v1056, 64
    %v1063 = vpop.permute.xlu0 %1062
    %v1065 = vmul.f32 %v1055, %v1063
    %1067 = vrot.lane.b32.xlu0 %v1065, 32
    %v1068 = vpop.permute.xlu0 %1067
    %v1070 = vadd.f32 %v1060, %v1068
    %v1071 = vtanh.pop %v1070
    %1073 = vrot.lane.b32.xlu0 %v1071, 64
    %v1074 = vpop.permute.xlu0 %1073
    %v1076 = vmul.f32 %v1055, %v1074
    %1078 = vrot.lane.b32.xlu0 %v1076, 32
    %v1079 = vpop.permute.xlu0 %1078
    %1082 = vrot.lane.b32.xlu0 %v1010, 64
    %v1083 = vpop.permute.xlu0 %1082
    %v1085 = vsel %vm368, %v1079, %v1083
    %v1087 = vsel %vm410, %v1085, 0
    %1089 = vmatpush.msra.mxu0 0.0
    %1090 = vmatpush.msra.mxu0 0.0
    %1091 = vmatpush.msra.mxu0 0.0
    %1092 = vmatpush.msra.mxu0 0.0
    %1093 = vmatpush.msra.mxu0 0.0
    %1094 = vmatpush.msra.mxu0 0.0
    %1095 = vmatpush.msra.mxu0 0.0
    %1096 = vmatpush.msra.mxu0 0.0
    %1097 = vmatpush.msra.mxu0 %v463
    %1098 = vmatpush.msra.mxu0 %v462
    %1099 = vmatpush.msra.mxu0 %v461
    %1100 = vmatpush.msra.mxu0 %v460
    %1101 = vmatpush.msra.mxu0 %v459
    %1102 = vmatpush.msra.mxu0 %v458
    %1103 = vmatpush.msra.mxu0 %v457
    %1104 = vmatpush.msra.mxu0 %v456
    %1105 = vmatmul.f32.gmra.mxu0 %v1087
    %v1106 = vpop.f32.mrf.mxu0
    %v1107 = vadd.f32 %v532, %v1106
    %1108 = vdwg.mxu0
    %v1109 = vxor.u32 %v1107, 2147483648
    %v1110 = vmul.f32 %v1109, 1.442695
    %v1111 = vpow.pop %v1110
    %v1112 = vadd.f32 %v1111, 1.0
    %v1113 = vrcp.pop %v1112
    %v1114 = vmul.f32 %v1112, %v1113
    %v1115 = vsub.f32 1.0, %v1114
    %v1116 = vmul.f32 %v1113, %v1115
    %v1117 = vadd.f32 %v1113, %v1116
    %vm1118 = vweird.f32 %v1112
    %vm1119 = vweird.f32 %v1113
    %vm1120 = vmor %vm1118, %vm1119
    %v1121 = vsel %vm1120, %v1113, %v1117
    %v1122 = vand.u32 2147483647, %v1112
    %vm1123 = vcmp.eq.f32.partialorder %v1122, 8.507059e+37
    %v1124 = vand.u32 %v1112, 2147483648
    %v1125 = vor.u32 1.1754944e-38, %v1124
    %v1126 = vsel %vm1123, %v1125, %v1121
    %v1127 = vmul.f32 1.0, %v1126
    %v1128 = vtanh.pop %v1107
    %v1129 = vmul.f32 %v1127, %v1004
    %1131 = vrot.lane.b32.xlu0 %v1128, 64
    %v1132 = vpop.permute.xlu0 %1131
    %v1134 = vmul.f32 %v1127, %v1132
    %1136 = vrot.lane.b32.xlu0 %v1134, 32
    %v1137 = vpop.permute.xlu0 %1136
    %v1139 = vadd.f32 %v1129, %v1137
    %v1140 = vtanh.pop %v1139
    %1142 = vrot.lane.b32.xlu0 %v1140, 64
    %v1143 = vpop.permute.xlu0 %1142
    %v1145 = vmul.f32 %v1127, %v1143
    %v1146 = vsel %vm368, %v1079, 0
    %1148 = vmatpush.msra.mxu0 0.0
    %1149 = vmatpush.msra.mxu0 0.0
    %1150 = vmatpush.msra.mxu0 0.0
    %1151 = vmatpush.msra.mxu0 0.0
    %1152 = vmatpush.msra.mxu0 0.0
    %1153 = vmatpush.msra.mxu0 0.0
    %1154 = vmatpush.msra.mxu0 0.0
    %1155 = vmatpush.msra.mxu0 0.0
    %1156 = vmatpush.msra.mxu0 0.0
    %1157 = vmatpush.msra.mxu0 0.0
    %1158 = vmatpush.msra.mxu0 0.0
    %1159 = vmatpush.msra.mxu0 0.0
    %1160 = vmatpush.msra.mxu0 %v455
    %1161 = vmatpush.msra.mxu0 %v454
    %1162 = vmatpush.msra.mxu0 %v453
    %1163 = vmatpush.msra.mxu0 %v452
    %1164 = vmatmul.f32.gmra.mxu0 %v1146
    %v1165 = vpop.f32.mrf.mxu0
    %v1166 = vadd.f32 0.0, %v1165
    %1167 = vdwg.mxu0
    %v1169 = vrot.slane %v1166, 6
    %v1171 = vadd.f32 %v444, %v1169
    %v1172 = vxor.u32 %v1171, 2147483648
    %v1173 = vmul.f32 %v1172, 1.442695
    %v1174 = vpow.pop %v1173
    %v1175 = vadd.f32 %v1174, 1.0
    %v1176 = vrcp.pop %v1175
    %v1177 = vmul.f32 %v1175, %v1176
    %v1178 = vsub.f32 1.0, %v1177
    %v1179 = vmul.f32 %v1176, %v1178
    %v1180 = vadd.f32 %v1176, %v1179
    %vm1181 = vweird.f32 %v1175
    %vm1182 = vweird.f32 %v1176
    %vm1183 = vmor %vm1181, %vm1182
    %v1184 = vsel %vm1183, %v1176, %v1180
    %v1185 = vand.u32 2147483647, %v1175
    %vm1186 = vcmp.eq.f32.partialorder %v1185, 8.507059e+37
    %v1187 = vand.u32 %v1175, 2147483648
    %v1188 = vor.u32 1.1754944e-38, %v1187
    %v1189 = vsel %vm1186, %v1188, %v1184
    %v1190 = vmul.f32 1.0, %v1189
    %v1191 = vtanh.pop %v1171
    %v1193 = vrot.slane %v1070, 6
    %v1195 = vmul.f32 %v1190, %v1193
    %1197 = vrot.lane.b32.xlu0 %v1191, 64
    %v1198 = vpop.permute.xlu0 %1197
    %v1200 = vmul.f32 %v1190, %v1198
    %1202 = vrot.lane.b32.xlu0 %v1200, 32
    %v1203 = vpop.permute.xlu0 %1202
    %v1205 = vadd.f32 %v1195, %v1203
    %v1206 = vtanh.pop %v1205
    %1208 = vrot.lane.b32.xlu0 %v1206, 64
    %v1209 = vpop.permute.xlu0 %1208
    %v1211 = vmul.f32 %v1190, %v1209
    %1213 = vrot.lane.b32.xlu0 %v1211, 32
    %v1214 = vpop.permute.xlu0 %1213
    %v1217 = vrot.slane %v1145, 6
    %1218 = vrot.lane.b32.xlu0 %v1217, 64
    %v1219 = vpop.permute.xlu0 %1218
    %v1221 = vsel %vm368, %v1214, %v1219
    %v1223 = vrot.slane %v1221, 2
    %v1224 = vsel %vm410, %v1223, 0
    %1226 = vmatpush.msra.mxu0 0.0
    %1227 = vmatpush.msra.mxu0 0.0
    %1228 = vmatpush.msra.mxu0 0.0
    %1229 = vmatpush.msra.mxu0 0.0
    %1230 = vmatpush.msra.mxu0 0.0
    %1231 = vmatpush.msra.mxu0 0.0
    %1232 = vmatpush.msra.mxu0 0.0
    %1233 = vmatpush.msra.mxu0 0.0
    %1234 = vmatpush.msra.mxu0 %v463
    %1235 = vmatpush.msra.mxu0 %v462
    %1236 = vmatpush.msra.mxu0 %v461
    %1237 = vmatpush.msra.mxu0 %v460
    %1238 = vmatpush.msra.mxu0 %v459
    %1239 = vmatpush.msra.mxu0 %v458
    %1240 = vmatpush.msra.mxu0 %v457
    %1241 = vmatpush.msra.mxu0 %v456
    %1242 = vmatmul.f32.gmra.mxu0 %v1224
    %v1243 = vpop.f32.mrf.mxu0
    %v1244 = vadd.f32 %v532, %v1243
    %1245 = vdwg.mxu0
    %v1246 = vxor.u32 %v1244, 2147483648
    %v1247 = vmul.f32 %v1246, 1.442695
    %v1248 = vpow.pop %v1247
    %v1249 = vadd.f32 %v1248, 1.0
    %v1250 = vrcp.pop %v1249
    %v1251 = vmul.f32 %v1249, %v1250
    %v1252 = vsub.f32 1.0, %v1251
    %v1253 = vmul.f32 %v1250, %v1252
    %v1254 = vadd.f32 %v1250, %v1253
    %vm1255 = vweird.f32 %v1249
    %vm1256 = vweird.f32 %v1250
    %vm1257 = vmor %vm1255, %vm1256
    %v1258 = vsel %vm1257, %v1250, %v1254
    %v1259 = vand.u32 2147483647, %v1249
    %vm1260 = vcmp.eq.f32.partialorder %v1259, 8.507059e+37
    %v1261 = vand.u32 %v1249, 2147483648
    %v1262 = vor.u32 1.1754944e-38, %v1261
    %v1263 = vsel %vm1260, %v1262, %v1258
    %v1264 = vmul.f32 1.0, %v1263
    %v1265 = vtanh.pop %v1244
    %v1266 = vmul.f32 %v1264, %v1139
    %1268 = vrot.lane.b32.xlu0 %v1265, 64
    %v1269 = vpop.permute.xlu0 %1268
    %v1271 = vmul.f32 %v1264, %v1269
    %1273 = vrot.lane.b32.xlu0 %v1271, 32
    %v1274 = vpop.permute.xlu0 %1273
    %v1276 = vadd.f32 %v1266, %v1274
    %v1277 = vtanh.pop %v1276
    %1279 = vrot.lane.b32.xlu0 %v1277, 64
    %v1280 = vpop.permute.xlu0 %1279
    %v1282 = vmul.f32 %v1264, %v1280
    %v1283 = vrot.slane %v1211, 2
    %1284 = vrot.lane.b32.xlu0 %v1283, 32
    %v1285 = vpop.permute.xlu0 %1284
    %v1286 = vsel %vm368, %v1285, 0
    %1288 = vmatpush.msra.mxu0 0.0
    %1289 = vmatpush.msra.mxu0 0.0
    %1290 = vmatpush.msra.mxu0 0.0
    %1291 = vmatpush.msra.mxu0 0.0
    %1292 = vmatpush.msra.mxu0 0.0
    %1293 = vmatpush.msra.mxu0 0.0
    %1294 = vmatpush.msra.mxu0 0.0
    %1295 = vmatpush.msra.mxu0 0.0
    %1296 = vmatpush.msra.mxu0 0.0
    %1297 = vmatpush.msra.mxu0 0.0
    %1298 = vmatpush.msra.mxu0 0.0
    %1299 = vmatpush.msra.mxu0 0.0
    %1300 = vmatpush.msra.mxu0 %v455
    %1301 = vmatpush.msra.mxu0 %v454
    %1302 = vmatpush.msra.mxu0 %v453
    %1303 = vmatpush.msra.mxu0 %v452
    %1304 = vmatmul.f32.gmra.mxu0 %v1286
    %v1305 = vpop.f32.mrf.mxu0
    %v1306 = vadd.f32 0.0, %v1305
    %1307 = vdwg.mxu0
    %v1309 = vrot.slane %v1306, 4
    %v1311 = vadd.f32 %v444, %v1309
    %v1312 = vxor.u32 %v1311, 2147483648
    %v1313 = vmul.f32 %v1312, 1.442695
    %v1314 = vpow.pop %v1313
    %v1315 = vadd.f32 %v1314, 1.0
    %v1316 = vrcp.pop %v1315
    %v1317 = vmul.f32 %v1315, %v1316
    %v1318 = vsub.f32 1.0, %v1317
    %v1319 = vmul.f32 %v1316, %v1318
    %v1320 = vadd.f32 %v1316, %v1319
    %vm1321 = vweird.f32 %v1315
    %vm1322 = vweird.f32 %v1316
    %vm1323 = vmor %vm1321, %vm1322
    %v1324 = vsel %vm1323, %v1316, %v1320
    %v1325 = vand.u32 2147483647, %v1315
    %vm1326 = vcmp.eq.f32.partialorder %v1325, 8.507059e+37
    %v1327 = vand.u32 %v1315, 2147483648
    %v1328 = vor.u32 1.1754944e-38, %v1327
    %v1329 = vsel %vm1326, %v1328, %v1324
    %v1330 = vmul.f32 1.0, %v1329
    %v1331 = vtanh.pop %v1311
    %v1333 = vrot.slane %v1205, 6
    %v1335 = vmul.f32 %v1330, %v1333
    %1337 = vrot.lane.b32.xlu0 %v1331, 64
    %v1338 = vpop.permute.xlu0 %1337
    %v1340 = vmul.f32 %v1330, %v1338
    %1342 = vrot.lane.b32.xlu0 %v1340, 32
    %v1343 = vpop.permute.xlu0 %1342
    %v1345 = vadd.f32 %v1335, %v1343
    %v1346 = vtanh.pop %v1345
    %1348 = vrot.lane.b32.xlu0 %v1346, 64
    %v1349 = vpop.permute.xlu0 %1348
    %v1351 = vmul.f32 %v1330, %v1349
    %1353 = vrot.lane.b32.xlu0 %v1351, 32
    %v1354 = vpop.permute.xlu0 %1353
    %v1357 = vrot.slane %v1282, 4
    %1358 = vrot.lane.b32.xlu0 %v1357, 64
    %v1359 = vpop.permute.xlu0 %1358
    %v1361 = vsel %vm368, %v1354, %v1359
    %v1363 = vrot.slane %v1361, 4
    %v1364 = vsel %vm410, %v1363, 0
    %1366 = vmatpush.msra.mxu0 0.0
    %1367 = vmatpush.msra.mxu0 0.0
    %1368 = vmatpush.msra.mxu0 0.0
    %1369 = vmatpush.msra.mxu0 0.0
    %1370 = vmatpush.msra.mxu0 0.0
    %1371 = vmatpush.msra.mxu0 0.0
    %1372 = vmatpush.msra.mxu0 0.0
    %1373 = vmatpush.msra.mxu0 0.0
    %1374 = vmatpush.msra.mxu0 %v463
    %1375 = vmatpush.msra.mxu0 %v462
    %1376 = vmatpush.msra.mxu0 %v461
    %1377 = vmatpush.msra.mxu0 %v460
    %1378 = vmatpush.msra.mxu0 %v459
    %1379 = vmatpush.msra.mxu0 %v458
    %1380 = vmatpush.msra.mxu0 %v457
    %1381 = vmatpush.msra.mxu0 %v456
    %1382 = vmatmul.f32.gmra.mxu0 %v1364
    %v1383 = vpop.f32.mrf.mxu0
    %v1384 = vadd.f32 %v532, %v1383
    %1385 = vdwg.mxu0
    %v1386 = vxor.u32 %v1384, 2147483648
    %v1387 = vmul.f32 %v1386, 1.442695
    %v1388 = vpow.pop %v1387
    %v1389 = vadd.f32 %v1388, 1.0
    %v1390 = vrcp.pop %v1389
    %v1391 = vmul.f32 %v1389, %v1390
    %v1392 = vsub.f32 1.0, %v1391
    %v1393 = vmul.f32 %v1390, %v1392
    %v1394 = vadd.f32 %v1390, %v1393
    %vm1395 = vweird.f32 %v1389
    %vm1396 = vweird.f32 %v1390
    %vm1397 = vmor %vm1395, %vm1396
    %v1398 = vsel %vm1397, %v1390, %v1394
    %v1399 = vand.u32 2147483647, %v1389
    %vm1400 = vcmp.eq.f32.partialorder %v1399, 8.507059e+37
    %v1401 = vand.u32 %v1389, 2147483648
    %v1402 = vor.u32 1.1754944e-38, %v1401
    %v1403 = vsel %vm1400, %v1402, %v1398
    %v1404 = vmul.f32 1.0, %v1403
    %v1405 = vtanh.pop %v1384
    %v1406 = vmul.f32 %v1404, %v1276
    %1408 = vrot.lane.b32.xlu0 %v1405, 64
    %v1409 = vpop.permute.xlu0 %1408
    %v1411 = vmul.f32 %v1404, %v1409
    %1413 = vrot.lane.b32.xlu0 %v1411, 32
    %v1414 = vpop.permute.xlu0 %1413
    %v1416 = vadd.f32 %v1406, %v1414
    %v1417 = vtanh.pop %v1416
    %1419 = vrot.lane.b32.xlu0 %v1417, 64
    %v1420 = vpop.permute.xlu0 %1419
    %v1422 = vmul.f32 %v1404, %v1420
    %v1423 = vrot.slane %v1351, 4
    %1424 = vrot.lane.b32.xlu0 %v1423, 32
    %v1425 = vpop.permute.xlu0 %1424
    %v1426 = vsel %vm368, %v1425, 0
    %1428 = vmatpush.msra.mxu0 0.0
    %1429 = vmatpush.msra.mxu0 0.0
    %1430 = vmatpush.msra.mxu0 0.0
    %1431 = vmatpush.msra.mxu0 0.0
    %1432 = vmatpush.msra.mxu0 0.0
    %1433 = vmatpush.msra.mxu0 0.0
    %1434 = vmatpush.msra.mxu0 0.0
    %1435 = vmatpush.msra.mxu0 0.0
    %1436 = vmatpush.msra.mxu0 0.0
    %1437 = vmatpush.msra.mxu0 0.0
    %1438 = vmatpush.msra.mxu0 0.0
    %1439 = vmatpush.msra.mxu0 0.0
    %1440 = vmatpush.msra.mxu0 %v455
    %1441 = vmatpush.msra.mxu0 %v454
    %1442 = vmatpush.msra.mxu0 %v453
    %1443 = vmatpush.msra.mxu0 %v452
    %1444 = vmatmul.f32.gmra.mxu0 %v1426
    %v1445 = vpop.f32.mrf.mxu0
    %v1446 = vadd.f32 0.0, %v1445
    %1447 = vdwg.mxu0
    %v1449 = vrot.slane %v1446, 2
    %v1451 = vadd.f32 %v444, %v1449
    %v1452 = vxor.u32 %v1451, 2147483648
    %v1453 = vmul.f32 %v1452, 1.442695
    %v1454 = vpow.pop %v1453
    %v1455 = vadd.f32 %v1454, 1.0
    %v1456 = vrcp.pop %v1455
    %v1457 = vmul.f32 %v1455, %v1456
    %v1458 = vsub.f32 1.0, %v1457
    %v1459 = vmul.f32 %v1456, %v1458
    %v1460 = vadd.f32 %v1456, %v1459
    %vm1461 = vweird.f32 %v1455
    %vm1462 = vweird.f32 %v1456
    %vm1463 = vmor %vm1461, %vm1462
    %v1464 = vsel %vm1463, %v1456, %v1460
    %v1465 = vand.u32 2147483647, %v1455
    %vm1466 = vcmp.eq.f32.partialorder %v1465, 8.507059e+37
    %v1467 = vand.u32 %v1455, 2147483648
    %v1468 = vor.u32 1.1754944e-38, %v1467
    %v1469 = vsel %vm1466, %v1468, %v1464
    %v1470 = vmul.f32 1.0, %v1469
    %v1471 = vtanh.pop %v1451
    %v1473 = vrot.slane %v1345, 6
    %v1475 = vmul.f32 %v1470, %v1473
    %1477 = vrot.lane.b32.xlu0 %v1471, 64
    %v1478 = vpop.permute.xlu0 %1477
    %v1480 = vmul.f32 %v1470, %v1478
    %1482 = vrot.lane.b32.xlu0 %v1480, 32
    %v1483 = vpop.permute.xlu0 %1482
    %v1485 = vadd.f32 %v1475, %v1483
    %v1486 = vtanh.pop %v1485
    %1488 = vrot.lane.b32.xlu0 %v1486, 64
    %v1489 = vpop.permute.xlu0 %1488
    %v1491 = vmul.f32 %v1470, %v1489
    %1493 = vrot.lane.b32.xlu0 %v1491, 32
    %v1494 = vpop.permute.xlu0 %1493
    %v1497 = vrot.slane %v1422, 2
    %1498 = vrot.lane.b32.xlu0 %v1497, 64
    %v1499 = vpop.permute.xlu0 %1498
    %v1501 = vsel %vm368, %v1494, %v1499
    %v1503 = vrot.slane %v1501, 6
    %v1504 = vsel %vm410, %v1503, 0
    %1506 = vmatpush.msra.mxu0 0.0
    %1507 = vmatpush.msra.mxu0 0.0
    %1508 = vmatpush.msra.mxu0 0.0
    %1509 = vmatpush.msra.mxu0 0.0
    %1510 = vmatpush.msra.mxu0 0.0
    %1511 = vmatpush.msra.mxu0 0.0
    %1512 = vmatpush.msra.mxu0 0.0
    %1513 = vmatpush.msra.mxu0 0.0
    %1514 = vmatpush.msra.mxu0 %v463
    %1515 = vmatpush.msra.mxu0 %v462
    %1516 = vmatpush.msra.mxu0 %v461
    %1517 = vmatpush.msra.mxu0 %v460
    %1518 = vmatpush.msra.mxu0 %v459
    %1519 = vmatpush.msra.mxu0 %v458
    %1520 = vmatpush.msra.mxu0 %v457
    %1521 = vmatpush.msra.mxu0 %v456
    %1522 = vmatmul.f32.gmra.mxu0 %v1504
    %v1523 = vpop.f32.mrf.mxu0
    %v1524 = vadd.f32 %v532, %v1523
    %1525 = vdwg.mxu0
    %v1526 = vxor.u32 %v1524, 2147483648
    %v1527 = vmul.f32 %v1526, 1.442695
    %v1528 = vpow.pop %v1527
    %v1529 = vadd.f32 %v1528, 1.0
    %v1530 = vrcp.pop %v1529
    %v1531 = vmul.f32 %v1529, %v1530
    %v1532 = vsub.f32 1.0, %v1531
    %v1533 = vmul.f32 %v1530, %v1532
    %v1534 = vadd.f32 %v1530, %v1533
    %vm1535 = vweird.f32 %v1529
    %vm1536 = vweird.f32 %v1530
    %vm1537 = vmor %vm1535, %vm1536
    %v1538 = vsel %vm1537, %v1530, %v1534
    %v1539 = vand.u32 2147483647, %v1529
    %vm1540 = vcmp.eq.f32.partialorder %v1539, 8.507059e+37
    %v1541 = vand.u32 %v1529, 2147483648
    %v1542 = vor.u32 1.1754944e-38, %v1541
    %v1543 = vsel %vm1540, %v1542, %v1538
    %v1544 = vmul.f32 1.0, %v1543
    %v1545 = vtanh.pop %v1524
    %v1546 = vmul.f32 %v1544, %v1416
    %1548 = vrot.lane.b32.xlu0 %v1545, 64
    %v1549 = vpop.permute.xlu0 %1548
    %v1551 = vmul.f32 %v1544, %v1549
    %1553 = vrot.lane.b32.xlu0 %v1551, 32
    %v1554 = vpop.permute.xlu0 %1553
    %v1556 = vadd.f32 %v1546, %v1554
    %v1557 = vtanh.pop %v1556
    %1559 = vrot.lane.b32.xlu0 %v1557, 64
    %v1560 = vpop.permute.xlu0 %1559
    %v1562 = vmul.f32 %v1544, %v1560
    %v1563 = vrot.slane %v1491, 6
    %1564 = vrot.lane.b32.xlu0 %v1563, 32
    %v1565 = vpop.permute.xlu0 %1564
    %v1566 = vsel %vm368, %v1565, 0
    %1568 = vmatpush.msra.mxu0 0.0
    %1569 = vmatpush.msra.mxu0 0.0
    %1570 = vmatpush.msra.mxu0 0.0
    %1571 = vmatpush.msra.mxu0 0.0
    %1572 = vmatpush.msra.mxu0 0.0
    %1573 = vmatpush.msra.mxu0 0.0
    %1574 = vmatpush.msra.mxu0 0.0
    %1575 = vmatpush.msra.mxu0 0.0
    %1576 = vmatpush.msra.mxu0 0.0
    %1577 = vmatpush.msra.mxu0 0.0
    %1578 = vmatpush.msra.mxu0 0.0
    %1579 = vmatpush.msra.mxu0 0.0
    %1580 = vmatpush.msra.mxu0 %v455
    %1581 = vmatpush.msra.mxu0 %v454
    %1582 = vmatpush.msra.mxu0 %v453
    %1583 = vmatpush.msra.mxu0 %v452
    %1584 = vmatmul.f32.gmra.mxu0 %v1566
    %v1585 = vpop.f32.mrf.mxu0
    %v1586 = vadd.f32 0.0, %v1585
    %1587 = vdwg.mxu0
    %v1588 = vadd.f32 %v447, %v1586
    %v1589 = vxor.u32 %v1588, 2147483648
    %v1590 = vmul.f32 %v1589, 1.442695
    %v1591 = vpow.pop %v1590
    %v1592 = vadd.f32 %v1591, 1.0
    %v1593 = vrcp.pop %v1592
    %v1594 = vmul.f32 %v1592, %v1593
    %v1595 = vsub.f32 1.0, %v1594
    %v1596 = vmul.f32 %v1593, %v1595
    %v1597 = vadd.f32 %v1593, %v1596
    %vm1598 = vweird.f32 %v1592
    %vm1599 = vweird.f32 %v1593
    %vm1600 = vmor %vm1598, %vm1599
    %v1601 = vsel %vm1600, %v1593, %v1597
    %v1602 = vand.u32 2147483647, %v1592
    %vm1603 = vcmp.eq.f32.partialorder %v1602, 8.507059e+37
    %v1604 = vand.u32 %v1592, 2147483648
    %v1605 = vor.u32 1.1754944e-38, %v1604
    %v1606 = vsel %vm1603, %v1605, %v1601
    %v1607 = vmul.f32 1.0, %v1606
    %v1608 = vtanh.pop %v1588
    %v1610 = vrot.slane %v1485, 6
    %v1612 = vmul.f32 %v1607, %v1610
    %1614 = vrot.lane.b32.xlu0 %v1608, 64
    %v1615 = vpop.permute.xlu0 %1614
    %v1617 = vmul.f32 %v1607, %v1615
    %1619 = vrot.lane.b32.xlu0 %v1617, 32
    %v1620 = vpop.permute.xlu0 %1619
    %v1622 = vadd.f32 %v1612, %v1620
    %v1623 = vtanh.pop %v1622
    %1625 = vrot.lane.b32.xlu0 %v1623, 64
    %v1626 = vpop.permute.xlu0 %1625
    %v1628 = vmul.f32 %v1607, %v1626
    %1630 = vrot.lane.b32.xlu0 %v1628, 32
    %v1631 = vpop.permute.xlu0 %1630
    %1634 = vrot.lane.b32.xlu0 %v1562, 64
    %v1635 = vpop.permute.xlu0 %1634
    %v1637 = vsel %vm368, %v1631, %v1635
    %v1639 = vsel %vm410, %v1637, 0
    %1641 = vmatpush.msra.mxu0 0.0
    %1642 = vmatpush.msra.mxu0 0.0
    %1643 = vmatpush.msra.mxu0 0.0
    %1644 = vmatpush.msra.mxu0 0.0
    %1645 = vmatpush.msra.mxu0 0.0
    %1646 = vmatpush.msra.mxu0 0.0
    %1647 = vmatpush.msra.mxu0 0.0
    %1648 = vmatpush.msra.mxu0 0.0
    %1649 = vmatpush.msra.mxu0 %v463
    %1650 = vmatpush.msra.mxu0 %v462
    %1651 = vmatpush.msra.mxu0 %v461
    %1652 = vmatpush.msra.mxu0 %v460
    %1653 = vmatpush.msra.mxu0 %v459
    %1654 = vmatpush.msra.mxu0 %v458
    %1655 = vmatpush.msra.mxu0 %v457
    %1656 = vmatpush.msra.mxu0 %v456
    %1657 = vmatmul.f32.gmra.mxu0 %v1639
    %v1658 = vpop.f32.mrf.mxu0
    %v1659 = vadd.f32 %v532, %v1658
    %1660 = vdwg.mxu0
    %v1661 = vxor.u32 %v1659, 2147483648
    %v1662 = vmul.f32 %v1661, 1.442695
    %v1663 = vpow.pop %v1662
    %v1664 = vadd.f32 %v1663, 1.0
    %v1665 = vrcp.pop %v1664
    %v1666 = vmul.f32 %v1664, %v1665
    %v1667 = vsub.f32 1.0, %v1666
    %v1668 = vmul.f32 %v1665, %v1667
    %v1669 = vadd.f32 %v1665, %v1668
    %vm1670 = vweird.f32 %v1664
    %vm1671 = vweird.f32 %v1665
    %vm1672 = vmor %vm1670, %vm1671
    %v1673 = vsel %vm1672, %v1665, %v1669
    %v1674 = vand.u32 2147483647, %v1664
    %vm1675 = vcmp.eq.f32.partialorder %v1674, 8.507059e+37
    %v1676 = vand.u32 %v1664, 2147483648
    %v1677 = vor.u32 1.1754944e-38, %v1676
    %v1678 = vsel %vm1675, %v1677, %v1673
    %v1679 = vmul.f32 1.0, %v1678
    %v1680 = vtanh.pop %v1659
    %v1681 = vmul.f32 %v1679, %v1556
    %1683 = vrot.lane.b32.xlu0 %v1680, 64
    %v1684 = vpop.permute.xlu0 %1683
    %v1686 = vmul.f32 %v1679, %v1684
    %1688 = vrot.lane.b32.xlu0 %v1686, 32
    %v1689 = vpop.permute.xlu0 %1688
    %v1691 = vadd.f32 %v1681, %v1689
    %v1692 = vtanh.pop %v1691
    %1694 = vrot.lane.b32.xlu0 %v1692, 64
    %v1695 = vpop.permute.xlu0 %1694
    %v1697 = vmul.f32 %v1679, %v1695
    %v1698 = vsel %vm368, %v1631, 0
    %1700 = vmatpush.msra.mxu0 0.0
    %1701 = vmatpush.msra.mxu0 0.0
    %1702 = vmatpush.msra.mxu0 0.0
    %1703 = vmatpush.msra.mxu0 0.0
    %1704 = vmatpush.msra.mxu0 0.0
    %1705 = vmatpush.msra.mxu0 0.0
    %1706 = vmatpush.msra.mxu0 0.0
    %1707 = vmatpush.msra.mxu0 0.0
    %1708 = vmatpush.msra.mxu0 0.0
    %1709 = vmatpush.msra.mxu0 0.0
    %1710 = vmatpush.msra.mxu0 0.0
    %1711 = vmatpush.msra.mxu0 0.0
    %1712 = vmatpush.msra.mxu0 %v455
    %1713 = vmatpush.msra.mxu0 %v454
    %1714 = vmatpush.msra.mxu0 %v453
    %1715 = vmatpush.msra.mxu0 %v452
    %1716 = vmatmul.f32.gmra.mxu0 %v1698
    %v1717 = vpop.f32.mrf.mxu0
    %v1718 = vadd.f32 0.0, %v1717
    %1719 = vdwg.mxu0
    %v1721 = vrot.slane %v1718, 6
    %v1723 = vadd.f32 %v447, %v1721
    %v1724 = vxor.u32 %v1723, 2147483648
    %v1725 = vmul.f32 %v1724, 1.442695
    %v1726 = vpow.pop %v1725
    %v1727 = vadd.f32 %v1726, 1.0
    %v1728 = vrcp.pop %v1727
    %v1729 = vmul.f32 %v1727, %v1728
    %v1730 = vsub.f32 1.0, %v1729
    %v1731 = vmul.f32 %v1728, %v1730
    %v1732 = vadd.f32 %v1728, %v1731
    %vm1733 = vweird.f32 %v1727
    %vm1734 = vweird.f32 %v1728
    %vm1735 = vmor %vm1733, %vm1734
    %v1736 = vsel %vm1735, %v1728, %v1732
    %v1737 = vand.u32 2147483647, %v1727
    %vm1738 = vcmp.eq.f32.partialorder %v1737, 8.507059e+37
    %v1739 = vand.u32 %v1727, 2147483648
    %v1740 = vor.u32 1.1754944e-38, %v1739
    %v1741 = vsel %vm1738, %v1740, %v1736
    %v1742 = vmul.f32 1.0, %v1741
    %v1743 = vtanh.pop %v1723
    %v1745 = vrot.slane %v1622, 6
    %v1747 = vmul.f32 %v1742, %v1745
    %1749 = vrot.lane.b32.xlu0 %v1743, 64
    %v1750 = vpop.permute.xlu0 %1749
    %v1752 = vmul.f32 %v1742, %v1750
    %1754 = vrot.lane.b32.xlu0 %v1752, 32
    %v1755 = vpop.permute.xlu0 %1754
    %v1757 = vadd.f32 %v1747, %v1755
    %v1758 = vtanh.pop %v1757
    %1760 = vrot.lane.b32.xlu0 %v1758, 64
    %v1761 = vpop.permute.xlu0 %1760
    %v1763 = vmul.f32 %v1742, %v1761
    %1765 = vrot.lane.b32.xlu0 %v1763, 32
    %v1766 = vpop.permute.xlu0 %1765
    %v1769 = vrot.slane %v1697, 6
    %1770 = vrot.lane.b32.xlu0 %v1769, 64
    %v1771 = vpop.permute.xlu0 %1770
    %v1773 = vsel %vm368, %v1766, %v1771
    %v1775 = vrot.slane %v1773, 2
    %v1776 = vsel %vm410, %v1775, 0
    %1778 = vmatpush.msra.mxu0 0.0
    %1779 = vmatpush.msra.mxu0 0.0
    %1780 = vmatpush.msra.mxu0 0.0
    %1781 = vmatpush.msra.mxu0 0.0
    %1782 = vmatpush.msra.mxu0 0.0
    %1783 = vmatpush.msra.mxu0 0.0
    %1784 = vmatpush.msra.mxu0 0.0
    %1785 = vmatpush.msra.mxu0 0.0
    %1786 = vmatpush.msra.mxu0 %v463
    %1787 = vmatpush.msra.mxu0 %v462
    %1788 = vmatpush.msra.mxu0 %v461
    %1789 = vmatpush.msra.mxu0 %v460
    %1790 = vmatpush.msra.mxu0 %v459
    %1791 = vmatpush.msra.mxu0 %v458
    %1792 = vmatpush.msra.mxu0 %v457
    %1793 = vmatpush.msra.mxu0 %v456
    %1794 = vmatmul.f32.gmra.mxu0 %v1776
    %v1795 = vpop.f32.mrf.mxu0
    %v1796 = vadd.f32 %v532, %v1795
    %1797 = vdwg.mxu0
    %v1798 = vxor.u32 %v1796, 2147483648
    %v1799 = vmul.f32 %v1798, 1.442695
    %v1800 = vpow.pop %v1799
    %v1801 = vadd.f32 %v1800, 1.0
    %v1802 = vrcp.pop %v1801
    %v1803 = vmul.f32 %v1801, %v1802
    %v1804 = vsub.f32 1.0, %v1803
    %v1805 = vmul.f32 %v1802, %v1804
    %v1806 = vadd.f32 %v1802, %v1805
    %vm1807 = vweird.f32 %v1801
    %vm1808 = vweird.f32 %v1802
    %vm1809 = vmor %vm1807, %vm1808
    %v1810 = vsel %vm1809, %v1802, %v1806
    %v1811 = vand.u32 2147483647, %v1801
    %vm1812 = vcmp.eq.f32.partialorder %v1811, 8.507059e+37
    %v1813 = vand.u32 %v1801, 2147483648
    %v1814 = vor.u32 1.1754944e-38, %v1813
    %v1815 = vsel %vm1812, %v1814, %v1810
    %v1816 = vmul.f32 1.0, %v1815
    %v1817 = vtanh.pop %v1796
    %v1818 = vmul.f32 %v1816, %v1691
    %1820 = vrot.lane.b32.xlu0 %v1817, 64
    %v1821 = vpop.permute.xlu0 %1820
    %v1823 = vmul.f32 %v1816, %v1821
    %1825 = vrot.lane.b32.xlu0 %v1823, 32
    %v1826 = vpop.permute.xlu0 %1825
    %v1828 = vadd.f32 %v1818, %v1826
    %v1829 = vtanh.pop %v1828
    %1831 = vrot.lane.b32.xlu0 %v1829, 64
    %v1832 = vpop.permute.xlu0 %1831
    %v1834 = vmul.f32 %v1816, %v1832
    %v1835 = vrot.slane %v1763, 2
    %1836 = vrot.lane.b32.xlu0 %v1835, 32
    %v1837 = vpop.permute.xlu0 %1836
    %v1838 = vsel %vm368, %v1837, 0
    %1840 = vmatpush.msra.mxu0 0.0
    %1841 = vmatpush.msra.mxu0 0.0
    %1842 = vmatpush.msra.mxu0 0.0
    %1843 = vmatpush.msra.mxu0 0.0
    %1844 = vmatpush.msra.mxu0 0.0
    %1845 = vmatpush.msra.mxu0 0.0
    %1846 = vmatpush.msra.mxu0 0.0
    %1847 = vmatpush.msra.mxu0 0.0
    %1848 = vmatpush.msra.mxu0 0.0
    %1849 = vmatpush.msra.mxu0 0.0
    %1850 = vmatpush.msra.mxu0 0.0
    %1851 = vmatpush.msra.mxu0 0.0
    %1852 = vmatpush.msra.mxu0 %v455
    %1853 = vmatpush.msra.mxu0 %v454
    %1854 = vmatpush.msra.mxu0 %v453
    %1855 = vmatpush.msra.mxu0 %v452
    %1856 = vmatmul.f32.gmra.mxu0 %v1838
    %v1857 = vpop.f32.mrf.mxu0
    %v1858 = vadd.f32 0.0, %v1857
    %1859 = vdwg.mxu0
    %v1861 = vrot.slane %v1858, 4
    %v1863 = vadd.f32 %v447, %v1861
    %v1864 = vxor.u32 %v1863, 2147483648
    %v1865 = vmul.f32 %v1864, 1.442695
    %v1866 = vpow.pop %v1865
    %v1867 = vadd.f32 %v1866, 1.0
    %v1868 = vrcp.pop %v1867
    %v1869 = vmul.f32 %v1867, %v1868
    %v1870 = vsub.f32 1.0, %v1869
    %v1871 = vmul.f32 %v1868, %v1870
    %v1872 = vadd.f32 %v1868, %v1871
    %vm1873 = vweird.f32 %v1867
    %vm1874 = vweird.f32 %v1868
    %vm1875 = vmor %vm1873, %vm1874
    %v1876 = vsel %vm1875, %v1868, %v1872
    %v1877 = vand.u32 2147483647, %v1867
    %vm1878 = vcmp.eq.f32.partialorder %v1877, 8.507059e+37
    %v1879 = vand.u32 %v1867, 2147483648
    %v1880 = vor.u32 1.1754944e-38, %v1879
    %v1881 = vsel %vm1878, %v1880, %v1876
    %v1882 = vmul.f32 1.0, %v1881
    %v1883 = vtanh.pop %v1863
    %v1885 = vrot.slane %v1757, 6
    %v1887 = vmul.f32 %v1882, %v1885
    %1889 = vrot.lane.b32.xlu0 %v1883, 64
    %v1890 = vpop.permute.xlu0 %1889
    %v1892 = vmul.f32 %v1882, %v1890
    %1894 = vrot.lane.b32.xlu0 %v1892, 32
    %v1895 = vpop.permute.xlu0 %1894
    %v1897 = vadd.f32 %v1887, %v1895
    %v1898 = vtanh.pop %v1897
    %1900 = vrot.lane.b32.xlu0 %v1898, 64
    %v1901 = vpop.permute.xlu0 %1900
    %v1903 = vmul.f32 %v1882, %v1901
    %1905 = vrot.lane.b32.xlu0 %v1903, 32
    %v1906 = vpop.permute.xlu0 %1905
    %v1909 = vrot.slane %v1834, 4
    %1910 = vrot.lane.b32.xlu0 %v1909, 64
    %v1911 = vpop.permute.xlu0 %1910
    %v1913 = vsel %vm368, %v1906, %v1911
    %v1915 = vrot.slane %v1913, 4
    %v1916 = vsel %vm410, %v1915, 0
    %1918 = vmatpush.msra.mxu0 0.0
    %1919 = vmatpush.msra.mxu0 0.0
    %1920 = vmatpush.msra.mxu0 0.0
    %1921 = vmatpush.msra.mxu0 0.0
    %1922 = vmatpush.msra.mxu0 0.0
    %1923 = vmatpush.msra.mxu0 0.0
    %1924 = vmatpush.msra.mxu0 0.0
    %1925 = vmatpush.msra.mxu0 0.0
    %1926 = vmatpush.msra.mxu0 %v463
    %1927 = vmatpush.msra.mxu0 %v462
    %1928 = vmatpush.msra.mxu0 %v461
    %1929 = vmatpush.msra.mxu0 %v460
    %1930 = vmatpush.msra.mxu0 %v459
    %1931 = vmatpush.msra.mxu0 %v458
    %1932 = vmatpush.msra.mxu0 %v457
    %1933 = vmatpush.msra.mxu0 %v456
    %1934 = vmatmul.f32.gmra.mxu0 %v1916
    %v1935 = vpop.f32.mrf.mxu0
    %v1936 = vadd.f32 %v532, %v1935
    %1937 = vdwg.mxu0
    %v1938 = vxor.u32 %v1936, 2147483648
    %v1939 = vmul.f32 %v1938, 1.442695
    %v1940 = vpow.pop %v1939
    %v1941 = vadd.f32 %v1940, 1.0
    %v1942 = vrcp.pop %v1941
    %v1943 = vmul.f32 %v1941, %v1942
    %v1944 = vsub.f32 1.0, %v1943
    %v1945 = vmul.f32 %v1942, %v1944
    %v1946 = vadd.f32 %v1942, %v1945
    %vm1947 = vweird.f32 %v1941
    %vm1948 = vweird.f32 %v1942
    %vm1949 = vmor %vm1947, %vm1948
    %v1950 = vsel %vm1949, %v1942, %v1946
    %v1951 = vand.u32 2147483647, %v1941
    %vm1952 = vcmp.eq.f32.partialorder %v1951, 8.507059e+37
    %v1953 = vand.u32 %v1941, 2147483648
    %v1954 = vor.u32 1.1754944e-38, %v1953
    %v1955 = vsel %vm1952, %v1954, %v1950
    %v1956 = vmul.f32 1.0, %v1955
    %v1957 = vtanh.pop %v1936
    %v1958 = vmul.f32 %v1956, %v1828
    %1960 = vrot.lane.b32.xlu0 %v1957, 64
    %v1961 = vpop.permute.xlu0 %1960
    %v1963 = vmul.f32 %v1956, %v1961
    %1965 = vrot.lane.b32.xlu0 %v1963, 32
    %v1966 = vpop.permute.xlu0 %1965
    %v1968 = vadd.f32 %v1958, %v1966
    %v1969 = vtanh.pop %v1968
    %1971 = vrot.lane.b32.xlu0 %v1969, 64
    %v1972 = vpop.permute.xlu0 %1971
    %v1974 = vmul.f32 %v1956, %v1972
    %v1975 = vrot.slane %v1903, 4
    %1976 = vrot.lane.b32.xlu0 %v1975, 32
    %v1977 = vpop.permute.xlu0 %1976
    %v1978 = vsel %vm368, %v1977, 0
    %1980 = vmatpush.msra.mxu0 0.0
    %1981 = vmatpush.msra.mxu0 0.0
    %1982 = vmatpush.msra.mxu0 0.0
    %1983 = vmatpush.msra.mxu0 0.0
    %1984 = vmatpush.msra.mxu0 0.0
    %1985 = vmatpush.msra.mxu0 0.0
    %1986 = vmatpush.msra.mxu0 0.0
    %1987 = vmatpush.msra.mxu0 0.0
    %1988 = vmatpush.msra.mxu0 0.0
    %1989 = vmatpush.msra.mxu0 0.0
    %1990 = vmatpush.msra.mxu0 0.0
    %1991 = vmatpush.msra.mxu0 0.0
    %1992 = vmatpush.msra.mxu0 %v455
    %1993 = vmatpush.msra.mxu0 %v454
    %1994 = vmatpush.msra.mxu0 %v453
    %1995 = vmatpush.msra.mxu0 %v452
    %1996 = vmatmul.f32.gmra.mxu0 %v1978
    %v1997 = vpop.f32.mrf.mxu0
    %v1998 = vadd.f32 0.0, %v1997
    %1999 = vdwg.mxu0
    %v2001 = vrot.slane %v1998, 2
    %v2003 = vadd.f32 %v447, %v2001
    %v2004 = vxor.u32 %v2003, 2147483648
    %v2005 = vmul.f32 %v2004, 1.442695
    %v2006 = vpow.pop %v2005
    %v2007 = vadd.f32 %v2006, 1.0
    %v2008 = vrcp.pop %v2007
    %v2009 = vmul.f32 %v2007, %v2008
    %v2010 = vsub.f32 1.0, %v2009
    %v2011 = vmul.f32 %v2008, %v2010
    %v2012 = vadd.f32 %v2008, %v2011
    %vm2013 = vweird.f32 %v2007
    %vm2014 = vweird.f32 %v2008
    %vm2015 = vmor %vm2013, %vm2014
    %v2016 = vsel %vm2015, %v2008, %v2012
    %v2017 = vand.u32 2147483647, %v2007
    %vm2018 = vcmp.eq.f32.partialorder %v2017, 8.507059e+37
    %v2019 = vand.u32 %v2007, 2147483648
    %v2020 = vor.u32 1.1754944e-38, %v2019
    %v2021 = vsel %vm2018, %v2020, %v2016
    %v2022 = vmul.f32 1.0, %v2021
    %v2023 = vtanh.pop %v2003
    %v2025 = vrot.slane %v1897, 6
    %v2027 = vmul.f32 %v2022, %v2025
    %2029 = vrot.lane.b32.xlu0 %v2023, 64
    %v2030 = vpop.permute.xlu0 %2029
    %v2032 = vmul.f32 %v2022, %v2030
    %2034 = vrot.lane.b32.xlu0 %v2032, 32
    %v2035 = vpop.permute.xlu0 %2034
    %v2037 = vadd.f32 %v2027, %v2035
    %v2038 = vtanh.pop %v2037
    %2040 = vrot.lane.b32.xlu0 %v2038, 64
    %v2041 = vpop.permute.xlu0 %2040
    %v2043 = vmul.f32 %v2022, %v2041
    %2045 = vrot.lane.b32.xlu0 %v2043, 32
    %v2046 = vpop.permute.xlu0 %2045
    %v2049 = vrot.slane %v1974, 2
    %2050 = vrot.lane.b32.xlu0 %v2049, 64
    %v2051 = vpop.permute.xlu0 %2050
    %v2053 = vsel %vm368, %v2046, %v2051
    %v2055 = vrot.slane %v2053, 6
    %v2056 = vsel %vm410, %v2055, 0
    %2058 = vmatpush.msra.mxu0 0.0
    %2059 = vmatpush.msra.mxu0 0.0
    %2060 = vmatpush.msra.mxu0 0.0
    %2061 = vmatpush.msra.mxu0 0.0
    %2062 = vmatpush.msra.mxu0 0.0
    %2063 = vmatpush.msra.mxu0 0.0
    %2064 = vmatpush.msra.mxu0 0.0
    %2065 = vmatpush.msra.mxu0 0.0
    %2066 = vmatpush.msra.mxu0 %v463
    %2067 = vmatpush.msra.mxu0 %v462
    %2068 = vmatpush.msra.mxu0 %v461
    %2069 = vmatpush.msra.mxu0 %v460
    %2070 = vmatpush.msra.mxu0 %v459
    %2071 = vmatpush.msra.mxu0 %v458
    %2072 = vmatpush.msra.mxu0 %v457
    %2073 = vmatpush.msra.mxu0 %v456
    %2074 = vmatmul.f32.gmra.mxu0 %v2056
    %v2075 = vpop.f32.mrf.mxu0
    %v2076 = vadd.f32 %v532, %v2075
    %2077 = vdwg.mxu0
    %v2078 = vxor.u32 %v2076, 2147483648
    %v2079 = vmul.f32 %v2078, 1.442695
    %v2080 = vpow.pop %v2079
    %v2081 = vadd.f32 %v2080, 1.0
    %v2082 = vrcp.pop %v2081
    %v2083 = vmul.f32 %v2081, %v2082
    %v2084 = vsub.f32 1.0, %v2083
    %v2085 = vmul.f32 %v2082, %v2084
    %v2086 = vadd.f32 %v2082, %v2085
    %vm2087 = vweird.f32 %v2081
    %vm2088 = vweird.f32 %v2082
    %vm2089 = vmor %vm2087, %vm2088
    %v2090 = vsel %vm2089, %v2082, %v2086
    %v2091 = vand.u32 2147483647, %v2081
    %vm2092 = vcmp.eq.f32.partialorder %v2091, 8.507059e+37
    %v2093 = vand.u32 %v2081, 2147483648
    %v2094 = vor.u32 1.1754944e-38, %v2093
    %v2095 = vsel %vm2092, %v2094, %v2090
    %v2096 = vmul.f32 1.0, %v2095
    %v2097 = vtanh.pop %v2076
    %v2098 = vmul.f32 %v2096, %v1968
    %2100 = vrot.lane.b32.xlu0 %v2097, 64
    %v2101 = vpop.permute.xlu0 %2100
    %v2103 = vmul.f32 %v2096, %v2101
    %2105 = vrot.lane.b32.xlu0 %v2103, 32
    %v2106 = vpop.permute.xlu0 %2105
    %v2108 = vadd.f32 %v2098, %v2106
    %v2109 = vtanh.pop %v2108
    %2111 = vrot.lane.b32.xlu0 %v2109, 64
    %v2112 = vpop.permute.xlu0 %2111
    %v2114 = vmul.f32 %v2096, %v2112
    %v2115 = vrot.slane %v2043, 6
    %2116 = vrot.lane.b32.xlu0 %v2115, 32
    %v2117 = vpop.permute.xlu0 %2116
    %v2118 = vsel %vm368, %v2117, 0
    %2120 = vmatpush.msra.mxu0 0.0
    %2121 = vmatpush.msra.mxu0 0.0
    %2122 = vmatpush.msra.mxu0 0.0
    %2123 = vmatpush.msra.mxu0 0.0
    %2124 = vmatpush.msra.mxu0 0.0
    %2125 = vmatpush.msra.mxu0 0.0
    %2126 = vmatpush.msra.mxu0 0.0
    %2127 = vmatpush.msra.mxu0 0.0
    %2128 = vmatpush.msra.mxu0 0.0
    %2129 = vmatpush.msra.mxu0 0.0
    %2130 = vmatpush.msra.mxu0 0.0
    %2131 = vmatpush.msra.mxu0 0.0
    %2132 = vmatpush.msra.mxu0 %v455
    %2133 = vmatpush.msra.mxu0 %v454
    %2134 = vmatpush.msra.mxu0 %v453
    %2135 = vmatpush.msra.mxu0 %v452
    %2136 = vmatmul.f32.gmra.mxu0 %v2118
    %v2137 = vpop.f32.mrf.mxu0
    %v2138 = vadd.f32 0.0, %v2137
    %2139 = vdwg.mxu0
    %v2140 = vadd.f32 %v450, %v2138
    %v2141 = vxor.u32 %v2140, 2147483648
    %v2142 = vmul.f32 %v2141, 1.442695
    %v2143 = vpow.pop %v2142
    %v2144 = vadd.f32 %v2143, 1.0
    %v2145 = vrcp.pop %v2144
    %v2146 = vmul.f32 %v2144, %v2145
    %v2147 = vsub.f32 1.0, %v2146
    %v2148 = vmul.f32 %v2145, %v2147
    %v2149 = vadd.f32 %v2145, %v2148
    %vm2150 = vweird.f32 %v2144
    %vm2151 = vweird.f32 %v2145
    %vm2152 = vmor %vm2150, %vm2151
    %v2153 = vsel %vm2152, %v2145, %v2149
    %v2154 = vand.u32 2147483647, %v2144
    %vm2155 = vcmp.eq.f32.partialorder %v2154, 8.507059e+37
    %v2156 = vand.u32 %v2144, 2147483648
    %v2157 = vor.u32 1.1754944e-38, %v2156
    %v2158 = vsel %vm2155, %v2157, %v2153
    %v2159 = vmul.f32 1.0, %v2158
    %v2160 = vtanh.pop %v2140
    %v2162 = vrot.slane %v2037, 6
    %v2164 = vmul.f32 %v2159, %v2162
    %2166 = vrot.lane.b32.xlu0 %v2160, 64
    %v2167 = vpop.permute.xlu0 %2166
    %v2169 = vmul.f32 %v2159, %v2167
    %2171 = vrot.lane.b32.xlu0 %v2169, 32
    %v2172 = vpop.permute.xlu0 %2171
    %v2174 = vadd.f32 %v2164, %v2172
    %v2175 = vtanh.pop %v2174
    %2177 = vrot.lane.b32.xlu0 %v2175, 64
    %v2178 = vpop.permute.xlu0 %2177
    %v2180 = vmul.f32 %v2159, %v2178
    %2182 = vrot.lane.b32.xlu0 %v2180, 32
    %v2183 = vpop.permute.xlu0 %2182
    %2186 = vrot.lane.b32.xlu0 %v2114, 64
    %v2187 = vpop.permute.xlu0 %2186
    %v2189 = vsel %vm368, %v2183, %v2187
    %v2191 = vsel %vm410, %v2189, 0
    %2193 = vmatpush.msra.mxu0 0.0
    %2194 = vmatpush.msra.mxu0 0.0
    %2195 = vmatpush.msra.mxu0 0.0
    %2196 = vmatpush.msra.mxu0 0.0
    %2197 = vmatpush.msra.mxu0 0.0
    %2198 = vmatpush.msra.mxu0 0.0
    %2199 = vmatpush.msra.mxu0 0.0
    %2200 = vmatpush.msra.mxu0 0.0
    %2201 = vmatpush.msra.mxu0 %v463
    %2202 = vmatpush.msra.mxu0 %v462
    %2203 = vmatpush.msra.mxu0 %v461
    %2204 = vmatpush.msra.mxu0 %v460
    %2205 = vmatpush.msra.mxu0 %v459
    %2206 = vmatpush.msra.mxu0 %v458
    %2207 = vmatpush.msra.mxu0 %v457
    %2208 = vmatpush.msra.mxu0 %v456
    %2209 = vmatmul.f32.gmra.mxu0 %v2191
    %v2210 = vpop.f32.mrf.mxu0
    %v2211 = vadd.f32 %v532, %v2210
    %2212 = vdwg.mxu0
    %v2213 = vxor.u32 %v2211, 2147483648
    %v2214 = vmul.f32 %v2213, 1.442695
    %v2215 = vpow.pop %v2214
    %v2216 = vadd.f32 %v2215, 1.0
    %v2217 = vrcp.pop %v2216
    %v2218 = vmul.f32 %v2216, %v2217
    %v2219 = vsub.f32 1.0, %v2218
    %v2220 = vmul.f32 %v2217, %v2219
    %v2221 = vadd.f32 %v2217, %v2220
    %vm2222 = vweird.f32 %v2216
    %vm2223 = vweird.f32 %v2217
    %vm2224 = vmor %vm2222, %vm2223
    %v2225 = vsel %vm2224, %v2217, %v2221
    %v2226 = vand.u32 2147483647, %v2216
    %vm2227 = vcmp.eq.f32.partialorder %v2226, 8.507059e+37
    %v2228 = vand.u32 %v2216, 2147483648
    %v2229 = vor.u32 1.1754944e-38, %v2228
    %v2230 = vsel %vm2227, %v2229, %v2225
    %v2231 = vmul.f32 1.0, %v2230
    %v2232 = vtanh.pop %v2211
    %v2233 = vmul.f32 %v2231, %v2108
    %2235 = vrot.lane.b32.xlu0 %v2232, 64
    %v2236 = vpop.permute.xlu0 %2235
    %v2238 = vmul.f32 %v2231, %v2236
    %2240 = vrot.lane.b32.xlu0 %v2238, 32
    %v2241 = vpop.permute.xlu0 %2240
    %v2243 = vadd.f32 %v2233, %v2241
    %v2244 = vtanh.pop %v2243
    %2246 = vrot.lane.b32.xlu0 %v2244, 64
    %v2247 = vpop.permute.xlu0 %2246
    %v2249 = vmul.f32 %v2231, %v2247
    %v2250 = vsel %vm368, %v2183, 0
    %2252 = vmatpush.msra.mxu0 0.0
    %2253 = vmatpush.msra.mxu0 0.0
    %2254 = vmatpush.msra.mxu0 0.0
    %2255 = vmatpush.msra.mxu0 0.0
    %2256 = vmatpush.msra.mxu0 0.0
    %2257 = vmatpush.msra.mxu0 0.0
    %2258 = vmatpush.msra.mxu0 0.0
    %2259 = vmatpush.msra.mxu0 0.0
    %2260 = vmatpush.msra.mxu0 0.0
    %2261 = vmatpush.msra.mxu0 0.0
    %2262 = vmatpush.msra.mxu0 0.0
    %2263 = vmatpush.msra.mxu0 0.0
    %2264 = vmatpush.msra.mxu0 %v455
    %2265 = vmatpush.msra.mxu0 %v454
    %2266 = vmatpush.msra.mxu0 %v453
    %2267 = vmatpush.msra.mxu0 %v452
    %2268 = vmatmul.f32.gmra.mxu0 %v2250
    %v2269 = vpop.f32.mrf.mxu0
    %v2270 = vadd.f32 0.0, %v2269
    %2271 = vdwg.mxu0
    %v2273 = vrot.slane %v2270, 6
    %v2275 = vadd.f32 %v450, %v2273
    %v2276 = vxor.u32 %v2275, 2147483648
    %v2277 = vmul.f32 %v2276, 1.442695
    %v2278 = vpow.pop %v2277
    %v2279 = vadd.f32 %v2278, 1.0
    %v2280 = vrcp.pop %v2279
    %v2281 = vmul.f32 %v2279, %v2280
    %v2282 = vsub.f32 1.0, %v2281
    %v2283 = vmul.f32 %v2280, %v2282
    %v2284 = vadd.f32 %v2280, %v2283
    %vm2285 = vweird.f32 %v2279
    %vm2286 = vweird.f32 %v2280
    %vm2287 = vmor %vm2285, %vm2286
    %v2288 = vsel %vm2287, %v2280, %v2284
    %v2289 = vand.u32 2147483647, %v2279
    %vm2290 = vcmp.eq.f32.partialorder %v2289, 8.507059e+37
    %v2291 = vand.u32 %v2279, 2147483648
    %v2292 = vor.u32 1.1754944e-38, %v2291
    %v2293 = vsel %vm2290, %v2292, %v2288
    %v2294 = vmul.f32 1.0, %v2293
    %v2295 = vtanh.pop %v2275
    %v2297 = vrot.slane %v2174, 6
    %v2299 = vmul.f32 %v2294, %v2297
    %2301 = vrot.lane.b32.xlu0 %v2295, 64
    %v2302 = vpop.permute.xlu0 %2301
    %v2304 = vmul.f32 %v2294, %v2302
    %2306 = vrot.lane.b32.xlu0 %v2304, 32
    %v2307 = vpop.permute.xlu0 %2306
    %v2309 = vadd.f32 %v2299, %v2307
    %v2310 = vtanh.pop %v2309
    %2312 = vrot.lane.b32.xlu0 %v2310, 64
    %v2313 = vpop.permute.xlu0 %2312
    %v2315 = vmul.f32 %v2294, %v2313
    %2317 = vrot.lane.b32.xlu0 %v2315, 32
    %v2318 = vpop.permute.xlu0 %2317
    %v2321 = vrot.slane %v2249, 6
    %2322 = vrot.lane.b32.xlu0 %v2321, 64
    %v2323 = vpop.permute.xlu0 %2322
    %v2325 = vsel %vm368, %v2318, %v2323
    %v2327 = vrot.slane %v2325, 2
    %v2328 = vsel %vm410, %v2327, 0
    %2330 = vmatpush.msra.mxu0 0.0
    %2331 = vmatpush.msra.mxu0 0.0
    %2332 = vmatpush.msra.mxu0 0.0
    %2333 = vmatpush.msra.mxu0 0.0
    %2334 = vmatpush.msra.mxu0 0.0
    %2335 = vmatpush.msra.mxu0 0.0
    %2336 = vmatpush.msra.mxu0 0.0
    %2337 = vmatpush.msra.mxu0 0.0
    %2338 = vmatpush.msra.mxu0 %v463
    %2339 = vmatpush.msra.mxu0 %v462
    %2340 = vmatpush.msra.mxu0 %v461
    %2341 = vmatpush.msra.mxu0 %v460
    %2342 = vmatpush.msra.mxu0 %v459
    %2343 = vmatpush.msra.mxu0 %v458
    %2344 = vmatpush.msra.mxu0 %v457
    %2345 = vmatpush.msra.mxu0 %v456
    %2346 = vmatmul.f32.gmra.mxu0 %v2328
    %v2347 = vpop.f32.mrf.mxu0
    %v2348 = vadd.f32 %v532, %v2347
    %2349 = vdwg.mxu0
    %v2350 = vxor.u32 %v2348, 2147483648
    %v2351 = vmul.f32 %v2350, 1.442695
    %v2352 = vpow.pop %v2351
    %v2353 = vadd.f32 %v2352, 1.0
    %v2354 = vrcp.pop %v2353
    %v2355 = vmul.f32 %v2353, %v2354
    %v2356 = vsub.f32 1.0, %v2355
    %v2357 = vmul.f32 %v2354, %v2356
    %v2358 = vadd.f32 %v2354, %v2357
    %vm2359 = vweird.f32 %v2353
    %vm2360 = vweird.f32 %v2354
    %vm2361 = vmor %vm2359, %vm2360
    %v2362 = vsel %vm2361, %v2354, %v2358
    %v2363 = vand.u32 2147483647, %v2353
    %vm2364 = vcmp.eq.f32.partialorder %v2363, 8.507059e+37
    %v2365 = vand.u32 %v2353, 2147483648
    %v2366 = vor.u32 1.1754944e-38, %v2365
    %v2367 = vsel %vm2364, %v2366, %v2362
    %v2368 = vmul.f32 1.0, %v2367
    %v2369 = vtanh.pop %v2348
    %v2370 = vmul.f32 %v2368, %v2243
    %2372 = vrot.lane.b32.xlu0 %v2369, 64
    %v2373 = vpop.permute.xlu0 %2372
    %v2375 = vmul.f32 %v2368, %v2373
    %2377 = vrot.lane.b32.xlu0 %v2375, 32
    %v2378 = vpop.permute.xlu0 %2377
    %v2380 = vadd.f32 %v2370, %v2378
    %v2381 = vtanh.pop %v2380
    %2383 = vrot.lane.b32.xlu0 %v2381, 64
    %v2384 = vpop.permute.xlu0 %2383
    %v2386 = vmul.f32 %v2368, %v2384
    %v2387 = vrot.slane %v2315, 2
    %2388 = vrot.lane.b32.xlu0 %v2387, 32
    %v2389 = vpop.permute.xlu0 %2388
    %v2390 = vsel %vm368, %v2389, 0
    %2392 = vmatpush.msra.mxu0 0.0
    %2393 = vmatpush.msra.mxu0 0.0
    %2394 = vmatpush.msra.mxu0 0.0
    %2395 = vmatpush.msra.mxu0 0.0
    %2396 = vmatpush.msra.mxu0 0.0
    %2397 = vmatpush.msra.mxu0 0.0
    %2398 = vmatpush.msra.mxu0 0.0
    %2399 = vmatpush.msra.mxu0 0.0
    %2400 = vmatpush.msra.mxu0 0.0
    %2401 = vmatpush.msra.mxu0 0.0
    %2402 = vmatpush.msra.mxu0 0.0
    %2403 = vmatpush.msra.mxu0 0.0
    %2404 = vmatpush.msra.mxu0 %v455
    %2405 = vmatpush.msra.mxu0 %v454
    %2406 = vmatpush.msra.mxu0 %v453
    %2407 = vmatpush.msra.mxu0 %v452
    %2408 = vmatmul.f32.gmra.mxu0 %v2390
    %v2409 = vpop.f32.mrf.mxu0
    %v2410 = vadd.f32 0.0, %v2409
    %2411 = vdwg.mxu0
    %v2413 = vrot.slane %v2410, 4
    %v2415 = vadd.f32 %v450, %v2413
    %v2416 = vxor.u32 %v2415, 2147483648
    %v2417 = vmul.f32 %v2416, 1.442695
    %v2418 = vpow.pop %v2417
    %v2419 = vadd.f32 %v2418, 1.0
    %v2420 = vrcp.pop %v2419
    %v2421 = vmul.f32 %v2419, %v2420
    %v2422 = vsub.f32 1.0, %v2421
    %v2423 = vmul.f32 %v2420, %v2422
    %v2424 = vadd.f32 %v2420, %v2423
    %vm2425 = vweird.f32 %v2419
    %vm2426 = vweird.f32 %v2420
    %vm2427 = vmor %vm2425, %vm2426
    %v2428 = vsel %vm2427, %v2420, %v2424
    %v2429 = vand.u32 2147483647, %v2419
    %vm2430 = vcmp.eq.f32.partialorder %v2429, 8.507059e+37
    %v2431 = vand.u32 %v2419, 2147483648
    %v2432 = vor.u32 1.1754944e-38, %v2431
    %v2433 = vsel %vm2430, %v2432, %v2428
    %v2434 = vmul.f32 1.0, %v2433
    %v2435 = vtanh.pop %v2415
    %v2437 = vrot.slane %v2309, 6
    %v2439 = vmul.f32 %v2434, %v2437
    %2441 = vrot.lane.b32.xlu0 %v2435, 64
    %v2442 = vpop.permute.xlu0 %2441
    %v2444 = vmul.f32 %v2434, %v2442
    %2446 = vrot.lane.b32.xlu0 %v2444, 32
    %v2447 = vpop.permute.xlu0 %2446
    %v2449 = vadd.f32 %v2439, %v2447
    %v2450 = vtanh.pop %v2449
    %2452 = vrot.lane.b32.xlu0 %v2450, 64
    %v2453 = vpop.permute.xlu0 %2452
    %v2455 = vmul.f32 %v2434, %v2453
    %2457 = vrot.lane.b32.xlu0 %v2455, 32
    %v2458 = vpop.permute.xlu0 %2457
    %v2461 = vrot.slane %v2386, 4
    %2462 = vrot.lane.b32.xlu0 %v2461, 64
    %v2463 = vpop.permute.xlu0 %2462
    %v2465 = vsel %vm368, %v2458, %v2463
    %v2467 = vrot.slane %v2465, 4
    %v2468 = vsel %vm410, %v2467, 0
    %2470 = vmatpush.msra.mxu0 0.0
    %2471 = vmatpush.msra.mxu0 0.0
    %2472 = vmatpush.msra.mxu0 0.0
    %2473 = vmatpush.msra.mxu0 0.0
    %2474 = vmatpush.msra.mxu0 0.0
    %2475 = vmatpush.msra.mxu0 0.0
    %2476 = vmatpush.msra.mxu0 0.0
    %2477 = vmatpush.msra.mxu0 0.0
    %2478 = vmatpush.msra.mxu0 %v463
    %2479 = vmatpush.msra.mxu0 %v462
    %2480 = vmatpush.msra.mxu0 %v461
    %2481 = vmatpush.msra.mxu0 %v460
    %2482 = vmatpush.msra.mxu0 %v459
    %2483 = vmatpush.msra.mxu0 %v458
    %2484 = vmatpush.msra.mxu0 %v457
    %2485 = vmatpush.msra.mxu0 %v456
    %2486 = vmatmul.f32.gmra.mxu0 %v2468
    %v2487 = vpop.f32.mrf.mxu0
    %v2488 = vadd.f32 %v532, %v2487
    %2489 = vdwg.mxu0
    %v2490 = vxor.u32 %v2488, 2147483648
    %v2491 = vmul.f32 %v2490, 1.442695
    %v2492 = vpow.pop %v2491
    %v2493 = vadd.f32 %v2492, 1.0
    %v2494 = vrcp.pop %v2493
    %v2495 = vmul.f32 %v2493, %v2494
    %v2496 = vsub.f32 1.0, %v2495
    %v2497 = vmul.f32 %v2494, %v2496
    %v2498 = vadd.f32 %v2494, %v2497
    %vm2499 = vweird.f32 %v2493
    %vm2500 = vweird.f32 %v2494
    %vm2501 = vmor %vm2499, %vm2500
    %v2502 = vsel %vm2501, %v2494, %v2498
    %v2503 = vand.u32 2147483647, %v2493
    %vm2504 = vcmp.eq.f32.partialorder %v2503, 8.507059e+37
    %v2505 = vand.u32 %v2493, 2147483648
    %v2506 = vor.u32 1.1754944e-38, %v2505
    %v2507 = vsel %vm2504, %v2506, %v2502
    %v2508 = vmul.f32 1.0, %v2507
    %v2509 = vtanh.pop %v2488
    %v2510 = vmul.f32 %v2508, %v2380
    %2512 = vrot.lane.b32.xlu0 %v2509, 64
    %v2513 = vpop.permute.xlu0 %2512
    %v2515 = vmul.f32 %v2508, %v2513
    %2517 = vrot.lane.b32.xlu0 %v2515, 32
    %v2518 = vpop.permute.xlu0 %2517
    %v2520 = vadd.f32 %v2510, %v2518
    %v2521 = vtanh.pop %v2520
    %2523 = vrot.lane.b32.xlu0 %v2521, 64
    %v2524 = vpop.permute.xlu0 %2523
    %v2526 = vmul.f32 %v2508, %v2524
    %v2527 = vrot.slane %v2455, 4
    %2528 = vrot.lane.b32.xlu0 %v2527, 32
    %v2529 = vpop.permute.xlu0 %2528
    %v2530 = vsel %vm368, %v2529, 0
    %2532 = vmatpush.msra.mxu0 0.0
    %2533 = vmatpush.msra.mxu0 0.0
    %2534 = vmatpush.msra.mxu0 0.0
    %2535 = vmatpush.msra.mxu0 0.0
    %2536 = vmatpush.msra.mxu0 0.0
    %2537 = vmatpush.msra.mxu0 0.0
    %2538 = vmatpush.msra.mxu0 0.0
    %2539 = vmatpush.msra.mxu0 0.0
    %2540 = vmatpush.msra.mxu0 0.0
    %2541 = vmatpush.msra.mxu0 0.0
    %2542 = vmatpush.msra.mxu0 0.0
    %2543 = vmatpush.msra.mxu0 0.0
    %2544 = vmatpush.msra.mxu0 %v455
    %2545 = vmatpush.msra.mxu0 %v454
    %2546 = vmatpush.msra.mxu0 %v453
    %2547 = vmatpush.msra.mxu0 %v452
    %2548 = vmatmul.f32.gmra.mxu0 %v2530
    %v2549 = vpop.f32.mrf.mxu0
    %v2550 = vadd.f32 0.0, %v2549
    %2551 = vdwg.mxu0
    %v2553 = vrot.slane %v2550, 2
    %v2555 = vadd.f32 %v450, %v2553
    %v2556 = vxor.u32 %v2555, 2147483648
    %v2557 = vmul.f32 %v2556, 1.442695
    %v2558 = vpow.pop %v2557
    %v2559 = vadd.f32 %v2558, 1.0
    %v2560 = vrcp.pop %v2559
    %v2561 = vmul.f32 %v2559, %v2560
    %v2562 = vsub.f32 1.0, %v2561
    %v2563 = vmul.f32 %v2560, %v2562
    %v2564 = vadd.f32 %v2560, %v2563
    %vm2565 = vweird.f32 %v2559
    %vm2566 = vweird.f32 %v2560
    %vm2567 = vmor %vm2565, %vm2566
    %v2568 = vsel %vm2567, %v2560, %v2564
    %v2569 = vand.u32 2147483647, %v2559
    %vm2570 = vcmp.eq.f32.partialorder %v2569, 8.507059e+37
    %v2571 = vand.u32 %v2559, 2147483648
    %v2572 = vor.u32 1.1754944e-38, %v2571
    %v2573 = vsel %vm2570, %v2572, %v2568
    %v2574 = vmul.f32 1.0, %v2573
    %v2575 = vtanh.pop %v2555
    %v2577 = vrot.slane %v2449, 6
    %v2579 = vmul.f32 %v2574, %v2577
    %2581 = vrot.lane.b32.xlu0 %v2575, 64
    %v2582 = vpop.permute.xlu0 %2581
    %v2584 = vmul.f32 %v2574, %v2582
    %2586 = vrot.lane.b32.xlu0 %v2584, 32
    %v2587 = vpop.permute.xlu0 %2586
    %v2589 = vadd.f32 %v2579, %v2587
    %v2590 = vtanh.pop %v2589
    %2592 = vrot.lane.b32.xlu0 %v2590, 64
    %v2593 = vpop.permute.xlu0 %2592
    %v2595 = vmul.f32 %v2574, %v2593
    %2597 = vrot.lane.b32.xlu0 %v2595, 32
    %v2598 = vpop.permute.xlu0 %2597
    %v2601 = vrot.slane %v2526, 2
    %2602 = vrot.lane.b32.xlu0 %v2601, 64
    %v2603 = vpop.permute.xlu0 %2602
    %v2605 = vsel %vm368, %v2598, %v2603
    %v2607 = vrot.slane %v2605, 6
    %v2608 = vsel %vm410, %v2607, 0
    %2610 = vmatpush.msra.mxu0 0.0
    %2611 = vmatpush.msra.mxu0 0.0
    %2612 = vmatpush.msra.mxu0 0.0
    %2613 = vmatpush.msra.mxu0 0.0
    %2614 = vmatpush.msra.mxu0 0.0
    %2615 = vmatpush.msra.mxu0 0.0
    %2616 = vmatpush.msra.mxu0 0.0
    %2617 = vmatpush.msra.mxu0 0.0
    %2618 = vmatpush.msra.mxu0 %v463
    %2619 = vmatpush.msra.mxu0 %v462
    %2620 = vmatpush.msra.mxu0 %v461
    %2621 = vmatpush.msra.mxu0 %v460
    %2622 = vmatpush.msra.mxu0 %v459
    %2623 = vmatpush.msra.mxu0 %v458
    %2624 = vmatpush.msra.mxu0 %v457
    %2625 = vmatpush.msra.mxu0 %v456
    %2626 = vmatmul.f32.gmra.mxu0 %v2608
    %v2627 = vpop.f32.mrf.mxu0
    %v2628 = vadd.f32 %v532, %v2627
    %2629 = vdwg.mxu0
    %v2630 = vxor.u32 %v2628, 2147483648
    %v2631 = vmul.f32 %v2630, 1.442695
    %v2632 = vpow.pop %v2631
    %v2633 = vadd.f32 %v2632, 1.0
    %v2634 = vrcp.pop %v2633
    %v2635 = vmul.f32 %v2633, %v2634
    %v2636 = vsub.f32 1.0, %v2635
    %v2637 = vmul.f32 %v2634, %v2636
    %v2638 = vadd.f32 %v2634, %v2637
    %vm2639 = vweird.f32 %v2633
    %vm2640 = vweird.f32 %v2634
    %vm2641 = vmor %vm2639, %vm2640
    %v2642 = vsel %vm2641, %v2634, %v2638
    %v2643 = vand.u32 2147483647, %v2633
    %vm2644 = vcmp.eq.f32.partialorder %v2643, 8.507059e+37
    %v2645 = vand.u32 %v2633, 2147483648
    %v2646 = vor.u32 1.1754944e-38, %v2645
    %v2647 = vsel %vm2644, %v2646, %v2642
    %v2648 = vmul.f32 1.0, %v2647
    %v2649 = vtanh.pop %v2628
    %v2650 = vmul.f32 %v2648, %v2520
    %2652 = vrot.lane.b32.xlu0 %v2649, 64
    %v2653 = vpop.permute.xlu0 %2652
    %v2655 = vmul.f32 %v2648, %v2653
    %2657 = vrot.lane.b32.xlu0 %v2655, 32
    %v2658 = vpop.permute.xlu0 %2657
    %v2660 = vadd.f32 %v2650, %v2658
    %v2661 = vtanh.pop %v2660
    %2663 = vrot.lane.b32.xlu0 %v2661, 64
    %v2664 = vpop.permute.xlu0 %2663
    %v2666 = vmul.f32 %v2648, %v2664
    %v2668 = vrot.slane %v2666, 2
    %2669 = vrot.lane.b32.xlu0 %v2668, 64
    %v2670 = vpop.permute.xlu0 %2669
    %v2672 = vsel %vm368, %v2598, %v2670
    %v2673 = vld [vmem:[#allocation6] sm:$0xff]
    %v2674 = vld [vmem:[#allocation6 + $0x8] sm:$0xff]
    %v2675 = vld [vmem:[#allocation6 + $0x10] sm:$0xff]
    %v2676 = vld [vmem:[#allocation6 + $0x18] sm:$0xff]
    %v2677 = vld [vmem:[#allocation6 + $0x20] sm:$0xff]
    %v2678 = vld [vmem:[#allocation6 + $0x28] sm:$0xff]
    %v2679 = vld [vmem:[#allocation6 + $0x30] sm:$0xff]
    %v2680 = vld [vmem:[#allocation6 + $0x38] sm:$0xff]
    %v2681 = vld [vmem:[%s13] sm:$0x1]
    %v2683 = vperm.slane %v2681, 0
    %v2686 = vrot.slane %v2672, 6
    %v2687 = vsel %vm410, %v2686, 0
    %2689 = vmatpush.msra.mxu0 0.0
    %2690 = vmatpush.msra.mxu0 0.0
    %2691 = vmatpush.msra.mxu0 0.0
    %2692 = vmatpush.msra.mxu0 0.0
    %2693 = vmatpush.msra.mxu0 0.0
    %2694 = vmatpush.msra.mxu0 0.0
    %2695 = vmatpush.msra.mxu0 0.0
    %2696 = vmatpush.msra.mxu0 0.0
    %2697 = vmatpush.msra.mxu0 %v2680
    %2698 = vmatpush.msra.mxu0 %v2679
    %2699 = vmatpush.msra.mxu0 %v2678
    %2700 = vmatpush.msra.mxu0 %v2677
    %2701 = vmatpush.msra.mxu0 %v2676
    %2702 = vmatpush.msra.mxu0 %v2675
    %2703 = vmatpush.msra.mxu0 %v2674
    %2704 = vmatpush.msra.mxu0 %v2673
    %2705 = vmatmul.f32.gmra.mxu0 %v2687
    %v2706 = vpop.f32.mrf.mxu0
    %v2707 = vadd.f32 %v2683, %v2706
    %2708 = vdwg.mxu0
    %2709 = vst [vmem:[%s14] sm:$0x3] %v2707
    // Predicated region
    $region70: #{crnn_forward.1} parent=1 // pred_check
      _
    $region71: #{crnn_forward.1} parent=1 // pred_check_branch
      %2711 = sbr.rel (0) target = $region73
    $region72: #{crnn_forward.1} parent=1 // pred_region
      _
    $region73: #{crnn_forward.1} parent=1 // pred_fallthru
      _
    // Predicated region
    $region74: #{crnn_forward.1} parent=1 // pred_check
      _
    $region75: #{crnn_forward.1} parent=1 // pred_check_branch
      %2713 = sbr.rel (0) target = $region77
    $region76: #{crnn_forward.1} parent=1 // pred_region
      _
    $region77: #{crnn_forward.1} parent=1 // pred_fallthru
      _
    %2714 = vsyncpa [#allocation3], 1
    %2715 = vsyncpa [#allocation5], 1

</llo_original>
